<compile_context>
chip_gen: v7x
topology: tpu7x:2x2x1
jax: 0.10.0
libtpu: 0.0.40
codegen_flags: <defaults>
</compile_context>

<pallas_src>
import math
from functools import partial

import numpy as np
import jax
import jax.numpy as jnp
from jax.experimental import pallas as pl
from jax.experimental.pallas import tpu as pltpu

_LN_EPS = 1e-5
_GELU_C = math.sqrt(0.5)
_NEG_BIG = -1e30


# ----------------------------- in-kernel helpers ---------------------------

def _erf_approx(x):
    # TODO(synk): exact-erf GELU uses the Abramowitz&Stegun 7.1.26 polynomial (~1.5e-7 max
    # abs err, i.e. f32-level) because lax.erf has no guaranteed Mosaic lowering.
    a1, a2, a3, a4, a5 = (0.254829592, -0.284496736, 1.421413741,
                          -1.453152027, 1.061405429)
    p = 0.3275911
    ax = jnp.abs(x)
    t = 1.0 / (1.0 + p * ax)
    poly = ((((a5 * t + a4) * t + a3) * t + a2) * t + a1) * t
    y = 1.0 - poly * jnp.exp(-(ax * ax))
    return jnp.where(x >= 0, y, -y)


def _gelu_exact(x):
    return 0.5 * x * (1.0 + _erf_approx(x * _GELU_C))


def _layernorm(x, g, b):
    mu = jnp.mean(x, axis=-1, keepdims=True)
    var = jnp.mean((x - mu) ** 2, axis=-1, keepdims=True)
    return (x - mu) * jax.lax.rsqrt(var + _LN_EPS) * g + b


# ----------------------------- fused encoder kernel ------------------------
# grid=(n_layers,), "arbitrary"; residual stream lives in the output block (constant index)
# and is seeded from x_ref at layer 0.  Weights are layer-indexed blocks.

def _encoder_kernel(x_ref, mask_ref, wqkv_ref, bqkv_ref, wo_ref, bo_ref,
                    ln1g_ref, ln1b_ref, ln2g_ref, ln2b_ref,
                    w1_ref, b1_ref, w2_ref, b2_ref, o_ref, *, S, B, D, nh):
    dh = D // nh
    scale = 1.0 / math.sqrt(dh)

    @pl.when(pl.program_id(0) == 0)
    def _seed():
        o_ref[...] = x_ref[...]

    x = o_ref[...]                                                    # (B*S, D), rows = b*S + s
    qkv = jnp.dot(x, wqkv_ref[0], preferred_element_type=jnp.float32) + bqkv_ref[0]   # (B*S, 3D)
    neg = mask_ref[...]                                               # (B, 1, S) additive 0/-1e30

    head_outs = []
    for h in range(nh):                                               # nh unrolled, batched over B
        q = qkv[:, h * dh:(h + 1) * dh].reshape(B, S, dh) * scale
        k = qkv[:, D + h * dh:D + (h + 1) * dh].reshape(B, S, dh)
        v = qkv[:, 2 * D + h * dh:2 * D + (h + 1) * dh].reshape(B, S, dh)
        s = jnp.einsum('bqd,bkd->bqk', q, k, preferred_element_type=jnp.float32)   # (B, S, S)
        s = s + neg
        s = s - jnp.max(s, axis=-1, keepdims=True)
        p = jnp.exp(s)
        p = p * pl.reciprocal(jnp.sum(p, axis=-1, keepdims=True), approx=True)
        oh = jnp.einsum('bqk,bkd->bqd', p, v, preferred_element_type=jnp.float32)   # (B, S, dh)
        head_outs.append(oh.reshape(B * S, dh))

    # one lane-dense output projection instead of per-head folded projections
    attn = jnp.dot(jnp.concatenate(head_outs, axis=-1), wo_ref[0],
                   preferred_element_type=jnp.float32) + bo_ref[0]    # (B*S, D)

    y = _layernorm(x + attn, ln1g_ref[0], ln1b_ref[0])                 # post-LN
    ff = jnp.dot(y, w1_ref[0], preferred_element_type=jnp.float32) + b1_ref[0]
    ff = _gelu_exact(ff)
    ff = jnp.dot(ff, w2_ref[0], preferred_element_type=jnp.float32) + b2_ref[0]
    o_ref[...] = _layernorm(y + ff, ln2g_ref[0], ln2b_ref[0])


def _encoder_call(enc_p, x2d, mask3, *, S, B, D, nh, n_layers):
    def wspec(arr):
        nd = arr.ndim
        return pl.BlockSpec((1,) + arr.shape[1:],
                            lambda l, nd=nd: (l,) + (0,) * (nd - 1))

    args = [x2d, mask3, enc_p["wqkv"], enc_p["bqkv"], enc_p["wo"], enc_p["bo"],
            enc_p["ln1g"], enc_p["ln1b"], enc_p["ln2g"], enc_p["ln2b"],
            enc_p["w1"], enc_p["b1"], enc_p["w2"], enc_p["b2"]]
    in_specs = [pl.BlockSpec(x2d.shape, lambda l: (0, 0)),
                pl.BlockSpec(mask3.shape, lambda l: (0, 0, 0))]
    in_specs += [wspec(a) for a in args[2:]]

    return pl.pallas_call(
        partial(_encoder_kernel, S=S, B=B, D=D, nh=nh),
        out_shape=jax.ShapeDtypeStruct((B * S, D), jnp.float32),
        grid=(n_layers,),
        in_specs=in_specs,
        out_specs=pl.BlockSpec((B * S, D), lambda l: (0, 0)),
        compiler_params=pltpu.CompilerParams(dimension_semantics=("arbitrary",)),
    )(*args)


# ----------------------------- fused decoder kernel ------------------------
# One pallas_call for the WHOLE teacher-forced decode loop; grid axis = decode step.

def _decoder_kernel(*refs, S, B, H, nh, L):
    K = nh * H
    (giemb_ref, h0_ref, mem_ref, wak_ref, wae_ref, ba_ref, vmat_ref,
     ffnw_ref, ffnb_ref, wic_ref, wh0_ref, bh0_ref) = refs[:12]
    pos = 12
    upper = []
    for _ in range(L - 1):
        upper.append(refs[pos:pos + 4])
        pos += 4
    outw_ref, outb_ref = refs[pos], refs[pos + 1]
    o_ref = refs[pos + 2]
    hid_ref = refs[pos + 3]          # (L, B, H) carried GRU hidden
    ep_ref = refs[pos + 4]           # (B*S, nh*H) hoisted mem @ wa_enc

    t = pl.program_id(0)

    @pl.when(t == 0)
    def _init():
        hid_ref[...] = h0_ref[...]                        # torch.randn hidden passed in explicitly
        # step-invariant encoder-memory projection, computed once and reused every step
        ep_ref[...] = jnp.dot(mem_ref[...], wae_ref[...],
                              preferred_element_type=jnp.float32)

    # key = last_hidden.sum(axis=0)
    key = hid_ref[0]
    for l in range(1, L):
        key = key + hid_ref[l]                            # (B, H)

    kp = jnp.dot(key, wak_ref[...], preferred_element_type=jnp.float32) + ba_ref[...]   # (B, K)

    # replicate kp per batch over its S rows with a tiny 0/1 matmul (keeps everything 2-D)
    row = jax.lax.broadcasted_iota(jnp.int32, (B * S, B), 0)
    col = jax.lax.broadcasted_iota(jnp.int32, (B * S, B), 1)
    d = row - col * S
    rep = jnp.where((d >= 0) & (d < S), 1.0, 0.0).astype(jnp.float32)                    # (B*S, B)
    kp_rows = jnp.dot(rep, kp, preferred_element_type=jnp.float32)                       # (B*S, K)

    # batched multi-head Bahdanau energies / softmax over all batches at once
    energy = jnp.tanh(ep_ref[...] + kp_rows)                                             # (B*S, K)
    e = jnp.dot(energy, vmat_ref[...], preferred_element_type=jnp.float32)               # (B*S, nh)
    e3 = e.reshape(B, S, nh)
    m = jnp.max(e3, axis=1, keepdims=True)
    pex = jnp.exp(e3 - m)
    p3 = pex * pl.reciprocal(jnp.sum(pex, axis=1, keepdims=True), approx=True)           # (B, S, nh)

    mem3 = mem_ref[...].reshape(B, S, H)
    ctx_heads = [jnp.sum(p3[:, :, h:h + 1] * mem3, axis=1) for h in range(nh)]           # (B, H) each
    ctx_flat = jnp.concatenate(ctx_heads, axis=-1)                                       # (B, nh*H)
    context = jnp.tanh(jnp.dot(ctx_flat, ffnw_ref[...],
                               preferred_element_type=jnp.float32) + ffnb_ref[...])      # (B, H)

    # GRU layer 0 (embedding projection + input bias precomputed in wrapper, streamed per step)
    gi = giemb_ref[0] + jnp.dot(context, wic_ref[...], preferred_element_type=jnp.float32)
    h_prev = hid_ref[0]
    gh = jnp.dot(h_prev, wh0_ref[...], preferred_element_type=jnp.float32) + bh0_ref[...]
    r = jax.nn.sigmoid(gi[:, :H] + gh[:, :H])
    z = jax.nn.sigmoid(gi[:, H:2 * H] + gh[:, H:2 * H])
    n = jnp.tanh(gi[:, 2 * H:] + r * gh[:, 2 * H:])
    x = (1.0 - z) * n + z * h_prev
    hid_ref[0] = x

    for li, (wi_ref, wh_ref, bi_ref, bh_ref) in enumerate(upper, start=1):
        h_prev = hid_ref[li]
        gi = jnp.dot(x, wi_ref[...], preferred_element_type=jnp.float32) + bi_ref[...]
        gh = jnp.dot(h_prev, wh_ref[...], preferred_element_type=jnp.float32) + bh_ref[...]
        r = jax.nn.sigmoid(gi[:, :H] + gh[:, :H])
        z = jax.nn.sigmoid(gi[:, H:2 * H] + gh[:, H:2 * H])
        n = jnp.tanh(gi[:, 2 * H:] + r * gh[:, 2 * H:])
        x = (1.0 - z) * n + z * h_prev
        hid_ref[li] = x

    # output projection padded to a lane-dense width; padded cols carry bias -1e30 so the
    # log-softmax over the padded width equals the log-softmax over the real vocab.
    logits = jnp.dot(x, outw_ref[...], preferred_element_type=jnp.float32) + outb_ref[...]
    logits = logits - jnp.max(logits, axis=-1, keepdims=True)
    o_ref[0] = logits - jnp.log(jnp.sum(jnp.exp(logits), axis=-1, keepdims=True))


def _const_spec(arr):
    nd = arr.ndim
    # TODO(synk): at realistic H/Vout, add pipeline_mode=pl.Buffered(1) (or a one-shot manual
    #             DMA into scratch) so constant weight blocks are single-buffered in VMEM.
    return pl.BlockSpec(arr.shape, lambda t, nd=nd: (0,) * nd)


def _decoder_call(dec_p, gi_emb, hidden0, mem2d, out_w_p, out_b_p,
                  *, S, B, H, nh, L, Vp, Tdec):
    gru = dec_p["gru"]
    args = [gi_emb, hidden0, mem2d,
            dec_p["wa_key"], dec_p["wa_enc"], dec_p["ba"], dec_p["vmat"],
            dec_p["ffn_w"], dec_p["ffn_b"],
            gru[0]["wi_c"], gru[0]["wh"], gru[0]["bh"]]
    for l in range(1, L):
        args += [gru[l]["wi"], gru[l]["wh"], gru[l]["bi"], gru[l]["bh"]]
    args += [out_w_p, out_b_p]

    in_specs = [pl.BlockSpec((1, B, 3 * H), lambda t: (t, 0, 0))]
    in_specs += [_const_spec(a) for a in args[1:]]

    return pl.pallas_call(
        partial(_decoder_kernel, S=S, B=B, H=H, nh=nh, L=L),
        out_shape=jax.ShapeDtypeStruct((Tdec, B, Vp), jnp.float32),
        grid=(Tdec,),
        in_specs=in_specs,
        out_specs=pl.BlockSpec((1, B, Vp), lambda t: (t, 0, 0)),
        scratch_shapes=[pltpu.VMEM((L, B, H), jnp.float32),        # carried GRU hidden
                        pltpu.VMEM((B * S, nh * H), jnp.float32)], # hoisted mem @ wa_enc
        compiler_params=pltpu.CompilerParams(dimension_semantics=("arbitrary",)),
    )(*args)


# ----------------------------- params / glue --------------------------------

def make_pos_encoding(max_len, d_model):
    pe = np.zeros((max_len, d_model), dtype=np.float32)
    position = np.arange(0, max_len, dtype=np.float32)[:, None]
    div_term = np.exp(np.arange(0, d_model, 2, dtype=np.float32) * (-math.log(10000.0) / d_model))
    pe[:, 0::2] = np.sin(position * div_term)
    pe[:, 1::2] = np.cos(position * div_term)
    return jnp.asarray(pe)


def init_params(key, cfg):
    D = cfg["d_model"]; nh = cfg["nhead"]; FF = cfg["dim_feedforward"]
    Vin, Vout = cfg["input_vocab_size"], cfg["opt_vocab_size"]
    L_enc = cfg["num_encoder_layers"]; L_dec = cfg["utter_n_layer"]
    H = D; E = D
    it = iter(jax.random.split(key, 256))

    def nrm(shape, scale=0.05):
        return (scale * jax.random.normal(next(it), shape)).astype(jnp.float32)

    params = {"pe": make_pos_encoding(cfg["position_embed_size"], D),
              "embed_src": nrm((Vin, D))}

    params["enc"] = {
        "wqkv": nrm((L_enc, D, 3 * D)), "bqkv": nrm((L_enc, 1, 3 * D)),
        "wo": nrm((L_enc, D, D)), "bo": nrm((L_enc, 1, D)),
        "ln1g": jnp.ones((L_enc, 1, D), jnp.float32), "ln1b": jnp.zeros((L_enc, 1, D), jnp.float32),
        "ln2g": jnp.ones((L_enc, 1, D), jnp.float32), "ln2b": jnp.zeros((L_enc, 1, D), jnp.float32),
        "w1": nrm((L_enc, D, FF)), "b1": nrm((L_enc, 1, FF)),
        "w2": nrm((L_enc, FF, D)), "b2": nrm((L_enc, 1, D)),
    }

    # decoder: per-head Bahdanau attention stacked into single matrices
    v_heads = nrm((nh, H))
    cols = []
    for i in range(nh):
        col = jnp.zeros((nh * H,), jnp.float32).at[i * H:(i + 1) * H].set(v_heads[i])
        cols.append(col[:, None])
    vmat = jnp.concatenate(cols, axis=1)                      # (nh*H, nh) block-diagonal

    dec = {"embed": nrm((Vout, E)),
           "wa_key": nrm((H, nh * H)), "wa_enc": nrm((H, nh * H)), "ba": nrm((1, nh * H)),
           "vmat": vmat,
           "ffn_w": nrm((nh * H, H)), "ffn_b": nrm((1, H)),
           "out_w": nrm((H, Vout)), "out_b": nrm((1, Vout))}

    gru = []
    for layer in range(L_dec):
        # Decoder.init_weight zeroes the layer-0 GRU biases; zero-init all biases here.
        if layer == 0:
            gru.append({"wi_e": nrm((E, 3 * H)), "wi_c": nrm((H, 3 * H)),
                        "wh": nrm((H, 3 * H)),
                        "bi": jnp.zeros((1, 3 * H), jnp.float32),
                        "bh": jnp.zeros((1, 3 * H), jnp.float32)})
        else:
            gru.append({"wi": nrm((H, 3 * H)), "wh": nrm((H, 3 * H)),
                        "bi": jnp.zeros((1, 3 * H), jnp.float32),
                        "bh": jnp.zeros((1, 3 * H), jnp.float32)})
    dec["gru"] = gru
    params["decoder"] = dec
    return params


def build_forward(cfg):
    D = cfg["d_model"]; nh = cfg["nhead"]
    L_enc = cfg["num_encoder_layers"]; L_dec = cfg["utter_n_layer"]
    Vout = cfg["opt_vocab_size"]; H = D
    Vp = ((Vout + 127) // 128) * 128

    def forward(params, src, tgt, lengths, hidden0):
        S, B = src.shape
        max_len = tgt.shape[0]
        Tdec = max_len - 1
        # generate_key_mask -> additive mask (0 where valid, -1e30 where position >= length)
        maskneg = jnp.where(jnp.arange(S)[None, :] >= lengths[:, None],
                            _NEG_BIG, 0.0).astype(jnp.float32)              # (B, S)
        mask3 = maskneg[:, None, :]                                          # (B, 1, S)
        x = params["embed_src"][src] * math.sqrt(D) + params["pe"][:S][:, None, :]   # (S, B, D)
        x2d = jnp.transpose(x, (1, 0, 2)).reshape(B * S, D)                  # rows = b*S + s
        mem2d = _encoder_call(params["enc"], x2d, mask3,
                              S=S, B=B, D=D, nh=nh, n_layers=L_enc)          # (B*S, D)

        dec = params["decoder"]
        gru0 = dec["gru"][0]
        emb_in = dec["embed"][tgt[:Tdec]]                                    # (Tdec, B, E)
        # hoist the step-invariant GRU layer-0 embedding projection (+ input bias)
        gi_emb = jnp.einsum('tbe,eh->tbh', emb_in, gru0["wi_e"]) + gru0["bi"]   # (Tdec, B, 3H)
        # lane-dense padded output head: zero weights, -1e30 bias in padded columns
        out_w_p = jnp.pad(dec["out_w"], ((0, 0), (0, Vp - Vout)))
        out_b_p = jnp.pad(dec["out_b"], ((0, 0), (0, Vp - Vout)), constant_values=_NEG_BIG)

        logp = _decoder_call(dec, gi_emb, hidden0, mem2d, out_w_p, out_b_p,
                             S=S, B=B, H=H, nh=nh, L=L_dec, Vp=Vp, Tdec=Tdec)
        logp = logp[:, :, :Vout]
        # outputs[0] stays zero (matches reference)
        return jnp.concatenate([jnp.zeros((1, B, Vout), jnp.float32), logp], axis=0)

    return forward


# ----------------------------- main -----------------------------------------

if __name__ == "__main__":
    cfg = dict(input_vocab_size=50, opt_vocab_size=40, d_model=32, nhead=4,
               num_encoder_layers=2, dim_feedforward=64, utter_n_layer=2,
               position_embed_size=300)

    key = jax.random.PRNGKey(0)
    k_param, k_src, k_tgt, k_hid = jax.random.split(key, 4)
    params = init_params(k_param, cfg)

    S, B, T = 8, 2, 6
    src = jax.random.randint(k_src, (S, B), 1, cfg["input_vocab_size"], dtype=jnp.int32)
    tgt = jax.random.randint(k_tgt, (T, B), 1, cfg["opt_vocab_size"], dtype=jnp.int32)
    lengths = jnp.array([8, 5], dtype=jnp.int32)
    # TODO(synk): the reference draws `hidden = torch.randn(...)` fresh each forward; here it
    # is a deterministic jax.random draw passed in explicitly.
    hidden0 = jax.random.normal(k_hid, (cfg["utter_n_layer"], B, cfg["d_model"]), dtype=jnp.float32)

    forward = jax.jit(build_forward(cfg))
    out = forward(params, src, tgt, lengths, hidden0)
    jax.block_until_ready(out)
    assert out.shape == (T, B, cfg["opt_vocab_size"])
    assert bool(jnp.all(jnp.isfinite(out)))
    print("KERNEL_OK")
</pallas_src>

<mosaic_0001>
module attributes {stable_mosaic.version = 11 : i64} {
  func.func @_encoder_kernel(%arg0: i32, %arg1: memref<16x32xf32, #tpu.memory_space<vmem>>, %arg2: memref<2x1x8xf32, #tpu.memory_space<vmem>>, %arg3: memref<1x32x96xf32, #tpu.memory_space<vmem>>, %arg4: memref<1x1x96xf32, #tpu.memory_space<vmem>>, %arg5: memref<1x32x32xf32, #tpu.memory_space<vmem>>, %arg6: memref<1x1x32xf32, #tpu.memory_space<vmem>>, %arg7: memref<1x1x32xf32, #tpu.memory_space<vmem>>, %arg8: memref<1x1x32xf32, #tpu.memory_space<vmem>>, %arg9: memref<1x1x32xf32, #tpu.memory_space<vmem>>, %arg10: memref<1x1x32xf32, #tpu.memory_space<vmem>>, %arg11: memref<1x32x64xf32, #tpu.memory_space<vmem>>, %arg12: memref<1x1x64xf32, #tpu.memory_space<vmem>>, %arg13: memref<1x64x32xf32, #tpu.memory_space<vmem>>, %arg14: memref<1x1x32xf32, #tpu.memory_space<vmem>>, %arg15: memref<16x32xf32, #tpu.memory_space<vmem>>) attributes {dimension_semantics = [#tpu.dimension_semantics<arbitrary>], iteration_bounds = array<i64: 2>, scalar_prefetch = 0 : i64, scratch_operands = 0 : i64, tpu.core_type = #tpu.core_type<tc>, window_params = [{pipeline_mode = #tpu.pipeline_mode<synchronous>, transform_indices = @transform_0, window_bounds = array<i64: 16, 32>}, {pipeline_mode = #tpu.pipeline_mode<synchronous>, transform_indices = @transform_1, window_bounds = array<i64: 2, 1, 8>}, {transform_indices = @transform_2, window_bounds = array<i64: 1, 32, 96>}, {transform_indices = @transform_3, window_bounds = array<i64: 1, 1, 96>}, {transform_indices = @transform_4, window_bounds = array<i64: 1, 32, 32>}, {transform_indices = @transform_5, window_bounds = array<i64: 1, 1, 32>}, {transform_indices = @transform_6, window_bounds = array<i64: 1, 1, 32>}, {transform_indices = @transform_7, window_bounds = array<i64: 1, 1, 32>}, {transform_indices = @transform_8, window_bounds = array<i64: 1, 1, 32>}, {transform_indices = @transform_9, window_bounds = array<i64: 1, 1, 32>}, {transform_indices = @transform_10, window_bounds = array<i64: 1, 32, 64>}, {transform_indices = @transform_11, window_bounds = array<i64: 1, 1, 64>}, {transform_indices = @transform_12, window_bounds = array<i64: 1, 64, 32>}, {transform_indices = @transform_13, window_bounds = array<i64: 1, 1, 32>}, {pipeline_mode = #tpu.pipeline_mode<synchronous>, transform_indices = @transform_14, window_bounds = array<i64: 16, 32>}]} {
    %c0_i32 = arith.constant 0 : i32
    %0 = arith.cmpi eq, %arg0, %c0_i32 : i32
    %1 = arith.extui %0 : i1 to i32
    %c0_i32_0 = arith.constant 0 : i32
    %2 = arith.cmpi ne, %1, %c0_i32_0 : i32
    scf.if %2 {
      %c0_91 = arith.constant 0 : index
      %c0_92 = arith.constant 0 : index
      %221 = vector.load %arg1[%c0_91, %c0_92] : memref<16x32xf32, #tpu.memory_space<vmem>>, vector<16x32xf32>
      %c0_93 = arith.constant 0 : index
      %c0_94 = arith.constant 0 : index
      %222 = vector.load %arg15[%c0_93, %c0_94] : memref<16x32xf32, #tpu.memory_space<vmem>>, vector<16x32xf32>
      tpu.vector_store %arg15[%c0_93, %c0_94], %221 {strides = array<i32>} : memref<16x32xf32, #tpu.memory_space<vmem>>, vector<16x32xf32>,
    } else {
    }
    %c0 = arith.constant 0 : index
    %c0_1 = arith.constant 0 : index
    %3 = vector.load %arg15[%c0, %c0_1] : memref<16x32xf32, #tpu.memory_space<vmem>>, vector<16x32xf32>
    %c0_2 = arith.constant 0 : index
    %c0_3 = arith.constant 0 : index
    %c0_4 = arith.constant 0 : index
    %4 = vector.load %arg3[%c0_2, %c0_3, %c0_4] : memref<1x32x96xf32, #tpu.memory_space<vmem>>, vector<1x32x96xf32>
    %5 = vector.shape_cast %4 : vector<1x32x96xf32> to vector<32x96xf32>
    %cst = arith.constant dense<0.000000e+00> : vector<16x96xf32>
    %6 = tpu.matmul %3, %5, %cst {dimension_numbers = #tpu.dot_dimension_numbers<[1], [0], [0], [1], [0, 0, 1, 1], [], []>} : vector<16x32xf32>, vector<32x96xf32>, vector<16x96xf32> -> vector<16x96xf32>
    %c0_5 = arith.constant 0 : index
    %c0_6 = arith.constant 0 : index
    %c0_7 = arith.constant 0 : index
    %7 = vector.load %arg4[%c0_5, %c0_6, %c0_7] : memref<1x1x96xf32, #tpu.memory_space<vmem>>, vector<1x1x96xf32>
    %8 = vector.shape_cast %7 : vector<1x1x96xf32> to vector<1x96xf32>
    %9 = vector.broadcast %8 : vector<1x96xf32> to vector<16x96xf32>
    %10 = arith.addf %6, %9 : vector<16x96xf32>
    %c0_8 = arith.constant 0 : index
    %c0_9 = arith.constant 0 : index
    %c0_10 = arith.constant 0 : index
    %11 = vector.load %arg2[%c0_8, %c0_9, %c0_10] : memref<2x1x8xf32, #tpu.memory_space<vmem>>, vector<2x1x8xf32>
    %12 = vector.extract_strided_slice %10 {offsets = [0, 0], sizes = [16, 8], strides = [1, 1]} : vector<16x96xf32> to vector<16x8xf32>
    %13 = vector.shape_cast %12 : vector<16x8xf32> to vector<2x8x8xf32>
    %cst_11 = arith.constant 0.353553385 : f32
    %14 = vector.broadcast %cst_11 : f32 to vector<2x8x8xf32>
    %15 = arith.mulf %13, %14 : vector<2x8x8xf32>
    %16 = vector.extract_strided_slice %10 {offsets = [0, 32], sizes = [16, 8], strides = [1, 1]} : vector<16x96xf32> to vector<16x8xf32>
    %17 = vector.shape_cast %16 : vector<16x8xf32> to vector<2x8x8xf32>
    %18 = vector.extract_strided_slice %10 {offsets = [0, 64], sizes = [16, 8], strides = [1, 1]} : vector<16x96xf32> to vector<16x8xf32>
    %19 = vector.shape_cast %18 : vector<16x8xf32> to vector<2x8x8xf32>
    "tpu.trace_start"() <{level = 10 : i32, message = "bqd,bkd->bqk"}> : () -> ()
    %cst_12 = arith.constant dense<0.000000e+00> : vector<2x8x8xf32>
    %20 = tpu.matmul %15, %17, %cst_12 {dimension_numbers = #tpu.dot_dimension_numbers<[2], [2], [1], [1], [0, 0, 0, 1, 1, 1], [0], [0]>} : vector<2x8x8xf32>, vector<2x8x8xf32>, vector<2x8x8xf32> -> vector<2x8x8xf32>
    "tpu.trace_stop"() : () -> ()
    %21 = vector.broadcast %11 : vector<2x1x8xf32> to vector<2x8x8xf32>
    %22 = arith.addf %20, %21 : vector<2x8x8xf32>
    %cst_13 = arith.constant dense<0xFF800000> : vector<2x8xf32>
    %23 = vector.multi_reduction <maximumf>, %22, %cst_13 [2] : vector<2x8x8xf32> to vector<2x8xf32>
    %24 = vector.shape_cast %23 : vector<2x8xf32> to vector<2x8x1xf32>
    %25 = vector.broadcast %24 : vector<2x8x1xf32> to vector<2x8x8xf32>
    %26 = arith.subf %22, %25 : vector<2x8x8xf32>
    %27 = math.exp %26 : vector<2x8x8xf32>
    %cst_14 = arith.constant dense<0.000000e+00> : vector<2x8xf32>
    %28 = vector.multi_reduction <add>, %27, %cst_14 [2] : vector<2x8x8xf32> to vector<2x8xf32>
    %29 = vector.shape_cast %28 : vector<2x8xf32> to vector<2x8x1xf32>
    %30 = tpu.reciprocal %29 {approx = true} : vector<2x8x1xf32> -> vector<2x8x1xf32>
    %31 = vector.broadcast %30 : vector<2x8x1xf32> to vector<2x8x8xf32>
    %32 = arith.mulf %27, %31 : vector<2x8x8xf32>
    "tpu.trace_start"() <{level = 10 : i32, message = "bqk,bkd->bqd"}> : () -> ()
    %cst_15 = arith.constant dense<0.000000e+00> : vector<2x8x8xf32>
    %33 = tpu.matmul %32, %19, %cst_15 {dimension_numbers = #tpu.dot_dimension_numbers<[2], [1], [1], [2], [0, 0, 0, 1, 1, 2], [0], [0]>} : vector<2x8x8xf32>, vector<2x8x8xf32>, vector<2x8x8xf32> -> vector<2x8x8xf32>
    "tpu.trace_stop"() : () -> ()
    %34 = vector.shape_cast %33 : vector<2x8x8xf32> to vector<16x8xf32>
    %35 = vector.extract_strided_slice %10 {offsets = [0, 8], sizes = [16, 8], strides = [1, 1]} : vector<16x96xf32> to vector<16x8xf32>
    %36 = vector.shape_cast %35 : vector<16x8xf32> to vector<2x8x8xf32>
    %cst_16 = arith.constant 0.353553385 : f32
    %37 = vector.broadcast %cst_16 : f32 to vector<2x8x8xf32>
    %38 = arith.mulf %36, %37 : vector<2x8x8xf32>
    %39 = vector.extract_strided_slice %10 {offsets = [0, 40], sizes = [16, 8], strides = [1, 1]} : vector<16x96xf32> to vector<16x8xf32>
    %40 = vector.shape_cast %39 : vector<16x8xf32> to vector<2x8x8xf32>
    %41 = vector.extract_strided_slice %10 {offsets = [0, 72], sizes = [16, 8], strides = [1, 1]} : vector<16x96xf32> to vector<16x8xf32>
    %42 = vector.shape_cast %41 : vector<16x8xf32> to vector<2x8x8xf32>
    "tpu.trace_start"() <{level = 10 : i32, message = "bqd,bkd->bqk"}> : () -> ()
    %cst_17 = arith.constant dense<0.000000e+00> : vector<2x8x8xf32>
    %43 = tpu.matmul %38, %40, %cst_17 {dimension_numbers = #tpu.dot_dimension_numbers<[2], [2], [1], [1], [0, 0, 0, 1, 1, 1], [0], [0]>} : vector<2x8x8xf32>, vector<2x8x8xf32>, vector<2x8x8xf32> -> vector<2x8x8xf32>
    "tpu.trace_stop"() : () -> ()
    %44 = vector.broadcast %11 : vector<2x1x8xf32> to vector<2x8x8xf32>
    %45 = arith.addf %43, %44 : vector<2x8x8xf32>
    %cst_18 = arith.constant dense<0xFF800000> : vector<2x8xf32>
    %46 = vector.multi_reduction <maximumf>, %45, %cst_18 [2] : vector<2x8x8xf32> to vector<2x8xf32>
    %47 = vector.shape_cast %46 : vector<2x8xf32> to vector<2x8x1xf32>
    %48 = vector.broadcast %47 : vector<2x8x1xf32> to vector<2x8x8xf32>
    %49 = arith.subf %45, %48 : vector<2x8x8xf32>
    %50 = math.exp %49 : vector<2x8x8xf32>
    %cst_19 = arith.constant dense<0.000000e+00> : vector<2x8xf32>
    %51 = vector.multi_reduction <add>, %50, %cst_19 [2] : vector<2x8x8xf32> to vector<2x8xf32>
    %52 = vector.shape_cast %51 : vector<2x8xf32> to vector<2x8x1xf32>
    %53 = tpu.reciprocal %52 {approx = true} : vector<2x8x1xf32> -> vector<2x8x1xf32>
    %54 = vector.broadcast %53 : vector<2x8x1xf32> to vector<2x8x8xf32>
    %55 = arith.mulf %50, %54 : vector<2x8x8xf32>
    "tpu.trace_start"() <{level = 10 : i32, message = "bqk,bkd->bqd"}> : () -> ()
    %cst_20 = arith.constant dense<0.000000e+00> : vector<2x8x8xf32>
    %56 = tpu.matmul %55, %42, %cst_20 {dimension_numbers = #tpu.dot_dimension_numbers<[2], [1], [1], [2], [0, 0, 0, 1, 1, 2], [0], [0]>} : vector<2x8x8xf32>, vector<2x8x8xf32>, vector<2x8x8xf32> -> vector<2x8x8xf32>
    "tpu.trace_stop"() : () -> ()
    %57 = vector.shape_cast %56 : vector<2x8x8xf32> to vector<16x8xf32>
    %58 = vector.extract_strided_slice %10 {offsets = [0, 16], sizes = [16, 8], strides = [1, 1]} : vector<16x96xf32> to vector<16x8xf32>
    %59 = vector.shape_cast %58 : vector<16x8xf32> to vector<2x8x8xf32>
    %cst_21 = arith.constant 0.353553385 : f32
    %60 = vector.broadcast %cst_21 : f32 to vector<2x8x8xf32>
    %61 = arith.mulf %59, %60 : vector<2x8x8xf32>
    %62 = vector.extract_strided_slice %10 {offsets = [0, 48], sizes = [16, 8], strides = [1, 1]} : vector<16x96xf32> to vector<16x8xf32>
    %63 = vector.shape_cast %62 : vector<16x8xf32> to vector<2x8x8xf32>
    %64 = vector.extract_strided_slice %10 {offsets = [0, 80], sizes = [16, 8], strides = [1, 1]} : vector<16x96xf32> to vector<16x8xf32>
    %65 = vector.shape_cast %64 : vector<16x8xf32> to vector<2x8x8xf32>
    "tpu.trace_start"() <{level = 10 : i32, message = "bqd,bkd->bqk"}> : () -> ()
    %cst_22 = arith.constant dense<0.000000e+00> : vector<2x8x8xf32>
    %66 = tpu.matmul %61, %63, %cst_22 {dimension_numbers = #tpu.dot_dimension_numbers<[2], [2], [1], [1], [0, 0, 0, 1, 1, 1], [0], [0]>} : vector<2x8x8xf32>, vector<2x8x8xf32>, vector<2x8x8xf32> -> vector<2x8x8xf32>
    "tpu.trace_stop"() : () -> ()
    %67 = vector.broadcast %11 : vector<2x1x8xf32> to vector<2x8x8xf32>
    %68 = arith.addf %66, %67 : vector<2x8x8xf32>
    %cst_23 = arith.constant dense<0xFF800000> : vector<2x8xf32>
    %69 = vector.multi_reduction <maximumf>, %68, %cst_23 [2] : vector<2x8x8xf32> to vector<2x8xf32>
    %70 = vector.shape_cast %69 : vector<2x8xf32> to vector<2x8x1xf32>
    %71 = vector.broadcast %70 : vector<2x8x1xf32> to vector<2x8x8xf32>
    %72 = arith.subf %68, %71 : vector<2x8x8xf32>
    %73 = math.exp %72 : vector<2x8x8xf32>
    %cst_24 = arith.constant dense<0.000000e+00> : vector<2x8xf32>
    %74 = vector.multi_reduction <add>, %73, %cst_24 [2] : vector<2x8x8xf32> to vector<2x8xf32>
    %75 = vector.shape_cast %74 : vector<2x8xf32> to vector<2x8x1xf32>
    %76 = tpu.reciprocal %75 {approx = true} : vector<2x8x1xf32> -> vector<2x8x1xf32>
    %77 = vector.broadcast %76 : vector<2x8x1xf32> to vector<2x8x8xf32>
    %78 = arith.mulf %73, %77 : vector<2x8x8xf32>
    "tpu.trace_start"() <{level = 10 : i32, message = "bqk,bkd->bqd"}> : () -> ()
    %cst_25 = arith.constant dense<0.000000e+00> : vector<2x8x8xf32>
    %79 = tpu.matmul %78, %65, %cst_25 {dimension_numbers = #tpu.dot_dimension_numbers<[2], [1], [1], [2], [0, 0, 0, 1, 1, 2], [0], [0]>} : vector<2x8x8xf32>, vector<2x8x8xf32>, vector<2x8x8xf32> -> vector<2x8x8xf32>
    "tpu.trace_stop"() : () -> ()
    %80 = vector.shape_cast %79 : vector<2x8x8xf32> to vector<16x8xf32>
    %81 = vector.extract_strided_slice %10 {offsets = [0, 24], sizes = [16, 8], strides = [1, 1]} : vector<16x96xf32> to vector<16x8xf32>
    %82 = vector.shape_cast %81 : vector<16x8xf32> to vector<2x8x8xf32>
    %cst_26 = arith.constant 0.353553385 : f32
    %83 = vector.broadcast %cst_26 : f32 to vector<2x8x8xf32>
    %84 = arith.mulf %82, %83 : vector<2x8x8xf32>
    %85 = vector.extract_strided_slice %10 {offsets = [0, 56], sizes = [16, 8], strides = [1, 1]} : vector<16x96xf32> to vector<16x8xf32>
    %86 = vector.shape_cast %85 : vector<16x8xf32> to vector<2x8x8xf32>
    %87 = vector.extract_strided_slice %10 {offsets = [0, 88], sizes = [16, 8], strides = [1, 1]} : vector<16x96xf32> to vector<16x8xf32>
    %88 = vector.shape_cast %87 : vector<16x8xf32> to vector<2x8x8xf32>
    "tpu.trace_start"() <{level = 10 : i32, message = "bqd,bkd->bqk"}> : () -> ()
    %cst_27 = arith.constant dense<0.000000e+00> : vector<2x8x8xf32>
    %89 = tpu.matmul %84, %86, %cst_27 {dimension_numbers = #tpu.dot_dimension_numbers<[2], [2], [1], [1], [0, 0, 0, 1, 1, 1], [0], [0]>} : vector<2x8x8xf32>, vector<2x8x8xf32>, vector<2x8x8xf32> -> vector<2x8x8xf32>
    "tpu.trace_stop"() : () -> ()
    %90 = vector.broadcast %11 : vector<2x1x8xf32> to vector<2x8x8xf32>
    %91 = arith.addf %89, %90 : vector<2x8x8xf32>
    %cst_28 = arith.constant dense<0xFF800000> : vector<2x8xf32>
    %92 = vector.multi_reduction <maximumf>, %91, %cst_28 [2] : vector<2x8x8xf32> to vector<2x8xf32>
    %93 = vector.shape_cast %92 : vector<2x8xf32> to vector<2x8x1xf32>
    %94 = vector.broadcast %93 : vector<2x8x1xf32> to vector<2x8x8xf32>
    %95 = arith.subf %91, %94 : vector<2x8x8xf32>
    %96 = math.exp %95 : vector<2x8x8xf32>
    %cst_29 = arith.constant dense<0.000000e+00> : vector<2x8xf32>
    %97 = vector.multi_reduction <add>, %96, %cst_29 [2] : vector<2x8x8xf32> to vector<2x8xf32>
    %98 = vector.shape_cast %97 : vector<2x8xf32> to vector<2x8x1xf32>
    %99 = tpu.reciprocal %98 {approx = true} : vector<2x8x1xf32> -> vector<2x8x1xf32>
    %100 = vector.broadcast %99 : vector<2x8x1xf32> to vector<2x8x8xf32>
    %101 = arith.mulf %96, %100 : vector<2x8x8xf32>
    "tpu.trace_start"() <{level = 10 : i32, message = "bqk,bkd->bqd"}> : () -> ()
    %cst_30 = arith.constant dense<0.000000e+00> : vector<2x8x8xf32>
    %102 = tpu.matmul %101, %88, %cst_30 {dimension_numbers = #tpu.dot_dimension_numbers<[2], [1], [1], [2], [0, 0, 0, 1, 1, 2], [0], [0]>} : vector<2x8x8xf32>, vector<2x8x8xf32>, vector<2x8x8xf32> -> vector<2x8x8xf32>
    "tpu.trace_stop"() : () -> ()
    %103 = vector.shape_cast %102 : vector<2x8x8xf32> to vector<16x8xf32>
    %104 = tpu.concatenate %34, %57, %80, %103 in 1 : vector<16x8xf32>, vector<16x8xf32>, vector<16x8xf32>, vector<16x8xf32> -> vector<16x32xf32>
    %c0_31 = arith.constant 0 : index
    %c0_32 = arith.constant 0 : index
    %c0_33 = arith.constant 0 : index
    %105 = vector.load %arg5[%c0_31, %c0_32, %c0_33] : memref<1x32x32xf32, #tpu.memory_space<vmem>>, vector<1x32x32xf32>
    %106 = vector.shape_cast %105 : vector<1x32x32xf32> to vector<32x32xf32>
    %cst_34 = arith.constant dense<0.000000e+00> : vector<16x32xf32>
    %107 = tpu.matmul %104, %106, %cst_34 {dimension_numbers = #tpu.dot_dimension_numbers<[1], [0], [0], [1], [0, 0, 1, 1], [], []>} : vector<16x32xf32>, vector<32x32xf32>, vector<16x32xf32> -> vector<16x32xf32>
    %c0_35 = arith.constant 0 : index
    %c0_36 = arith.constant 0 : index
    %c0_37 = arith.constant 0 : index
    %108 = vector.load %arg6[%c0_35, %c0_36, %c0_37] : memref<1x1x32xf32, #tpu.memory_space<vmem>>, vector<1x1x32xf32>
    %109 = vector.shape_cast %108 : vector<1x1x32xf32> to vector<1x32xf32>
    %110 = vector.broadcast %109 : vector<1x32xf32> to vector<16x32xf32>
    %111 = arith.addf %107, %110 : vector<16x32xf32>
    %112 = arith.addf %3, %111 : vector<16x32xf32>
    %c0_38 = arith.constant 0 : index
    %c0_39 = arith.constant 0 : index
    %c0_40 = arith.constant 0 : index
    %113 = vector.load %arg7[%c0_38, %c0_39, %c0_40] : memref<1x1x32xf32, #tpu.memory_space<vmem>>, vector<1x1x32xf32>
    %114 = vector.shape_cast %113 : vector<1x1x32xf32> to vector<1x32xf32>
    %c0_41 = arith.constant 0 : index
    %c0_42 = arith.constant 0 : index
    %c0_43 = arith.constant 0 : index
    %115 = vector.load %arg8[%c0_41, %c0_42, %c0_43] : memref<1x1x32xf32, #tpu.memory_space<vmem>>, vector<1x1x32xf32>
    %116 = vector.shape_cast %115 : vector<1x1x32xf32> to vector<1x32xf32>
    %cst_44 = arith.constant dense<0.000000e+00> : vector<16xf32>
    %117 = vector.multi_reduction <add>, %112, %cst_44 [1] : vector<16x32xf32> to vector<16xf32>
    %118 = vector.shape_cast %117 : vector<16xf32> to vector<16x1xf32>
    %cst_45 = arith.constant 3.200000e+01 : f32
    %119 = vector.broadcast %cst_45 : f32 to vector<16x1xf32>
    %120 = arith.divf %118, %119 : vector<16x1xf32>
    %121 = vector.broadcast %120 : vector<16x1xf32> to vector<16x32xf32>
    %122 = arith.subf %112, %121 : vector<16x32xf32>
    %123 = arith.mulf %122, %122 : vector<16x32xf32>
    %cst_46 = arith.constant dense<0.000000e+00> : vector<16xf32>
    %124 = vector.multi_reduction <add>, %123, %cst_46 [1] : vector<16x32xf32> to vector<16xf32>
    %125 = vector.shape_cast %124 : vector<16xf32> to vector<16x1xf32>
    %cst_47 = arith.constant 3.200000e+01 : f32
    %126 = vector.broadcast %cst_47 : f32 to vector<16x1xf32>
    %127 = arith.divf %125, %126 : vector<16x1xf32>
    %128 = vector.broadcast %120 : vector<16x1xf32> to vector<16x32xf32>
    %129 = arith.subf %112, %128 : vector<16x32xf32>
    %cst_48 = arith.constant 9.99999974E-6 : f32
    %130 = vector.broadcast %cst_48 : f32 to vector<16x1xf32>
    %131 = arith.addf %127, %130 : vector<16x1xf32>
    %132 = math.rsqrt %131 : vector<16x1xf32>
    %133 = vector.broadcast %132 : vector<16x1xf32> to vector<16x32xf32>
    %134 = arith.mulf %129, %133 : vector<16x32xf32>
    %135 = vector.broadcast %114 : vector<1x32xf32> to vector<16x32xf32>
    %136 = arith.mulf %134, %135 : vector<16x32xf32>
    %137 = vector.broadcast %116 : vector<1x32xf32> to vector<16x32xf32>
    %138 = arith.addf %136, %137 : vector<16x32xf32>
    %c0_49 = arith.constant 0 : index
    %c0_50 = arith.constant 0 : index
    %c0_51 = arith.constant 0 : index
    %139 = vector.load %arg11[%c0_49, %c0_50, %c0_51] : memref<1x32x64xf32, #tpu.memory_space<vmem>>, vector<1x32x64xf32>
    %140 = vector.shape_cast %139 : vector<1x32x64xf32> to vector<32x64xf32>
    %cst_52 = arith.constant dense<0.000000e+00> : vector<16x64xf32>
    %141 = tpu.matmul %138, %140, %cst_52 {dimension_numbers = #tpu.dot_dimension_numbers<[1], [0], [0], [1], [0, 0, 1, 1], [], []>} : vector<16x32xf32>, vector<32x64xf32>, vector<16x64xf32> -> vector<16x64xf32>
    %c0_53 = arith.constant 0 : index
    %c0_54 = arith.constant 0 : index
    %c0_55 = arith.constant 0 : index
    %142 = vector.load %arg12[%c0_53, %c0_54, %c0_55] : memref<1x1x64xf32, #tpu.memory_space<vmem>>, vector<1x1x64xf32>
    %143 = vector.shape_cast %142 : vector<1x1x64xf32> to vector<1x64xf32>
    %144 = vector.broadcast %143 : vector<1x64xf32> to vector<16x64xf32>
    %145 = arith.addf %141, %144 : vector<16x64xf32>
    %cst_56 = arith.constant 5.000000e-01 : f32
    %146 = vector.broadcast %cst_56 : f32 to vector<16x64xf32>
    %147 = arith.mulf %146, %145 : vector<16x64xf32>
    %cst_57 = arith.constant 0.707106769 : f32
    %148 = vector.broadcast %cst_57 : f32 to vector<16x64xf32>
    %149 = arith.mulf %145, %148 : vector<16x64xf32>
    %150 = math.absf %149 : vector<16x64xf32>
    %cst_58 = arith.constant 0.327591091 : f32
    %151 = vector.broadcast %cst_58 : f32 to vector<16x64xf32>
    %152 = arith.mulf %151, %150 : vector<16x64xf32>
    %cst_59 = arith.constant 1.000000e+00 : f32
    %153 = vector.broadcast %cst_59 : f32 to vector<16x64xf32>
    %154 = arith.addf %153, %152 : vector<16x64xf32>
    %cst_60 = arith.constant 1.000000e+00 : f32
    %155 = vector.broadcast %cst_60 : f32 to vector<16x64xf32>
    %156 = arith.divf %155, %154 : vector<16x64xf32>
    %cst_61 = arith.constant 1.06140542 : f32
    %157 = vector.broadcast %cst_61 : f32 to vector<16x64xf32>
    %158 = arith.mulf %157, %156 : vector<16x64xf32>
    %cst_62 = arith.constant -1.45315206 : f32
    %159 = vector.broadcast %cst_62 : f32 to vector<16x64xf32>
    %160 = arith.addf %158, %159 : vector<16x64xf32>
    %161 = arith.mulf %160, %156 : vector<16x64xf32>
    %cst_63 = arith.constant 1.42141378 : f32
    %162 = vector.broadcast %cst_63 : f32 to vector<16x64xf32>
    %163 = arith.addf %161, %162 : vector<16x64xf32>
    %164 = arith.mulf %163, %156 : vector<16x64xf32>
    %cst_64 = arith.constant -0.284496725 : f32
    %165 = vector.broadcast %cst_64 : f32 to vector<16x64xf32>
    %166 = arith.addf %164, %165 : vector<16x64xf32>
    %167 = arith.mulf %166, %156 : vector<16x64xf32>
    %cst_65 = arith.constant 0.254829586 : f32
    %168 = vector.broadcast %cst_65 : f32 to vector<16x64xf32>
    %169 = arith.addf %167, %168 : vector<16x64xf32>
    %170 = arith.mulf %169, %156 : vector<16x64xf32>
    %171 = arith.mulf %150, %150 : vector<16x64xf32>
    %cst_66 = arith.constant 0.000000e+00 : f32
    %172 = vector.broadcast %cst_66 : f32 to vector<16x64xf32>
    %173 = arith.subf %172, %171 : vector<16x64xf32>
    %174 = math.exp %173 : vector<16x64xf32>
    %175 = arith.mulf %170, %174 : vector<16x64xf32>
    %cst_67 = arith.constant 1.000000e+00 : f32
    %176 = vector.broadcast %cst_67 : f32 to vector<16x64xf32>
    %177 = arith.subf %176, %175 : vector<16x64xf32>
    %cst_68 = arith.constant 0.000000e+00 : f32
    %178 = vector.broadcast %cst_68 : f32 to vector<16x64xf32>
    %179 = arith.cmpf oge, %149, %178 : vector<16x64xf32>
    %cst_69 = arith.constant 0.000000e+00 : f32
    %180 = vector.broadcast %cst_69 : f32 to vector<16x64xf32>
    %181 = arith.subf %180, %177 : vector<16x64xf32>
    %182 = arith.select %179, %177, %181 : vector<16x64xi1>, vector<16x64xf32>
    %cst_70 = arith.constant 1.000000e+00 : f32
    %183 = vector.broadcast %cst_70 : f32 to vector<16x64xf32>
    %184 = arith.addf %183, %182 : vector<16x64xf32>
    %185 = arith.mulf %147, %184 : vector<16x64xf32>
    %c0_71 = arith.constant 0 : index
    %c0_72 = arith.constant 0 : index
    %c0_73 = arith.constant 0 : index
    %186 = vector.load %arg13[%c0_71, %c0_72, %c0_73] : memref<1x64x32xf32, #tpu.memory_space<vmem>>, vector<1x64x32xf32>
    %187 = vector.shape_cast %186 : vector<1x64x32xf32> to vector<64x32xf32>
    %cst_74 = arith.constant dense<0.000000e+00> : vector<16x32xf32>
    %188 = tpu.matmul %185, %187, %cst_74 {dimension_numbers = #tpu.dot_dimension_numbers<[1], [0], [0], [1], [0, 0, 1, 1], [], []>} : vector<16x64xf32>, vector<64x32xf32>, vector<16x32xf32> -> vector<16x32xf32>
    %c0_75 = arith.constant 0 : index
    %c0_76 = arith.constant 0 : index
    %c0_77 = arith.constant 0 : index
    %189 = vector.load %arg14[%c0_75, %c0_76, %c0_77] : memref<1x1x32xf32, #tpu.memory_space<vmem>>, vector<1x1x32xf32>
    %190 = vector.shape_cast %189 : vector<1x1x32xf32> to vector<1x32xf32>
    %191 = vector.broadcast %190 : vector<1x32xf32> to vector<16x32xf32>
    %192 = arith.addf %188, %191 : vector<16x32xf32>
    %193 = arith.addf %138, %192 : vector<16x32xf32>
    %c0_78 = arith.constant 0 : index
    %c0_79 = arith.constant 0 : index
    %c0_80 = arith.constant 0 : index
    %194 = vector.load %arg9[%c0_78, %c0_79, %c0_80] : memref<1x1x32xf32, #tpu.memory_space<vmem>>, vector<1x1x32xf32>
    %195 = vector.shape_cast %194 : vector<1x1x32xf32> to vector<1x32xf32>
    %c0_81 = arith.constant 0 : index
    %c0_82 = arith.constant 0 : index
    %c0_83 = arith.constant 0 : index
    %196 = vector.load %arg10[%c0_81, %c0_82, %c0_83] : memref<1x1x32xf32, #tpu.memory_space<vmem>>, vector<1x1x32xf32>
    %197 = vector.shape_cast %196 : vector<1x1x32xf32> to vector<1x32xf32>
    %cst_84 = arith.constant dense<0.000000e+00> : vector<16xf32>
    %198 = vector.multi_reduction <add>, %193, %cst_84 [1] : vector<16x32xf32> to vector<16xf32>
    %199 = vector.shape_cast %198 : vector<16xf32> to vector<16x1xf32>
    %cst_85 = arith.constant 3.200000e+01 : f32
    %200 = vector.broadcast %cst_85 : f32 to vector<16x1xf32>
    %201 = arith.divf %199, %200 : vector<16x1xf32>
    %202 = vector.broadcast %201 : vector<16x1xf32> to vector<16x32xf32>
    %203 = arith.subf %193, %202 : vector<16x32xf32>
    %204 = arith.mulf %203, %203 : vector<16x32xf32>
    %cst_86 = arith.constant dense<0.000000e+00> : vector<16xf32>
    %205 = vector.multi_reduction <add>, %204, %cst_86 [1] : vector<16x32xf32> to vector<16xf32>
    %206 = vector.shape_cast %205 : vector<16xf32> to vector<16x1xf32>
    %cst_87 = arith.constant 3.200000e+01 : f32
    %207 = vector.broadcast %cst_87 : f32 to vector<16x1xf32>
    %208 = arith.divf %206, %207 : vector<16x1xf32>
    %209 = vector.broadcast %201 : vector<16x1xf32> to vector<16x32xf32>
    %210 = arith.subf %193, %209 : vector<16x32xf32>
    %cst_88 = arith.constant 9.99999974E-6 : f32
    %211 = vector.broadcast %cst_88 : f32 to vector<16x1xf32>
    %212 = arith.addf %208, %211 : vector<16x1xf32>
    %213 = math.rsqrt %212 : vector<16x1xf32>
    %214 = vector.broadcast %213 : vector<16x1xf32> to vector<16x32xf32>
    %215 = arith.mulf %210, %214 : vector<16x32xf32>
    %216 = vector.broadcast %195 : vector<1x32xf32> to vector<16x32xf32>
    %217 = arith.mulf %215, %216 : vector<16x32xf32>
    %218 = vector.broadcast %197 : vector<1x32xf32> to vector<16x32xf32>
    %219 = arith.addf %217, %218 : vector<16x32xf32>
    %c0_89 = arith.constant 0 : index
    %c0_90 = arith.constant 0 : index
    %220 = vector.load %arg15[%c0_89, %c0_90] : memref<16x32xf32, #tpu.memory_space<vmem>>, vector<16x32xf32>
    tpu.vector_store %arg15[%c0_89, %c0_90], %219 {strides = array<i32>} : memref<16x32xf32, #tpu.memory_space<vmem>>, vector<16x32xf32>,
    return
  }
  func.func @transform_0(%arg0: i32) -> (i32, i32) {
    %c0_i32 = arith.constant 0 : i32
    %c0_i32_0 = arith.constant 0 : i32
    %c0_i32_1 = arith.constant 0 : i32
    return %c0_i32, %c0_i32_0 : i32, i32
  }
  func.func @transform_1(%arg0: i32) -> (i32, i32, i32) {
    %c0_i32 = arith.constant 0 : i32
    %c0_i32_0 = arith.constant 0 : i32
    %c0_i32_1 = arith.constant 0 : i32
    %c0_i32_2 = arith.constant 0 : i32
    return %c0_i32, %c0_i32_0, %c0_i32_1 : i32, i32, i32
  }
  func.func @transform_2(%arg0: i32) -> (i32, i32, i32) {
    %c0_i32 = arith.constant 0 : i32
    %c0_i32_0 = arith.constant 0 : i32
    %c0_i32_1 = arith.constant 0 : i32
    return %arg0, %c0_i32, %c0_i32_0 : i32, i32, i32
  }
  func.func @transform_3(%arg0: i32) -> (i32, i32, i32) {
    %c0_i32 = arith.constant 0 : i32
    %c0_i32_0 = arith.constant 0 : i32
    %c0_i32_1 = arith.constant 0 : i32
    return %arg0, %c0_i32, %c0_i32_0 : i32, i32, i32
  }
  func.func @transform_4(%arg0: i32) -> (i32, i32, i32) {
    %c0_i32 = arith.constant 0 : i32
    %c0_i32_0 = arith.constant 0 : i32
    %c0_i32_1 = arith.constant 0 : i32
    return %arg0, %c0_i32, %c0_i32_0 : i32, i32, i32
  }
  func.func @transform_5(%arg0: i32) -> (i32, i32, i32) {
    %c0_i32 = arith.constant 0 : i32
    %c0_i32_0 = arith.constant 0 : i32
    %c0_i32_1 = arith.constant 0 : i32
    return %arg0, %c0_i32, %c0_i32_0 : i32, i32, i32
  }
  func.func @transform_6(%arg0: i32) -> (i32, i32, i32) {
    %c0_i32 = arith.constant 0 : i32
    %c0_i32_0 = arith.constant 0 : i32
    %c0_i32_1 = arith.constant 0 : i32
    return %arg0, %c0_i32, %c0_i32_0 : i32, i32, i32
  }
  func.func @transform_7(%arg0: i32) -> (i32, i32, i32) {
    %c0_i32 = arith.constant 0 : i32
    %c0_i32_0 = arith.constant 0 : i32
    %c0_i32_1 = arith.constant 0 : i32
    return %arg0, %c0_i32, %c0_i32_0 : i32, i32, i32
  }
  func.func @transform_8(%arg0: i32) -> (i32, i32, i32) {
    %c0_i32 = arith.constant 0 : i32
    %c0_i32_0 = arith.constant 0 : i32
    %c0_i32_1 = arith.constant 0 : i32
    return %arg0, %c0_i32, %c0_i32_0 : i32, i32, i32
  }
  func.func @transform_9(%arg0: i32) -> (i32, i32, i32) {
    %c0_i32 = arith.constant 0 : i32
    %c0_i32_0 = arith.constant 0 : i32
    %c0_i32_1 = arith.constant 0 : i32
    return %arg0, %c0_i32, %c0_i32_0 : i32, i32, i32
  }
  func.func @transform_10(%arg0: i32) -> (i32, i32, i32) {
    %c0_i32 = arith.constant 0 : i32
    %c0_i32_0 = arith.constant 0 : i32
    %c0_i32_1 = arith.constant 0 : i32
    return %arg0, %c0_i32, %c0_i32_0 : i32, i32, i32
  }
  func.func @transform_11(%arg0: i32) -> (i32, i32, i32) {
    %c0_i32 = arith.constant 0 : i32
    %c0_i32_0 = arith.constant 0 : i32
    %c0_i32_1 = arith.constant 0 : i32
    return %arg0, %c0_i32, %c0_i32_0 : i32, i32, i32
  }
  func.func @transform_12(%arg0: i32) -> (i32, i32, i32) {
    %c0_i32 = arith.constant 0 : i32
    %c0_i32_0 = arith.constant 0 : i32
    %c0_i32_1 = arith.constant 0 : i32
    return %arg0, %c0_i32, %c0_i32_0 : i32, i32, i32
  }
  func.func @transform_13(%arg0: i32) -> (i32, i32, i32) {
    %c0_i32 = arith.constant 0 : i32
    %c0_i32_0 = arith.constant 0 : i32
    %c0_i32_1 = arith.constant 0 : i32
    return %arg0, %c0_i32, %c0_i32_0 : i32, i32, i32
  }
  func.func @transform_14(%arg0: i32) -> (i32, i32) {
    %c0_i32 = arith.constant 0 : i32
    %c0_i32_0 = arith.constant 0 : i32
    %c0_i32_1 = arith.constant 0 : i32
    return %c0_i32, %c0_i32_0 : i32, i32
  }
}

module attributes {stable_mosaic.version = 11 : i64} {
  func.func @_decoder_kernel(%arg0: i32, %arg1: memref<1x2x96xf32, #tpu.memory_space<vmem>>, %arg2: memref<2x2x32xf32, #tpu.memory_space<vmem>>, %arg3: memref<16x32xf32, #tpu.memory_space<vmem>>, %arg4: memref<32x128xf32, #tpu.memory_space<vmem>>, %arg5: memref<32x128xf32, #tpu.memory_space<vmem>>, %arg6: memref<1x128xf32, #tpu.memory_space<vmem>>, %arg7: memref<128x4xf32, #tpu.memory_space<vmem>>, %arg8: memref<128x32xf32, #tpu.memory_space<vmem>>, %arg9: memref<1x32xf32, #tpu.memory_space<vmem>>, %arg10: memref<32x96xf32, #tpu.memory_space<vmem>>, %arg11: memref<32x96xf32, #tpu.memory_space<vmem>>, %arg12: memref<1x96xf32, #tpu.memory_space<vmem>>, %arg13: memref<32x96xf32, #tpu.memory_space<vmem>>, %arg14: memref<32x96xf32, #tpu.memory_space<vmem>>, %arg15: memref<1x96xf32, #tpu.memory_space<vmem>>, %arg16: memref<1x96xf32, #tpu.memory_space<vmem>>, %arg17: memref<32x128xf32, #tpu.memory_space<vmem>>, %arg18: memref<1x128xf32, #tpu.memory_space<vmem>>, %arg19: memref<1x2x128xf32, #tpu.memory_space<vmem>>, %arg20: memref<2x2x32xf32, #tpu.memory_space<vmem>>, %arg21: memref<16x128xf32, #tpu.memory_space<vmem>>) attributes {dimension_semantics = [#tpu.dimension_semantics<arbitrary>], iteration_bounds = array<i64: 5>, scalar_prefetch = 0 : i64, scratch_operands = 2 : i64, tpu.core_type = #tpu.core_type<tc>, window_params = [{transform_indices = @transform_0, window_bounds = array<i64: 1, 2, 96>}, {pipeline_mode = #tpu.pipeline_mode<synchronous>, transform_indices = @transform_1, window_bounds = array<i64: 2, 2, 32>}, {pipeline_mode = #tpu.pipeline_mode<synchronous>, transform_indices = @transform_2, window_bounds = array<i64: 16, 32>}, {pipeline_mode = #tpu.pipeline_mode<synchronous>, transform_indices = @transform_3, window_bounds = array<i64: 32, 128>}, {pipeline_mode = #tpu.pipeline_mode<synchronous>, transform_indices = @transform_4, window_bounds = array<i64: 32, 128>}, {pipeline_mode = #tpu.pipeline_mode<synchronous>, transform_indices = @transform_5, window_bounds = array<i64: 1, 128>}, {pipeline_mode = #tpu.pipeline_mode<synchronous>, transform_indices = @transform_6, window_bounds = array<i64: 128, 4>}, {pipeline_mode = #tpu.pipeline_mode<synchronous>, transform_indices = @transform_7, window_bounds = array<i64: 128, 32>}, {pipeline_mode = #tpu.pipeline_mode<synchronous>, transform_indices = @transform_8, window_bounds = array<i64: 1, 32>}, {pipeline_mode = #tpu.pipeline_mode<synchronous>, transform_indices = @transform_9, window_bounds = array<i64: 32, 96>}, {pipeline_mode = #tpu.pipeline_mode<synchronous>, transform_indices = @transform_10, window_bounds = array<i64: 32, 96>}, {pipeline_mode = #tpu.pipeline_mode<synchronous>, transform_indices = @transform_11, window_bounds = array<i64: 1, 96>}, {pipeline_mode = #tpu.pipeline_mode<synchronous>, transform_indices = @transform_12, window_bounds = array<i64: 32, 96>}, {pipeline_mode = #tpu.pipeline_mode<synchronous>, transform_indices = @transform_13, window_bounds = array<i64: 32, 96>}, {pipeline_mode = #tpu.pipeline_mode<synchronous>, transform_indices = @transform_14, window_bounds = array<i64: 1, 96>}, {pipeline_mode = #tpu.pipeline_mode<synchronous>, transform_indices = @transform_15, window_bounds = array<i64: 1, 96>}, {pipeline_mode = #tpu.pipeline_mode<synchronous>, transform_indices = @transform_16, window_bounds = array<i64: 32, 128>}, {pipeline_mode = #tpu.pipeline_mode<synchronous>, transform_indices = @transform_17, window_bounds = array<i64: 1, 128>}, {transform_indices = @transform_18, window_bounds = array<i64: 1, 2, 128>}]} {
    %c0_i32 = arith.constant 0 : i32
    %0 = arith.cmpi eq, %arg0, %c0_i32 : i32
    %1 = arith.extui %0 : i1 to i32
    %c0_i32_0 = arith.constant 0 : i32
    %2 = arith.cmpi ne, %1, %c0_i32_0 : i32
    scf.if %2 {
      %c0_81 = arith.constant 0 : index
      %c0_82 = arith.constant 0 : index
      %c0_83 = arith.constant 0 : index
      %168 = vector.load %arg2[%c0_81, %c0_82, %c0_83] : memref<2x2x32xf32, #tpu.memory_space<vmem>>, vector<2x2x32xf32>
      %c0_84 = arith.constant 0 : index
      %c0_85 = arith.constant 0 : index
      %c0_86 = arith.constant 0 : index
      %169 = vector.load %arg20[%c0_84, %c0_85, %c0_86] : memref<2x2x32xf32, #tpu.memory_space<vmem>>, vector<2x2x32xf32>
      tpu.vector_store %arg20[%c0_84, %c0_85, %c0_86], %168 {strides = array<i32>} : memref<2x2x32xf32, #tpu.memory_space<vmem>>, vector<2x2x32xf32>,
      %c0_87 = arith.constant 0 : index
      %c0_88 = arith.constant 0 : index
      %170 = vector.load %arg3[%c0_87, %c0_88] : memref<16x32xf32, #tpu.memory_space<vmem>>, vector<16x32xf32>
      %c0_89 = arith.constant 0 : index
      %c0_90 = arith.constant 0 : index
      %171 = vector.load %arg5[%c0_89, %c0_90] : memref<32x128xf32, #tpu.memory_space<vmem>>, vector<32x128xf32>
      %cst_91 = arith.constant dense<0.000000e+00> : vector<16x128xf32>
      %172 = tpu.matmul %170, %171, %cst_91 {dimension_numbers = #tpu.dot_dimension_numbers<[1], [0], [0], [1], [0, 0, 1, 1], [], []>} : vector<16x32xf32>, vector<32x128xf32>, vector<16x128xf32> -> vector<16x128xf32>
      %c0_92 = arith.constant 0 : index
      %c0_93 = arith.constant 0 : index
      %173 = vector.load %arg21[%c0_92, %c0_93] : memref<16x128xf32, #tpu.memory_space<vmem>>, vector<16x128xf32>
      tpu.vector_store %arg21[%c0_92, %c0_93], %172 {strides = array<i32>} : memref<16x128xf32, #tpu.memory_space<vmem>>, vector<16x128xf32>,
    } else {
    }
    %c0 = arith.constant 0 : index
    %c0_1 = arith.constant 0 : index
    %c0_2 = arith.constant 0 : index
    %3 = vector.load %arg20[%c0, %c0_1, %c0_2] : memref<2x2x32xf32, #tpu.memory_space<vmem>>, vector<1x2x32xf32>
    %4 = vector.shape_cast %3 : vector<1x2x32xf32> to vector<2x32xf32>
    %c1 = arith.constant 1 : index
    %c0_3 = arith.constant 0 : index
    %c0_4 = arith.constant 0 : index
    %5 = vector.load %arg20[%c1, %c0_3, %c0_4] : memref<2x2x32xf32, #tpu.memory_space<vmem>>, vector<1x2x32xf32>
    %6 = vector.shape_cast %5 : vector<1x2x32xf32> to vector<2x32xf32>
    %7 = arith.addf %4, %6 : vector<2x32xf32>
    %c0_5 = arith.constant 0 : index
    %c0_6 = arith.constant 0 : index
    %8 = vector.load %arg4[%c0_5, %c0_6] : memref<32x128xf32, #tpu.memory_space<vmem>>, vector<32x128xf32>
    %cst = arith.constant dense<0.000000e+00> : vector<2x128xf32>
    %9 = tpu.matmul %7, %8, %cst {dimension_numbers = #tpu.dot_dimension_numbers<[1], [0], [0], [1], [0, 0, 1, 1], [], []>} : vector<2x32xf32>, vector<32x128xf32>, vector<2x128xf32> -> vector<2x128xf32>
    %c0_7 = arith.constant 0 : index
    %c0_8 = arith.constant 0 : index
    %10 = vector.load %arg6[%c0_7, %c0_8] : memref<1x128xf32, #tpu.memory_space<vmem>>, vector<1x128xf32>
    %11 = vector.broadcast %10 : vector<1x128xf32> to vector<2x128xf32>
    %12 = arith.addf %9, %11 : vector<2x128xf32>
    %13 = tpu.iota {dimensions = array<i32: 0>} : vector<16x2xi32>
    %14 = tpu.iota {dimensions = array<i32: 1>} : vector<16x2xi32>
    %c8_i32 = arith.constant 8 : i32
    %15 = vector.broadcast %c8_i32 : i32 to vector<16x2xi32>
    %16 = arith.muli %14, %15 : vector<16x2xi32>
    %17 = arith.subi %13, %16 : vector<16x2xi32>
    %c0_i32_9 = arith.constant 0 : i32
    %18 = vector.broadcast %c0_i32_9 : i32 to vector<16x2xi32>
    %19 = arith.cmpi sge, %17, %18 : vector<16x2xi32>
    %c8_i32_10 = arith.constant 8 : i32
    %20 = vector.broadcast %c8_i32_10 : i32 to vector<16x2xi32>
    %21 = arith.cmpi slt, %17, %20 : vector<16x2xi32>
    %22 = arith.andi %19, %21 : vector<16x2xi1>
    %cst_11 = arith.constant 1.000000e+00 : f32
    %cst_12 = arith.constant 0.000000e+00 : f32
    %23 = vector.broadcast %cst_11 : f32 to vector<16x2xf32>
    %24 = vector.broadcast %cst_12 : f32 to vector<16x2xf32>
    %25 = arith.select %22, %23, %24 : vector<16x2xi1>, vector<16x2xf32>
    %cst_13 = arith.constant dense<0.000000e+00> : vector<16x128xf32>
    %26 = tpu.matmul %25, %12, %cst_13 {dimension_numbers = #tpu.dot_dimension_numbers<[1], [0], [0], [1], [0, 0, 1, 1], [], []>} : vector<16x2xf32>, vector<2x128xf32>, vector<16x128xf32> -> vector<16x128xf32>
    %c0_14 = arith.constant 0 : index
    %c0_15 = arith.constant 0 : index
    %27 = vector.load %arg21[%c0_14, %c0_15] : memref<16x128xf32, #tpu.memory_space<vmem>>, vector<16x128xf32>
    %28 = arith.addf %27, %26 : vector<16x128xf32>
    %29 = math.tanh %28 : vector<16x128xf32>
    %c0_16 = arith.constant 0 : index
    %c0_17 = arith.constant 0 : index
    %30 = vector.load %arg7[%c0_16, %c0_17] : memref<128x4xf32, #tpu.memory_space<vmem>>, vector<128x4xf32>
    %cst_18 = arith.constant dense<0.000000e+00> : vector<16x4xf32>
    %31 = tpu.matmul %29, %30, %cst_18 {dimension_numbers = #tpu.dot_dimension_numbers<[1], [0], [0], [1], [0, 0, 1, 1], [], []>} : vector<16x128xf32>, vector<128x4xf32>, vector<16x4xf32> -> vector<16x4xf32>
    %32 = vector.shape_cast %31 : vector<16x4xf32> to vector<2x8x4xf32>
    %cst_19 = arith.constant dense<0xFF800000> : vector<2x4xf32>
    %33 = vector.multi_reduction <maximumf>, %32, %cst_19 [1] : vector<2x8x4xf32> to vector<2x4xf32>
    %34 = vector.shape_cast %33 : vector<2x4xf32> to vector<2x1x4xf32>
    %35 = vector.broadcast %34 : vector<2x1x4xf32> to vector<2x8x4xf32>
    %36 = arith.subf %32, %35 : vector<2x8x4xf32>
    %37 = math.exp %36 : vector<2x8x4xf32>
    %cst_20 = arith.constant dense<0.000000e+00> : vector<2x4xf32>
    %38 = vector.multi_reduction <add>, %37, %cst_20 [1] : vector<2x8x4xf32> to vector<2x4xf32>
    %39 = vector.shape_cast %38 : vector<2x4xf32> to vector<2x1x4xf32>
    %40 = tpu.reciprocal %39 {approx = true} : vector<2x1x4xf32> -> vector<2x1x4xf32>
    %41 = vector.broadcast %40 : vector<2x1x4xf32> to vector<2x8x4xf32>
    %42 = arith.mulf %37, %41 : vector<2x8x4xf32>
    %c0_21 = arith.constant 0 : index
    %c0_22 = arith.constant 0 : index
    %43 = vector.load %arg3[%c0_21, %c0_22] : memref<16x32xf32, #tpu.memory_space<vmem>>, vector<16x32xf32>
    %44 = vector.shape_cast %43 : vector<16x32xf32> to vector<2x8x32xf32>
    %45 = vector.extract_strided_slice %42 {offsets = [0, 0, 0], sizes = [2, 8, 1], strides = [1, 1, 1]} : vector<2x8x4xf32> to vector<2x8x1xf32>
    %46 = vector.broadcast %45 : vector<2x8x1xf32> to vector<2x8x32xf32>
    %47 = arith.mulf %46, %44 : vector<2x8x32xf32>
    %cst_23 = arith.constant dense<0.000000e+00> : vector<2x32xf32>
    %48 = vector.multi_reduction <add>, %47, %cst_23 [1] : vector<2x8x32xf32> to vector<2x32xf32>
    %49 = vector.extract_strided_slice %42 {offsets = [0, 0, 1], sizes = [2, 8, 1], strides = [1, 1, 1]} : vector<2x8x4xf32> to vector<2x8x1xf32>
    %50 = vector.broadcast %49 : vector<2x8x1xf32> to vector<2x8x32xf32>
    %51 = arith.mulf %50, %44 : vector<2x8x32xf32>
    %cst_24 = arith.constant dense<0.000000e+00> : vector<2x32xf32>
    %52 = vector.multi_reduction <add>, %51, %cst_24 [1] : vector<2x8x32xf32> to vector<2x32xf32>
    %53 = vector.extract_strided_slice %42 {offsets = [0, 0, 2], sizes = [2, 8, 1], strides = [1, 1, 1]} : vector<2x8x4xf32> to vector<2x8x1xf32>
    %54 = vector.broadcast %53 : vector<2x8x1xf32> to vector<2x8x32xf32>
    %55 = arith.mulf %54, %44 : vector<2x8x32xf32>
    %cst_25 = arith.constant dense<0.000000e+00> : vector<2x32xf32>
    %56 = vector.multi_reduction <add>, %55, %cst_25 [1] : vector<2x8x32xf32> to vector<2x32xf32>
    %57 = vector.extract_strided_slice %42 {offsets = [0, 0, 3], sizes = [2, 8, 1], strides = [1, 1, 1]} : vector<2x8x4xf32> to vector<2x8x1xf32>
    %58 = vector.broadcast %57 : vector<2x8x1xf32> to vector<2x8x32xf32>
    %59 = arith.mulf %58, %44 : vector<2x8x32xf32>
    %cst_26 = arith.constant dense<0.000000e+00> : vector<2x32xf32>
    %60 = vector.multi_reduction <add>, %59, %cst_26 [1] : vector<2x8x32xf32> to vector<2x32xf32>
    %61 = tpu.concatenate %48, %52, %56, %60 in 1 : vector<2x32xf32>, vector<2x32xf32>, vector<2x32xf32>, vector<2x32xf32> -> vector<2x128xf32>
    %c0_27 = arith.constant 0 : index
    %c0_28 = arith.constant 0 : index
    %62 = vector.load %arg8[%c0_27, %c0_28] : memref<128x32xf32, #tpu.memory_space<vmem>>, vector<128x32xf32>
    %cst_29 = arith.constant dense<0.000000e+00> : vector<2x32xf32>
    %63 = tpu.matmul %61, %62, %cst_29 {dimension_numbers = #tpu.dot_dimension_numbers<[1], [0], [0], [1], [0, 0, 1, 1], [], []>} : vector<2x128xf32>, vector<128x32xf32>, vector<2x32xf32> -> vector<2x32xf32>
    %c0_30 = arith.constant 0 : index
    %c0_31 = arith.constant 0 : index
    %64 = vector.load %arg9[%c0_30, %c0_31] : memref<1x32xf32, #tpu.memory_space<vmem>>, vector<1x32xf32>
    %65 = vector.broadcast %64 : vector<1x32xf32> to vector<2x32xf32>
    %66 = arith.addf %63, %65 : vector<2x32xf32>
    %67 = math.tanh %66 : vector<2x32xf32>
    %c0_32 = arith.constant 0 : index
    %c0_33 = arith.constant 0 : index
    %c0_34 = arith.constant 0 : index
    %68 = vector.load %arg1[%c0_32, %c0_33, %c0_34] : memref<1x2x96xf32, #tpu.memory_space<vmem>>, vector<1x2x96xf32>
    %69 = vector.shape_cast %68 : vector<1x2x96xf32> to vector<2x96xf32>
    %c0_35 = arith.constant 0 : index
    %c0_36 = arith.constant 0 : index
    %70 = vector.load %arg10[%c0_35, %c0_36] : memref<32x96xf32, #tpu.memory_space<vmem>>, vector<32x96xf32>
    %cst_37 = arith.constant dense<0.000000e+00> : vector<2x96xf32>
    %71 = tpu.matmul %67, %70, %cst_37 {dimension_numbers = #tpu.dot_dimension_numbers<[1], [0], [0], [1], [0, 0, 1, 1], [], []>} : vector<2x32xf32>, vector<32x96xf32>, vector<2x96xf32> -> vector<2x96xf32>
    %72 = arith.addf %69, %71 : vector<2x96xf32>
    %c0_38 = arith.constant 0 : index
    %c0_39 = arith.constant 0 : index
    %c0_40 = arith.constant 0 : index
    %73 = vector.load %arg20[%c0_38, %c0_39, %c0_40] : memref<2x2x32xf32, #tpu.memory_space<vmem>>, vector<1x2x32xf32>
    %74 = vector.shape_cast %73 : vector<1x2x32xf32> to vector<2x32xf32>
    %c0_41 = arith.constant 0 : index
    %c0_42 = arith.constant 0 : index
    %75 = vector.load %arg11[%c0_41, %c0_42] : memref<32x96xf32, #tpu.memory_space<vmem>>, vector<32x96xf32>
    %cst_43 = arith.constant dense<0.000000e+00> : vector<2x96xf32>
    %76 = tpu.matmul %74, %75, %cst_43 {dimension_numbers = #tpu.dot_dimension_numbers<[1], [0], [0], [1], [0, 0, 1, 1], [], []>} : vector<2x32xf32>, vector<32x96xf32>, vector<2x96xf32> -> vector<2x96xf32>
    %c0_44 = arith.constant 0 : index
    %c0_45 = arith.constant 0 : index
    %77 = vector.load %arg12[%c0_44, %c0_45] : memref<1x96xf32, #tpu.memory_space<vmem>>, vector<1x96xf32>
    %78 = vector.broadcast %77 : vector<1x96xf32> to vector<2x96xf32>
    %79 = arith.addf %76, %78 : vector<2x96xf32>
    %80 = vector.extract_strided_slice %72 {offsets = [0, 0], sizes = [2, 32], strides = [1, 1]} : vector<2x96xf32> to vector<2x32xf32>
    %81 = vector.extract_strided_slice %79 {offsets = [0, 0], sizes = [2, 32], strides = [1, 1]} : vector<2x96xf32> to vector<2x32xf32>
    %82 = arith.addf %80, %81 : vector<2x32xf32>
    %83 = arith.negf %82 : vector<2x32xf32>
    %84 = math.exp %83 : vector<2x32xf32>
    %cst_46 = arith.constant 1.000000e+00 : f32
    %85 = vector.broadcast %cst_46 : f32 to vector<2x32xf32>
    %86 = arith.addf %85, %84 : vector<2x32xf32>
    %87 = arith.divf %85, %86 : vector<2x32xf32>
    %88 = vector.extract_strided_slice %72 {offsets = [0, 32], sizes = [2, 32], strides = [1, 1]} : vector<2x96xf32> to vector<2x32xf32>
    %89 = vector.extract_strided_slice %79 {offsets = [0, 32], sizes = [2, 32], strides = [1, 1]} : vector<2x96xf32> to vector<2x32xf32>
    %90 = arith.addf %88, %89 : vector<2x32xf32>
    %91 = arith.negf %90 : vector<2x32xf32>
    %92 = math.exp %91 : vector<2x32xf32>
    %cst_47 = arith.constant 1.000000e+00 : f32
    %93 = vector.broadcast %cst_47 : f32 to vector<2x32xf32>
    %94 = arith.addf %93, %92 : vector<2x32xf32>
    %95 = arith.divf %93, %94 : vector<2x32xf32>
    %96 = vector.extract_strided_slice %72 {offsets = [0, 64], sizes = [2, 32], strides = [1, 1]} : vector<2x96xf32> to vector<2x32xf32>
    %97 = vector.extract_strided_slice %79 {offsets = [0, 64], sizes = [2, 32], strides = [1, 1]} : vector<2x96xf32> to vector<2x32xf32>
    %98 = arith.mulf %87, %97 : vector<2x32xf32>
    %99 = arith.addf %96, %98 : vector<2x32xf32>
    %100 = math.tanh %99 : vector<2x32xf32>
    %cst_48 = arith.constant 1.000000e+00 : f32
    %101 = vector.broadcast %cst_48 : f32 to vector<2x32xf32>
    %102 = arith.subf %101, %95 : vector<2x32xf32>
    %103 = arith.mulf %102, %100 : vector<2x32xf32>
    %104 = arith.mulf %95, %74 : vector<2x32xf32>
    %105 = arith.addf %103, %104 : vector<2x32xf32>
    %c0_49 = arith.constant 0 : index
    %c0_50 = arith.constant 0 : index
    %c0_51 = arith.constant 0 : index
    %106 = vector.load %arg20[%c0_49, %c0_50, %c0_51] : memref<2x2x32xf32, #tpu.memory_space<vmem>>, vector<1x2x32xf32>
    %107 = vector.shape_cast %106 : vector<1x2x32xf32> to vector<2x32xf32>
    %108 = vector.shape_cast %105 : vector<2x32xf32> to vector<1x2x32xf32>
    tpu.vector_store %arg20[%c0_49, %c0_50, %c0_51], %108 {strides = array<i32>} : memref<2x2x32xf32, #tpu.memory_space<vmem>>, vector<1x2x32xf32>,
    %c1_52 = arith.constant 1 : index
    %c0_53 = arith.constant 0 : index
    %c0_54 = arith.constant 0 : index
    %109 = vector.load %arg20[%c1_52, %c0_53, %c0_54] : memref<2x2x32xf32, #tpu.memory_space<vmem>>, vector<1x2x32xf32>
    %110 = vector.shape_cast %109 : vector<1x2x32xf32> to vector<2x32xf32>
    %c0_55 = arith.constant 0 : index
    %c0_56 = arith.constant 0 : index
    %111 = vector.load %arg13[%c0_55, %c0_56] : memref<32x96xf32, #tpu.memory_space<vmem>>, vector<32x96xf32>
    %cst_57 = arith.constant dense<0.000000e+00> : vector<2x96xf32>
    %112 = tpu.matmul %105, %111, %cst_57 {dimension_numbers = #tpu.dot_dimension_numbers<[1], [0], [0], [1], [0, 0, 1, 1], [], []>} : vector<2x32xf32>, vector<32x96xf32>, vector<2x96xf32> -> vector<2x96xf32>
    %c0_58 = arith.constant 0 : index
    %c0_59 = arith.constant 0 : index
    %113 = vector.load %arg15[%c0_58, %c0_59] : memref<1x96xf32, #tpu.memory_space<vmem>>, vector<1x96xf32>
    %114 = vector.broadcast %113 : vector<1x96xf32> to vector<2x96xf32>
    %115 = arith.addf %112, %114 : vector<2x96xf32>
    %c0_60 = arith.constant 0 : index
    %c0_61 = arith.constant 0 : index
    %116 = vector.load %arg14[%c0_60, %c0_61] : memref<32x96xf32, #tpu.memory_space<vmem>>, vector<32x96xf32>
    %cst_62 = arith.constant dense<0.000000e+00> : vector<2x96xf32>
    %117 = tpu.matmul %110, %116, %cst_62 {dimension_numbers = #tpu.dot_dimension_numbers<[1], [0], [0], [1], [0, 0, 1, 1], [], []>} : vector<2x32xf32>, vector<32x96xf32>, vector<2x96xf32> -> vector<2x96xf32>
    %c0_63 = arith.constant 0 : index
    %c0_64 = arith.constant 0 : index
    %118 = vector.load %arg16[%c0_63, %c0_64] : memref<1x96xf32, #tpu.memory_space<vmem>>, vector<1x96xf32>
    %119 = vector.broadcast %118 : vector<1x96xf32> to vector<2x96xf32>
    %120 = arith.addf %117, %119 : vector<2x96xf32>
    %121 = vector.extract_strided_slice %115 {offsets = [0, 0], sizes = [2, 32], strides = [1, 1]} : vector<2x96xf32> to vector<2x32xf32>
    %122 = vector.extract_strided_slice %120 {offsets = [0, 0], sizes = [2, 32], strides = [1, 1]} : vector<2x96xf32> to vector<2x32xf32>
    %123 = arith.addf %121, %122 : vector<2x32xf32>
    %124 = arith.negf %123 : vector<2x32xf32>
    %125 = math.exp %124 : vector<2x32xf32>
    %cst_65 = arith.constant 1.000000e+00 : f32
    %126 = vector.broadcast %cst_65 : f32 to vector<2x32xf32>
    %127 = arith.addf %126, %125 : vector<2x32xf32>
    %128 = arith.divf %126, %127 : vector<2x32xf32>
    %129 = vector.extract_strided_slice %115 {offsets = [0, 32], sizes = [2, 32], strides = [1, 1]} : vector<2x96xf32> to vector<2x32xf32>
    %130 = vector.extract_strided_slice %120 {offsets = [0, 32], sizes = [2, 32], strides = [1, 1]} : vector<2x96xf32> to vector<2x32xf32>
    %131 = arith.addf %129, %130 : vector<2x32xf32>
    %132 = arith.negf %131 : vector<2x32xf32>
    %133 = math.exp %132 : vector<2x32xf32>
    %cst_66 = arith.constant 1.000000e+00 : f32
    %134 = vector.broadcast %cst_66 : f32 to vector<2x32xf32>
    %135 = arith.addf %134, %133 : vector<2x32xf32>
    %136 = arith.divf %134, %135 : vector<2x32xf32>
    %137 = vector.extract_strided_slice %115 {offsets = [0, 64], sizes = [2, 32], strides = [1, 1]} : vector<2x96xf32> to vector<2x32xf32>
    %138 = vector.extract_strided_slice %120 {offsets = [0, 64], sizes = [2, 32], strides = [1, 1]} : vector<2x96xf32> to vector<2x32xf32>
    %139 = arith.mulf %128, %138 : vector<2x32xf32>
    %140 = arith.addf %137, %139 : vector<2x32xf32>
    %141 = math.tanh %140 : vector<2x32xf32>
    %cst_67 = arith.constant 1.000000e+00 : f32
    %142 = vector.broadcast %cst_67 : f32 to vector<2x32xf32>
    %143 = arith.subf %142, %136 : vector<2x32xf32>
    %144 = arith.mulf %143, %141 : vector<2x32xf32>
    %145 = arith.mulf %136, %110 : vector<2x32xf32>
    %146 = arith.addf %144, %145 : vector<2x32xf32>
    %c1_68 = arith.constant 1 : index
    %c0_69 = arith.constant 0 : index
    %c0_70 = arith.constant 0 : index
    %147 = vector.load %arg20[%c1_68, %c0_69, %c0_70] : memref<2x2x32xf32, #tpu.memory_space<vmem>>, vector<1x2x32xf32>
    %148 = vector.shape_cast %147 : vector<1x2x32xf32> to vector<2x32xf32>
    %149 = vector.shape_cast %146 : vector<2x32xf32> to vector<1x2x32xf32>
    tpu.vector_store %arg20[%c1_68, %c0_69, %c0_70], %149 {strides = array<i32>} : memref<2x2x32xf32, #tpu.memory_space<vmem>>, vector<1x2x32xf32>,
    %c0_71 = arith.constant 0 : index
    %c0_72 = arith.constant 0 : index
    %150 = vector.load %arg17[%c0_71, %c0_72] : memref<32x128xf32, #tpu.memory_space<vmem>>, vector<32x128xf32>
    %cst_73 = arith.constant dense<0.000000e+00> : vector<2x128xf32>
    %151 = tpu.matmul %146, %150, %cst_73 {dimension_numbers = #tpu.dot_dimension_numbers<[1], [0], [0], [1], [0, 0, 1, 1], [], []>} : vector<2x32xf32>, vector<32x128xf32>, vector<2x128xf32> -> vector<2x128xf32>
    %c0_74 = arith.constant 0 : index
    %c0_75 = arith.constant 0 : index
    %152 = vector.load %arg18[%c0_74, %c0_75] : memref<1x128xf32, #tpu.memory_space<vmem>>, vector<1x128xf32>
    %153 = vector.broadcast %152 : vector<1x128xf32> to vector<2x128xf32>
    %154 = arith.addf %151, %153 : vector<2x128xf32>
    %cst_76 = arith.constant dense<0xFF800000> : vector<2xf32>
    %155 = vector.multi_reduction <maximumf>, %154, %cst_76 [1] : vector<2x128xf32> to vector<2xf32>
    %156 = vector.shape_cast %155 : vector<2xf32> to vector<2x1xf32>
    %157 = vector.broadcast %156 : vector<2x1xf32> to vector<2x128xf32>
    %158 = arith.subf %154, %157 : vector<2x128xf32>
    %159 = math.exp %158 : vector<2x128xf32>
    %cst_77 = arith.constant dense<0.000000e+00> : vector<2xf32>
    %160 = vector.multi_reduction <add>, %159, %cst_77 [1] : vector<2x128xf32> to vector<2xf32>
    %161 = vector.shape_cast %160 : vector<2xf32> to vector<2x1xf32>
    %162 = math.log %161 : vector<2x1xf32>
    %163 = vector.broadcast %162 : vector<2x1xf32> to vector<2x128xf32>
    %164 = arith.subf %158, %163 : vector<2x128xf32>
    %c0_78 = arith.constant 0 : index
    %c0_79 = arith.constant 0 : index
    %c0_80 = arith.constant 0 : index
    %165 = vector.load %arg19[%c0_78, %c0_79, %c0_80] : memref<1x2x128xf32, #tpu.memory_space<vmem>>, vector<1x2x128xf32>
    %166 = vector.shape_cast %165 : vector<1x2x128xf32> to vector<2x128xf32>
    %167 = vector.shape_cast %164 : vector<2x128xf32> to vector<1x2x128xf32>
    tpu.vector_store %arg19[%c0_78, %c0_79, %c0_80], %167 {strides = array<i32>} : memref<1x2x128xf32, #tpu.memory_space<vmem>>, vector<1x2x128xf32>,
    return
  }
  func.func @transform_0(%arg0: i32) -> (i32, i32, i32) {
    %c0_i32 = arith.constant 0 : i32
    %c0_i32_0 = arith.constant 0 : i32
    %c0_i32_1 = arith.constant 0 : i32
    return %arg0, %c0_i32, %c0_i32_0 : i32, i32, i32
  }
  func.func @transform_1(%arg0: i32) -> (i32, i32, i32) {
    %c0_i32 = arith.constant 0 : i32
    %c0_i32_0 = arith.constant 0 : i32
    %c0_i32_1 = arith.constant 0 : i32
    %c0_i32_2 = arith.constant 0 : i32
    return %c0_i32, %c0_i32_0, %c0_i32_1 : i32, i32, i32
  }
  func.func @transform_2(%arg0: i32) -> (i32, i32) {
    %c0_i32 = arith.constant 0 : i32
    %c0_i32_0 = arith.constant 0 : i32
    %c0_i32_1 = arith.constant 0 : i32
    return %c0_i32, %c0_i32_0 : i32, i32
  }
  func.func @transform_3(%arg0: i32) -> (i32, i32) {
    %c0_i32 = arith.constant 0 : i32
    %c0_i32_0 = arith.constant 0 : i32
    %c0_i32_1 = arith.constant 0 : i32
    return %c0_i32, %c0_i32_0 : i32, i32
  }
  func.func @transform_4(%arg0: i32) -> (i32, i32) {
    %c0_i32 = arith.constant 0 : i32
    %c0_i32_0 = arith.constant 0 : i32
    %c0_i32_1 = arith.constant 0 : i32
    return %c0_i32, %c0_i32_0 : i32, i32
  }
  func.func @transform_5(%arg0: i32) -> (i32, i32) {
    %c0_i32 = arith.constant 0 : i32
    %c0_i32_0 = arith.constant 0 : i32
    %c0_i32_1 = arith.constant 0 : i32
    return %c0_i32, %c0_i32_0 : i32, i32
  }
  func.func @transform_6(%arg0: i32) -> (i32, i32) {
    %c0_i32 = arith.constant 0 : i32
    %c0_i32_0 = arith.constant 0 : i32
    %c0_i32_1 = arith.constant 0 : i32
    return %c0_i32, %c0_i32_0 : i32, i32
  }
  func.func @transform_7(%arg0: i32) -> (i32, i32) {
    %c0_i32 = arith.constant 0 : i32
    %c0_i32_0 = arith.constant 0 : i32
    %c0_i32_1 = arith.constant 0 : i32
    return %c0_i32, %c0_i32_0 : i32, i32
  }
  func.func @transform_8(%arg0: i32) -> (i32, i32) {
    %c0_i32 = arith.constant 0 : i32
    %c0_i32_0 = arith.constant 0 : i32
    %c0_i32_1 = arith.constant 0 : i32
    return %c0_i32, %c0_i32_0 : i32, i32
  }
  func.func @transform_9(%arg0: i32) -> (i32, i32) {
    %c0_i32 = arith.constant 0 : i32
    %c0_i32_0 = arith.constant 0 : i32
    %c0_i32_1 = arith.constant 0 : i32
    return %c0_i32, %c0_i32_0 : i32, i32
  }
  func.func @transform_10(%arg0: i32) -> (i32, i32) {
    %c0_i32 = arith.constant 0 : i32
    %c0_i32_0 = arith.constant 0 : i32
    %c0_i32_1 = arith.constant 0 : i32
    return %c0_i32, %c0_i32_0 : i32, i32
  }
  func.func @transform_11(%arg0: i32) -> (i32, i32) {
    %c0_i32 = arith.constant 0 : i32
    %c0_i32_0 = arith.constant 0 : i32
    %c0_i32_1 = arith.constant 0 : i32
    return %c0_i32, %c0_i32_0 : i32, i32
  }
  func.func @transform_12(%arg0: i32) -> (i32, i32) {
    %c0_i32 = arith.constant 0 : i32
    %c0_i32_0 = arith.constant 0 : i32
    %c0_i32_1 = arith.constant 0 : i32
    return %c0_i32, %c0_i32_0 : i32, i32
  }
  func.func @transform_13(%arg0: i32) -> (i32, i32) {
    %c0_i32 = arith.constant 0 : i32
    %c0_i32_0 = arith.constant 0 : i32
    %c0_i32_1 = arith.constant 0 : i32
    return %c0_i32, %c0_i32_0 : i32, i32
  }
  func.func @transform_14(%arg0: i32) -> (i32, i32) {
    %c0_i32 = arith.constant 0 : i32
    %c0_i32_0 = arith.constant 0 : i32
    %c0_i32_1 = arith.constant 0 : i32
    return %c0_i32, %c0_i32_0 : i32, i32
  }
  func.func @transform_15(%arg0: i32) -> (i32, i32) {
    %c0_i32 = arith.constant 0 : i32
    %c0_i32_0 = arith.constant 0 : i32
    %c0_i32_1 = arith.constant 0 : i32
    return %c0_i32, %c0_i32_0 : i32, i32
  }
  func.func @transform_16(%arg0: i32) -> (i32, i32) {
    %c0_i32 = arith.constant 0 : i32
    %c0_i32_0 = arith.constant 0 : i32
    %c0_i32_1 = arith.constant 0 : i32
    return %c0_i32, %c0_i32_0 : i32, i32
  }
  func.func @transform_17(%arg0: i32) -> (i32, i32) {
    %c0_i32 = arith.constant 0 : i32
    %c0_i32_0 = arith.constant 0 : i32
    %c0_i32_1 = arith.constant 0 : i32
    return %c0_i32, %c0_i32_0 : i32, i32
  }
  func.func @transform_18(%arg0: i32) -> (i32, i32, i32) {
    %c0_i32 = arith.constant 0 : i32
    %c0_i32_0 = arith.constant 0 : i32
    %c0_i32_1 = arith.constant 0 : i32
    return %arg0, %c0_i32, %c0_i32_0 : i32, i32, i32
  }
}

</mosaic_0001>

<llo_original>
// kernel: forward.3
$region0: #{forward.3}
  #allocation0 [shape = 'u32[]', space=smem, size = 0x4, offset = 0x4, fixed_abs, tag = 'smem constant byte address 0x4 - core index']
  #allocation1 [shape = 'u32[144,128]{1,0:T(1,128)}', space=vmem, size = 0x12000, scoped, tag = 'internal scratch']
  #allocation2 [shape = 'f32[2,2,32]{2,1,0:T(2,128)}', space=vmem, size = 0x800, scoped, tag = 'scratch operand']
  #allocation3 [shape = 'f32[16,128]{1,0:T(8,128)}', space=vmem, size = 0x2000, scoped, tag = 'scratch operand']
  %s0 = inlined_call_operand.vmem [shape: f32[5,2,96], index: 0, kind: input, shape index: {}]
  %s1 = inlined_call_operand.vmem [shape: f32[2,2,32], index: 1, kind: input, shape index: {}]
  %s2 = inlined_call_operand.vmem [shape: f32[16,32], index: 2, kind: input, shape index: {}]
  %s3 = inlined_call_operand.vmem [shape: f32[32,128], index: 3, kind: input, shape index: {}]
  %s4 = inlined_call_operand.vmem [shape: f32[32,128], index: 4, kind: input, shape index: {}]
  %s5 = inlined_call_operand.vmem [shape: f32[1,128], index: 5, kind: input, shape index: {}]
  %s6 = inlined_call_operand.vmem [shape: f32[128,4], index: 6, kind: input, shape index: {}]
  %s7 = inlined_call_operand.vmem [shape: f32[128,32], index: 7, kind: input, shape index: {}]
  %s8 = inlined_call_operand.vmem [shape: f32[1,32], index: 8, kind: input, shape index: {}]
  %s9 = inlined_call_operand.vmem [shape: f32[32,96], index: 9, kind: input, shape index: {}]
  %s10 = inlined_call_operand.vmem [shape: f32[32,96], index: 10, kind: input, shape index: {}]
  %s11 = inlined_call_operand.vmem [shape: f32[1,96], index: 11, kind: input, shape index: {}]
  %s12 = inlined_call_operand.vmem [shape: f32[32,96], index: 12, kind: input, shape index: {}]
  %s13 = inlined_call_operand.vmem [shape: f32[32,96], index: 13, kind: input, shape index: {}]
  %s14 = inlined_call_operand.vmem [shape: f32[1,96], index: 14, kind: input, shape index: {}]
  %s15 = inlined_call_operand.vmem [shape: f32[1,96], index: 15, kind: input, shape index: {}]
  %s16 = inlined_call_operand.vmem [shape: f32[32,128], index: 16, kind: input, shape index: {}]
  %s17 = inlined_call_operand.vmem [shape: f32[1,128], index: 17, kind: input, shape index: {}]
  %s18 = inlined_call_operand.vmem [shape: f32[5,2,128], index: 18, kind: output, shape index: {}]
  %s19 = sld [smem:[#allocation0]]
  $region109: #{forward.3} parent=0
    _
  %s21 = ssub.s32 1, %s19
  %s22 = scalar_select 0, %s21, %s19
  loop: start=0, step=1, limit=7
  $region2: #{forward.3} parent=0 // loop_pre_header
    _
  $region3: #{forward.3} parent=0 // loop_header
    %s24 = sphi 0, %s28
    %p25 = scmp.ge.s32.totalorder %s24, 7
    %s34 = sphi 0, %s36
    %s37 = sphi 0, %s34
    %s38 = sphi 0, %s37
    %s54 = sphi 0, %s38
    %s58 = sphi 0, %s58
    %s60 = sphi 0, %s58
    %s61 = sphi 0, %s60
    %s75 = sphi 0, %s61
    %s79 = sphi 0, %s79
    %s81 = sphi 0, %s79
    %s82 = sphi 0, %s81
    %s96 = sphi 0, %s82
    %s100 = sphi 0, %s100
    %s102 = sphi 0, %s100
    %s103 = sphi 0, %s102
    %s117 = sphi 0, %s103
    %s121 = sphi 0, %s121
    %s123 = sphi 0, %s121
    %s124 = sphi 0, %s123
    %s138 = sphi 0, %s124
    %s142 = sphi 0, %s142
    %s144 = sphi 0, %s142
    %s145 = sphi 0, %s144
    %s159 = sphi 0, %s145
    %s163 = sphi 0, %s163
    %s165 = sphi 0, %s163
    %s166 = sphi 0, %s165
    %s180 = sphi 0, %s166
    %s184 = sphi 0, %s184
    %s186 = sphi 0, %s184
    %s187 = sphi 0, %s186
    %s201 = sphi 0, %s187
    %s205 = sphi 0, %s205
    %s207 = sphi 0, %s205
    %s208 = sphi 0, %s207
    %s222 = sphi 0, %s208
    %s226 = sphi 0, %s226
    %s228 = sphi 0, %s226
    %s229 = sphi 0, %s228
    %s243 = sphi 0, %s229
    %s247 = sphi 0, %s247
    %s249 = sphi 0, %s247
    %s250 = sphi 0, %s249
    %s264 = sphi 0, %s250
    %s268 = sphi 0, %s268
    %s270 = sphi 0, %s268
    %s271 = sphi 0, %s270
    %s285 = sphi 0, %s271
    %s289 = sphi 0, %s289
    %s291 = sphi 0, %s289
    %s292 = sphi 0, %s291
    %s306 = sphi 0, %s292
    %s310 = sphi 0, %s310
    %s312 = sphi 0, %s310
    %s313 = sphi 0, %s312
    %s327 = sphi 0, %s313
    %s331 = sphi 0, %s331
    %s333 = sphi 0, %s331
    %s334 = sphi 0, %s333
    %s348 = sphi 0, %s334
    %s352 = sphi 0, %s352
    %s354 = sphi 0, %s352
    %s355 = sphi 0, %s354
    %s369 = sphi 0, %s355
    %s373 = sphi 0, %s373
    %s375 = sphi 0, %s373
    %s376 = sphi 0, %s375
    %s390 = sphi 0, %s376
    %s394 = sphi 0, %s394
    %s396 = sphi 0, %s394
    %s397 = sphi 0, %s396
    %s411 = sphi 0, %s397
    %s417 = sphi 0, %s419
    %s420 = sphi 0, %s417
    %s421 = sphi 0, %s420
    %s437 = sphi 0, %s421
  $region4: #{forward.3} parent=0 // loop_header_branch
    %27 = sbr.rel (%p25) target = $region8
  $region5: #{forward.3} parent=0 // loop_body
    %s29 = ssub.s32 %s24, 1
    %s30 = ssub.s32 %s24, 2
    %s31 = sadd.s32 %s24, 1
    %s32 = ssub.s32 %s24, %s31
    %p33 = scmp.eq.s32.totalorder %s32, 0
    %s35 = sadd.s32 %s34, 1
    %s36 = scalar_select %p33, %s34, %s35
    %p39 = pneg %p33
    %p40 = scmp.eq.s32.totalorder %s24, 4
    %p41 = por %p39, %p40
    %p42 = scmp.ne.s32.totalorder %s34, %s37
    %p43 = scmp.eq.s32.totalorder %s24, 0
    %p44 = por %p42, %p43
    %p45 = scmp.ne.s32.totalorder %s34, %s37
    %p46 = scmp.eq.s32.totalorder %s29, 4
    %p47 = por %p45, %p46
    %p48 = scmp.ne.s32.totalorder %s37, %s38
    %p49 = scmp.eq.s32.totalorder %s29, 0
    %p50 = por %p48, %p49
    %p51 = scmp.ne.s32.totalorder %s37, %s38
    %p52 = scmp.eq.s32.totalorder %s30, 4
    %p53 = por %p51, %p52
    %p55 = scmp.ne.s32.totalorder %s38, %s54
    %p56 = scmp.eq.s32.totalorder %s30, 0
    %p57 = por %p55, %p56
    %s59 = sadd.s32 %s58, 1
    %p62 = scmp.eq.s32.totalorder %s24, 4
    %p63 = scmp.ne.s32.totalorder %s58, %s60
    %p64 = scmp.eq.s32.totalorder %s24, 0
    %p65 = por %p63, %p64
    %p66 = scmp.ne.s32.totalorder %s58, %s60
    %p67 = scmp.eq.s32.totalorder %s29, 4
    %p68 = por %p66, %p67
    %p69 = scmp.ne.s32.totalorder %s60, %s61
    %p70 = scmp.eq.s32.totalorder %s29, 0
    %p71 = por %p69, %p70
    %p72 = scmp.ne.s32.totalorder %s60, %s61
    %p73 = scmp.eq.s32.totalorder %s30, 4
    %p74 = por %p72, %p73
    %p76 = scmp.ne.s32.totalorder %s61, %s75
    %p77 = scmp.eq.s32.totalorder %s30, 0
    %p78 = por %p76, %p77
    %s80 = sadd.s32 %s79, 1
    %p83 = scmp.eq.s32.totalorder %s24, 4
    %p84 = scmp.ne.s32.totalorder %s79, %s81
    %p85 = scmp.eq.s32.totalorder %s24, 0
    %p86 = por %p84, %p85
    %p87 = scmp.ne.s32.totalorder %s79, %s81
    %p88 = scmp.eq.s32.totalorder %s29, 4
    %p89 = por %p87, %p88
    %p90 = scmp.ne.s32.totalorder %s81, %s82
    %p91 = scmp.eq.s32.totalorder %s29, 0
    %p92 = por %p90, %p91
    %p93 = scmp.ne.s32.totalorder %s81, %s82
    %p94 = scmp.eq.s32.totalorder %s30, 4
    %p95 = por %p93, %p94
    %p97 = scmp.ne.s32.totalorder %s82, %s96
    %p98 = scmp.eq.s32.totalorder %s30, 0
    %p99 = por %p97, %p98
    %s101 = sadd.s32 %s100, 1
    %p104 = scmp.eq.s32.totalorder %s24, 4
    %p105 = scmp.ne.s32.totalorder %s100, %s102
    %p106 = scmp.eq.s32.totalorder %s24, 0
    %p107 = por %p105, %p106
    %p108 = scmp.ne.s32.totalorder %s100, %s102
    %p109 = scmp.eq.s32.totalorder %s29, 4
    %p110 = por %p108, %p109
    %p111 = scmp.ne.s32.totalorder %s102, %s103
    %p112 = scmp.eq.s32.totalorder %s29, 0
    %p113 = por %p111, %p112
    %p114 = scmp.ne.s32.totalorder %s102, %s103
    %p115 = scmp.eq.s32.totalorder %s30, 4
    %p116 = por %p114, %p115
    %p118 = scmp.ne.s32.totalorder %s103, %s117
    %p119 = scmp.eq.s32.totalorder %s30, 0
    %p120 = por %p118, %p119
    %s122 = sadd.s32 %s121, 1
    %p125 = scmp.eq.s32.totalorder %s24, 4
    %p126 = scmp.ne.s32.totalorder %s121, %s123
    %p127 = scmp.eq.s32.totalorder %s24, 0
    %p128 = por %p126, %p127
    %p129 = scmp.ne.s32.totalorder %s121, %s123
    %p130 = scmp.eq.s32.totalorder %s29, 4
    %p131 = por %p129, %p130
    %p132 = scmp.ne.s32.totalorder %s123, %s124
    %p133 = scmp.eq.s32.totalorder %s29, 0
    %p134 = por %p132, %p133
    %p135 = scmp.ne.s32.totalorder %s123, %s124
    %p136 = scmp.eq.s32.totalorder %s30, 4
    %p137 = por %p135, %p136
    %p139 = scmp.ne.s32.totalorder %s124, %s138
    %p140 = scmp.eq.s32.totalorder %s30, 0
    %p141 = por %p139, %p140
    %s143 = sadd.s32 %s142, 1
    %p146 = scmp.eq.s32.totalorder %s24, 4
    %p147 = scmp.ne.s32.totalorder %s142, %s144
    %p148 = scmp.eq.s32.totalorder %s24, 0
    %p149 = por %p147, %p148
    %p150 = scmp.ne.s32.totalorder %s142, %s144
    %p151 = scmp.eq.s32.totalorder %s29, 4
    %p152 = por %p150, %p151
    %p153 = scmp.ne.s32.totalorder %s144, %s145
    %p154 = scmp.eq.s32.totalorder %s29, 0
    %p155 = por %p153, %p154
    %p156 = scmp.ne.s32.totalorder %s144, %s145
    %p157 = scmp.eq.s32.totalorder %s30, 4
    %p158 = por %p156, %p157
    %p160 = scmp.ne.s32.totalorder %s145, %s159
    %p161 = scmp.eq.s32.totalorder %s30, 0
    %p162 = por %p160, %p161
    %s164 = sadd.s32 %s163, 1
    %p167 = scmp.eq.s32.totalorder %s24, 4
    %p168 = scmp.ne.s32.totalorder %s163, %s165
    %p169 = scmp.eq.s32.totalorder %s24, 0
    %p170 = por %p168, %p169
    %p171 = scmp.ne.s32.totalorder %s163, %s165
    %p172 = scmp.eq.s32.totalorder %s29, 4
    %p173 = por %p171, %p172
    %p174 = scmp.ne.s32.totalorder %s165, %s166
    %p175 = scmp.eq.s32.totalorder %s29, 0
    %p176 = por %p174, %p175
    %p177 = scmp.ne.s32.totalorder %s165, %s166
    %p178 = scmp.eq.s32.totalorder %s30, 4
    %p179 = por %p177, %p178
    %p181 = scmp.ne.s32.totalorder %s166, %s180
    %p182 = scmp.eq.s32.totalorder %s30, 0
    %p183 = por %p181, %p182
    %s185 = sadd.s32 %s184, 1
    %p188 = scmp.eq.s32.totalorder %s24, 4
    %p189 = scmp.ne.s32.totalorder %s184, %s186
    %p190 = scmp.eq.s32.totalorder %s24, 0
    %p191 = por %p189, %p190
    %p192 = scmp.ne.s32.totalorder %s184, %s186
    %p193 = scmp.eq.s32.totalorder %s29, 4
    %p194 = por %p192, %p193
    %p195 = scmp.ne.s32.totalorder %s186, %s187
    %p196 = scmp.eq.s32.totalorder %s29, 0
    %p197 = por %p195, %p196
    %p198 = scmp.ne.s32.totalorder %s186, %s187
    %p199 = scmp.eq.s32.totalorder %s30, 4
    %p200 = por %p198, %p199
    %p202 = scmp.ne.s32.totalorder %s187, %s201
    %p203 = scmp.eq.s32.totalorder %s30, 0
    %p204 = por %p202, %p203
    %s206 = sadd.s32 %s205, 1
    %p209 = scmp.eq.s32.totalorder %s24, 4
    %p210 = scmp.ne.s32.totalorder %s205, %s207
    %p211 = scmp.eq.s32.totalorder %s24, 0
    %p212 = por %p210, %p211
    %p213 = scmp.ne.s32.totalorder %s205, %s207
    %p214 = scmp.eq.s32.totalorder %s29, 4
    %p215 = por %p213, %p214
    %p216 = scmp.ne.s32.totalorder %s207, %s208
    %p217 = scmp.eq.s32.totalorder %s29, 0
    %p218 = por %p216, %p217
    %p219 = scmp.ne.s32.totalorder %s207, %s208
    %p220 = scmp.eq.s32.totalorder %s30, 4
    %p221 = por %p219, %p220
    %p223 = scmp.ne.s32.totalorder %s208, %s222
    %p224 = scmp.eq.s32.totalorder %s30, 0
    %p225 = por %p223, %p224
    %s227 = sadd.s32 %s226, 1
    %p230 = scmp.eq.s32.totalorder %s24, 4
    %p231 = scmp.ne.s32.totalorder %s226, %s228
    %p232 = scmp.eq.s32.totalorder %s24, 0
    %p233 = por %p231, %p232
    %p234 = scmp.ne.s32.totalorder %s226, %s228
    %p235 = scmp.eq.s32.totalorder %s29, 4
    %p236 = por %p234, %p235
    %p237 = scmp.ne.s32.totalorder %s228, %s229
    %p238 = scmp.eq.s32.totalorder %s29, 0
    %p239 = por %p237, %p238
    %p240 = scmp.ne.s32.totalorder %s228, %s229
    %p241 = scmp.eq.s32.totalorder %s30, 4
    %p242 = por %p240, %p241
    %p244 = scmp.ne.s32.totalorder %s229, %s243
    %p245 = scmp.eq.s32.totalorder %s30, 0
    %p246 = por %p244, %p245
    %s248 = sadd.s32 %s247, 1
    %p251 = scmp.eq.s32.totalorder %s24, 4
    %p252 = scmp.ne.s32.totalorder %s247, %s249
    %p253 = scmp.eq.s32.totalorder %s24, 0
    %p254 = por %p252, %p253
    %p255 = scmp.ne.s32.totalorder %s247, %s249
    %p256 = scmp.eq.s32.totalorder %s29, 4
    %p257 = por %p255, %p256
    %p258 = scmp.ne.s32.totalorder %s249, %s250
    %p259 = scmp.eq.s32.totalorder %s29, 0
    %p260 = por %p258, %p259
    %p261 = scmp.ne.s32.totalorder %s249, %s250
    %p262 = scmp.eq.s32.totalorder %s30, 4
    %p263 = por %p261, %p262
    %p265 = scmp.ne.s32.totalorder %s250, %s264
    %p266 = scmp.eq.s32.totalorder %s30, 0
    %p267 = por %p265, %p266
    %s269 = sadd.s32 %s268, 1
    %p272 = scmp.eq.s32.totalorder %s24, 4
    %p273 = scmp.ne.s32.totalorder %s268, %s270
    %p274 = scmp.eq.s32.totalorder %s24, 0
    %p275 = por %p273, %p274
    %p276 = scmp.ne.s32.totalorder %s268, %s270
    %p277 = scmp.eq.s32.totalorder %s29, 4
    %p278 = por %p276, %p277
    %p279 = scmp.ne.s32.totalorder %s270, %s271
    %p280 = scmp.eq.s32.totalorder %s29, 0
    %p281 = por %p279, %p280
    %p282 = scmp.ne.s32.totalorder %s270, %s271
    %p283 = scmp.eq.s32.totalorder %s30, 4
    %p284 = por %p282, %p283
    %p286 = scmp.ne.s32.totalorder %s271, %s285
    %p287 = scmp.eq.s32.totalorder %s30, 0
    %p288 = por %p286, %p287
    %s290 = sadd.s32 %s289, 1
    %p293 = scmp.eq.s32.totalorder %s24, 4
    %p294 = scmp.ne.s32.totalorder %s289, %s291
    %p295 = scmp.eq.s32.totalorder %s24, 0
    %p296 = por %p294, %p295
    %p297 = scmp.ne.s32.totalorder %s289, %s291
    %p298 = scmp.eq.s32.totalorder %s29, 4
    %p299 = por %p297, %p298
    %p300 = scmp.ne.s32.totalorder %s291, %s292
    %p301 = scmp.eq.s32.totalorder %s29, 0
    %p302 = por %p300, %p301
    %p303 = scmp.ne.s32.totalorder %s291, %s292
    %p304 = scmp.eq.s32.totalorder %s30, 4
    %p305 = por %p303, %p304
    %p307 = scmp.ne.s32.totalorder %s292, %s306
    %p308 = scmp.eq.s32.totalorder %s30, 0
    %p309 = por %p307, %p308
    %s311 = sadd.s32 %s310, 1
    %p314 = scmp.eq.s32.totalorder %s24, 4
    %p315 = scmp.ne.s32.totalorder %s310, %s312
    %p316 = scmp.eq.s32.totalorder %s24, 0
    %p317 = por %p315, %p316
    %p318 = scmp.ne.s32.totalorder %s310, %s312
    %p319 = scmp.eq.s32.totalorder %s29, 4
    %p320 = por %p318, %p319
    %p321 = scmp.ne.s32.totalorder %s312, %s313
    %p322 = scmp.eq.s32.totalorder %s29, 0
    %p323 = por %p321, %p322
    %p324 = scmp.ne.s32.totalorder %s312, %s313
    %p325 = scmp.eq.s32.totalorder %s30, 4
    %p326 = por %p324, %p325
    %p328 = scmp.ne.s32.totalorder %s313, %s327
    %p329 = scmp.eq.s32.totalorder %s30, 0
    %p330 = por %p328, %p329
    %s332 = sadd.s32 %s331, 1
    %p335 = scmp.eq.s32.totalorder %s24, 4
    %p336 = scmp.ne.s32.totalorder %s331, %s333
    %p337 = scmp.eq.s32.totalorder %s24, 0
    %p338 = por %p336, %p337
    %p339 = scmp.ne.s32.totalorder %s331, %s333
    %p340 = scmp.eq.s32.totalorder %s29, 4
    %p341 = por %p339, %p340
    %p342 = scmp.ne.s32.totalorder %s333, %s334
    %p343 = scmp.eq.s32.totalorder %s29, 0
    %p344 = por %p342, %p343
    %p345 = scmp.ne.s32.totalorder %s333, %s334
    %p346 = scmp.eq.s32.totalorder %s30, 4
    %p347 = por %p345, %p346
    %p349 = scmp.ne.s32.totalorder %s334, %s348
    %p350 = scmp.eq.s32.totalorder %s30, 0
    %p351 = por %p349, %p350
    %s353 = sadd.s32 %s352, 1
    %p356 = scmp.eq.s32.totalorder %s24, 4
    %p357 = scmp.ne.s32.totalorder %s352, %s354
    %p358 = scmp.eq.s32.totalorder %s24, 0
    %p359 = por %p357, %p358
    %p360 = scmp.ne.s32.totalorder %s352, %s354
    %p361 = scmp.eq.s32.totalorder %s29, 4
    %p362 = por %p360, %p361
    %p363 = scmp.ne.s32.totalorder %s354, %s355
    %p364 = scmp.eq.s32.totalorder %s29, 0
    %p365 = por %p363, %p364
    %p366 = scmp.ne.s32.totalorder %s354, %s355
    %p367 = scmp.eq.s32.totalorder %s30, 4
    %p368 = por %p366, %p367
    %p370 = scmp.ne.s32.totalorder %s355, %s369
    %p371 = scmp.eq.s32.totalorder %s30, 0
    %p372 = por %p370, %p371
    %s374 = sadd.s32 %s373, 1
    %p377 = scmp.eq.s32.totalorder %s24, 4
    %p378 = scmp.ne.s32.totalorder %s373, %s375
    %p379 = scmp.eq.s32.totalorder %s24, 0
    %p380 = por %p378, %p379
    %p381 = scmp.ne.s32.totalorder %s373, %s375
    %p382 = scmp.eq.s32.totalorder %s29, 4
    %p383 = por %p381, %p382
    %p384 = scmp.ne.s32.totalorder %s375, %s376
    %p385 = scmp.eq.s32.totalorder %s29, 0
    %p386 = por %p384, %p385
    %p387 = scmp.ne.s32.totalorder %s375, %s376
    %p388 = scmp.eq.s32.totalorder %s30, 4
    %p389 = por %p387, %p388
    %p391 = scmp.ne.s32.totalorder %s376, %s390
    %p392 = scmp.eq.s32.totalorder %s30, 0
    %p393 = por %p391, %p392
    %s395 = sadd.s32 %s394, 1
    %p398 = scmp.eq.s32.totalorder %s24, 4
    %p399 = scmp.ne.s32.totalorder %s394, %s396
    %p400 = scmp.eq.s32.totalorder %s24, 0
    %p401 = por %p399, %p400
    %p402 = scmp.ne.s32.totalorder %s394, %s396
    %p403 = scmp.eq.s32.totalorder %s29, 4
    %p404 = por %p402, %p403
    %p405 = scmp.ne.s32.totalorder %s396, %s397
    %p406 = scmp.eq.s32.totalorder %s29, 0
    %p407 = por %p405, %p406
    %p408 = scmp.ne.s32.totalorder %s396, %s397
    %p409 = scmp.eq.s32.totalorder %s30, 4
    %p410 = por %p408, %p409
    %p412 = scmp.ne.s32.totalorder %s397, %s411
    %p413 = scmp.eq.s32.totalorder %s30, 0
    %p414 = por %p412, %p413
    %s415 = ssub.s32 %s24, %s31
    %p416 = scmp.eq.s32.totalorder %s415, 0
    %s418 = sadd.s32 %s417, 1
    %s419 = scalar_select %p416, %s417, %s418
    %p422 = pneg %p416
    %p423 = scmp.eq.s32.totalorder %s24, 4
    %p424 = por %p422, %p423
    %p425 = scmp.ne.s32.totalorder %s417, %s420
    %p426 = scmp.eq.s32.totalorder %s24, 0
    %p427 = por %p425, %p426
    %p428 = scmp.ne.s32.totalorder %s417, %s420
    %p429 = scmp.eq.s32.totalorder %s29, 4
    %p430 = por %p428, %p429
    %p431 = scmp.ne.s32.totalorder %s420, %s421
    %p432 = scmp.eq.s32.totalorder %s29, 0
    %p433 = por %p431, %p432
    %p434 = scmp.ne.s32.totalorder %s420, %s421
    %p435 = scmp.eq.s32.totalorder %s30, 4
    %p436 = por %p434, %p435
    %p438 = scmp.ne.s32.totalorder %s421, %s437
    %p439 = scmp.eq.s32.totalorder %s30, 0
    %p440 = por %p438, %p439
    %p441 = scmp.le.s32.totalorder 1, %s24
    %p442 = scmp.lt.s32.totalorder %s24, 6
    %p443 = pnand %p441, %p442
    %p444 = pneg %p443
    // Predicated region
    $region9: #{forward.3} parent=5 // pred_check
      _
    $region10: #{forward.3} parent=5 // pred_check_branch
      %446 = sbr.rel (%p443) target = $region12
    $region11: #{forward.3} parent=5 // pred_region
      %s447 = ssub.s32 %s24, 1
      // Predicated region
      $region13: #{forward.3} parent=11 // pred_check
        %p448 = pneg %p71
      $region14: #{forward.3} parent=11 // pred_check_branch
        %450 = sbr.rel (%p448) target = $region16
      $region15: #{forward.3} parent=11 // pred_region
        _
      $region16: #{forward.3} parent=11 // pred_fallthru
        _
      // Predicated region
      $region17: #{forward.3} parent=11 // pred_check
        %p451 = pneg %p92
      $region18: #{forward.3} parent=11 // pred_check_branch
        %453 = sbr.rel (%p451) target = $region20
      $region19: #{forward.3} parent=11 // pred_region
        _
      $region20: #{forward.3} parent=11 // pred_fallthru
        _
      // Predicated region
      $region21: #{forward.3} parent=11 // pred_check
        %p454 = pneg %p113
      $region22: #{forward.3} parent=11 // pred_check_branch
        %456 = sbr.rel (%p454) target = $region24
      $region23: #{forward.3} parent=11 // pred_region
        _
      $region24: #{forward.3} parent=11 // pred_fallthru
        _
      // Predicated region
      $region25: #{forward.3} parent=11 // pred_check
        %p457 = pneg %p134
      $region26: #{forward.3} parent=11 // pred_check_branch
        %459 = sbr.rel (%p457) target = $region28
      $region27: #{forward.3} parent=11 // pred_region
        _
      $region28: #{forward.3} parent=11 // pred_fallthru
        _
      // Predicated region
      $region29: #{forward.3} parent=11 // pred_check
        %p460 = pneg %p155
      $region30: #{forward.3} parent=11 // pred_check_branch
        %462 = sbr.rel (%p460) target = $region32
      $region31: #{forward.3} parent=11 // pred_region
        _
      $region32: #{forward.3} parent=11 // pred_fallthru
        _
      // Predicated region
      $region33: #{forward.3} parent=11 // pred_check
        %p463 = pneg %p176
      $region34: #{forward.3} parent=11 // pred_check_branch
        %465 = sbr.rel (%p463) target = $region36
      $region35: #{forward.3} parent=11 // pred_region
        _
      $region36: #{forward.3} parent=11 // pred_fallthru
        _
      // Predicated region
      $region37: #{forward.3} parent=11 // pred_check
        %p466 = pneg %p197
      $region38: #{forward.3} parent=11 // pred_check_branch
        %468 = sbr.rel (%p466) target = $region40
      $region39: #{forward.3} parent=11 // pred_region
        _
      $region40: #{forward.3} parent=11 // pred_fallthru
        _
      // Predicated region
      $region41: #{forward.3} parent=11 // pred_check
        %p469 = pneg %p218
      $region42: #{forward.3} parent=11 // pred_check_branch
        %471 = sbr.rel (%p469) target = $region44
      $region43: #{forward.3} parent=11 // pred_region
        _
      $region44: #{forward.3} parent=11 // pred_fallthru
        _
      // Predicated region
      $region45: #{forward.3} parent=11 // pred_check
        %p472 = pneg %p239
      $region46: #{forward.3} parent=11 // pred_check_branch
        %474 = sbr.rel (%p472) target = $region48
      $region47: #{forward.3} parent=11 // pred_region
        _
      $region48: #{forward.3} parent=11 // pred_fallthru
        _
      // Predicated region
      $region49: #{forward.3} parent=11 // pred_check
        %p475 = pneg %p260
      $region50: #{forward.3} parent=11 // pred_check_branch
        %477 = sbr.rel (%p475) target = $region52
      $region51: #{forward.3} parent=11 // pred_region
        _
      $region52: #{forward.3} parent=11 // pred_fallthru
        _
      // Predicated region
      $region53: #{forward.3} parent=11 // pred_check
        %p478 = pneg %p281
      $region54: #{forward.3} parent=11 // pred_check_branch
        %480 = sbr.rel (%p478) target = $region56
      $region55: #{forward.3} parent=11 // pred_region
        _
      $region56: #{forward.3} parent=11 // pred_fallthru
        _
      // Predicated region
      $region57: #{forward.3} parent=11 // pred_check
        %p481 = pneg %p302
      $region58: #{forward.3} parent=11 // pred_check_branch
        %483 = sbr.rel (%p481) target = $region60
      $region59: #{forward.3} parent=11 // pred_region
        _
      $region60: #{forward.3} parent=11 // pred_fallthru
        _
      // Predicated region
      $region61: #{forward.3} parent=11 // pred_check
        %p484 = pneg %p323
      $region62: #{forward.3} parent=11 // pred_check_branch
        %486 = sbr.rel (%p484) target = $region64
      $region63: #{forward.3} parent=11 // pred_region
        _
      $region64: #{forward.3} parent=11 // pred_fallthru
        _
      // Predicated region
      $region65: #{forward.3} parent=11 // pred_check
        %p487 = pneg %p344
      $region66: #{forward.3} parent=11 // pred_check_branch
        %489 = sbr.rel (%p487) target = $region68
      $region67: #{forward.3} parent=11 // pred_region
        _
      $region68: #{forward.3} parent=11 // pred_fallthru
        _
      // Predicated region
      $region69: #{forward.3} parent=11 // pred_check
        %p490 = pneg %p365
      $region70: #{forward.3} parent=11 // pred_check_branch
        %492 = sbr.rel (%p490) target = $region72
      $region71: #{forward.3} parent=11 // pred_region
        _
      $region72: #{forward.3} parent=11 // pred_fallthru
        _
      // Predicated region
      $region73: #{forward.3} parent=11 // pred_check
        %p493 = pneg %p386
      $region74: #{forward.3} parent=11 // pred_check_branch
        %495 = sbr.rel (%p493) target = $region76
      $region75: #{forward.3} parent=11 // pred_region
        _
      $region76: #{forward.3} parent=11 // pred_fallthru
        _
      // Predicated region
      $region77: #{forward.3} parent=11 // pred_check
        %p496 = pneg %p407
      $region78: #{forward.3} parent=11 // pred_check_branch
        %498 = sbr.rel (%p496) target = $region80
      $region79: #{forward.3} parent=11 // pred_region
        _
      $region80: #{forward.3} parent=11 // pred_fallthru
        _
    $region12: #{forward.3} parent=5 // pred_fallthru
      _
    %p499 = scmp.lt.s32.totalorder %s24, 5
    // Predicated region
    $region81: #{forward.3} parent=5 // pred_check
      %p500 = pneg %p499
    $region82: #{forward.3} parent=5 // pred_check_branch
      %502 = sbr.rel (%p500) target = $region84
    $region83: #{forward.3} parent=5 // pred_region
      // Predicated region
      $region85: #{forward.3} parent=83 // pred_check
        %p503 = pneg %p44
      $region86: #{forward.3} parent=83 // pred_check_branch
        %505 = sbr.rel (%p503) target = $region88
      $region87: #{forward.3} parent=83 // pred_region
        %p506 = scmp.lt.s32.totalorder %s24, 4
        %s507 = scalar_select %p506, %s24, 4
        %s508 = smul.addr %s507, 2
        %s509 = scalar_lea.vmem %s0, %s508
      $region88: #{forward.3} parent=83 // pred_fallthru
        _
    $region84: #{forward.3} parent=5 // pred_fallthru
      _
    %p510 = scmp.le.s32.totalorder 1, %s24
    %p511 = scmp.lt.s32.totalorder %s24, 6
    %p512 = pnand %p510, %p511
    %p513 = pneg %p512
    // Predicated region
    $region89: #{forward.3} parent=5 // pred_check
      _
    $region90: #{forward.3} parent=5 // pred_check_branch
      %515 = sbr.rel (%p512) target = $region92
    $region91: #{forward.3} parent=5 // pred_region
      %s516 = ssub.s32 %s24, 1
      %p517 = scmp.lt.s32.totalorder %s29, 4
      %s518 = scalar_select %p517, %s29, 4
      %s519 = smul.addr %s518, 2
      %s520 = scalar_lea.vmem %s0, %s519
      %p521 = pneg %p50
      %p522 = pneg %p47
      %p523 = pneg %p71
      %p524 = pneg %p68
      %p525 = pneg %p92
      %p526 = pneg %p89
      %p527 = pneg %p113
      %p528 = pneg %p110
      %p529 = pneg %p134
      %p530 = pneg %p131
      %p531 = pneg %p155
      %p532 = pneg %p152
      %p533 = pneg %p176
      %p534 = pneg %p173
      %p535 = pneg %p197
      %p536 = pneg %p194
      %p537 = pneg %p218
      %p538 = pneg %p215
      %p539 = pneg %p239
      %p540 = pneg %p236
      %p541 = pneg %p260
      %p542 = pneg %p257
      %p543 = pneg %p281
      %p544 = pneg %p278
      %p545 = pneg %p302
      %p546 = pneg %p299
      %p547 = pneg %p323
      %p548 = pneg %p320
      %p549 = pneg %p344
      %p550 = pneg %p341
      %p551 = pneg %p365
      %p552 = pneg %p362
      %p553 = pneg %p386
      %p554 = pneg %p383
      %p555 = pneg %p407
      %p556 = pneg %p404
      %p557 = pneg %p433
      %p558 = pneg %p430
      %p559 = scmp.lt.s32.totalorder %s29, 4
      %s560 = scalar_select %p559, %s29, 4
      %s561 = smul.addr %s560, 2
      %s562 = scalar_lea.vmem %s18, %s561
      %p563 = scmp.lt.s32.totalorder %s29, 4
      %s564 = scalar_select %p563, %s29, 4
      %s565 = smul.addr %s564, 2
      %s566 = scalar_lea.vmem %s0, %s565
      %p567 = scmp.lt.s32.totalorder %s29, 4
      %s568 = scalar_select %p567, %s29, 4
      %s569 = smul.addr %s568, 2
      %s570 = scalar_lea.vmem %s18, %s569
      %p571 = scmp.eq.s32.totalorder %s29, 0
      // Predicated region
      $region93: #{forward.3} parent=91 // pred_check
        %p572 = pneg %p571
      $region94: #{forward.3} parent=91 // pred_check_branch
        %574 = sbr.rel (%p572) target = $region96
      $region95: #{forward.3} parent=91 // pred_region
        %v575 = vld [vmem:[%s1] sm:$0x3]
        %v576 = vld [vmem:[%s1 + $0x2] sm:$0x3]
        %vm577 = vcmask 254976
        %578 = vst.msk [vmem:[#allocation2] sm:$0x3] %vm577, %v575
        %579 = vst.msk [vmem:[#allocation2 + $0x2] sm:$0x3] %vm577, %v576
        %v580 = vld [vmem:[%s2] sm:$0xff]
        %v581 = vld [vmem:[%s2 + $0x8] sm:$0xff]
        %v582 = vld [vmem:[%s4] sm:$0xff]
        %v583 = vld [vmem:[%s4 + $0x8] sm:$0xff]
        %v584 = vld [vmem:[%s4 + $0x10] sm:$0xff]
        %v585 = vld [vmem:[%s4 + $0x18] sm:$0xff]
        %vm586 = vcmask 261120
        %v588 = vsel %vm586, %v580, 0
        %v591 = vsel %vm586, %v581, 0
        %593 = vmatprep.subr.mxu0 0.0
        %594 = vmatpush1.msra.mxu0 %v582
        %595 = vmatprep.subr.mxu0 0.0
        %596 = vmatpush1.msra.mxu0 %v583
        %597 = vmatprep.subr.mxu0 0.0
        %598 = vmatpush1.msra.mxu0 %v584
        %599 = vmatprep.subr.mxu0 0.0
        %600 = vmatpush1.msra.mxu0 %v585
        %601 = vmatprep.subr.mxu0 0.0
        %602 = vmatpush1.msra.mxu0 0.0
        %603 = vmatprep.subr.mxu0 0.0
        %604 = vmatpush1.msra.mxu0 0.0
        %605 = vmatprep.subr.mxu0 0.0
        %606 = vmatpush1.msra.mxu0 0.0
        %607 = vmatprep.subr.mxu0 0.0
        %608 = vmatpush1.msra.mxu0 0.0
        %609 = vmatprep.subr.mxu0 0.0
        %610 = vmatpush1.msra.mxu0 0.0
        %611 = vmatprep.subr.mxu0 0.0
        %612 = vmatpush1.msra.mxu0 0.0
        %613 = vmatprep.subr.mxu0 0.0
        %614 = vmatpush1.msra.mxu0 0.0
        %615 = vmatprep.subr.mxu0 0.0
        %616 = vmatpush1.msra.mxu0 0.0
        %617 = vmatprep.subr.mxu0 0.0
        %618 = vmatpush1.msra.mxu0 0.0
        %619 = vmatprep.subr.mxu0 0.0
        %620 = vmatpush1.msra.mxu0 0.0
        %621 = vmatprep.subr.mxu0 0.0
        %622 = vmatpush1.msra.mxu0 0.0
        %623 = vmatprep.subr.mxu0 0.0
        %624 = vmatpush1.msra.mxu0 0.0
        %625 = vmatprep.subr.mxu0 0.0
        %626 = vmatpush1.msra.mxu0 0.0
        %627 = vmatprep.subr.mxu0 0.0
        %628 = vmatpush1.msra.mxu0 0.0
        %629 = vmatprep.subr.mxu0 0.0
        %630 = vmatpush1.msra.mxu0 0.0
        %631 = vmatprep.subr.mxu0 0.0
        %632 = vmatpush1.msra.mxu0 0.0
        %633 = vmatprep.subr.mxu0 0.0
        %634 = vmatpush1.msra.mxu0 0.0
        %635 = vmatprep.subr.mxu0 0.0
        %636 = vmatpush1.msra.mxu0 0.0
        %637 = vmatprep.subr.mxu0 0.0
        %638 = vmatpush1.msra.mxu0 0.0
        %639 = vmatprep.subr.mxu0 0.0
        %640 = vmatpush1.msra.mxu0 0.0
        %641 = vmatprep.subr.mxu0 0.0
        %642 = vmatpush1.msra.mxu0 0.0
        %643 = vmatprep.subr.mxu0 0.0
        %644 = vmatpush1.msra.mxu0 0.0
        %645 = vmatprep.subr.mxu0 0.0
        %646 = vmatpush1.msra.mxu0 0.0
        %647 = vmatprep.subr.mxu0 0.0
        %648 = vmatpush1.msra.mxu0 0.0
        %649 = vmatprep.subr.mxu0 0.0
        %650 = vmatpush1.msra.mxu0 0.0
        %651 = vmatprep.subr.mxu0 0.0
        %652 = vmatpush1.msra.mxu0 0.0
        %653 = vmatprep.subr.mxu0 0.0
        %654 = vmatpush1.msra.mxu0 0.0
        %655 = vmatprep.subr.mxu0 0.0
        %656 = vmatpush1.msra.mxu0 0.0
        %657 = vmatprep.mubr.f32.mxu0 0.0
        %658 = vmatmul.mubr.f32.gmra.mrb[0].mxu0 %v588
        %v659 = vpop.f32.mrb[0].mxu0
        %v660 = vadd.f32 0.0, %v659
        %v661 = vpop.f32.mrb[0].mxu0
        %662 = vmatprep.mubr.f32.mxu0 0.0
        %663 = vmatmul.mubr.f32.gmra.mrb[0].mxu0 %v591
        %v664 = vpop.f32.mrb[0].mxu0
        %v665 = vadd.f32 0.0, %v664
        %v666 = vpop.f32.mrb[0].mxu0
        %667 = vdwg.mxu0
        %668 = vst [vmem:[#allocation3] sm:$0xff] %v660
        %669 = vst [vmem:[#allocation3 + $0x8] sm:$0xff] %v665
      $region96: #{forward.3} parent=91 // pred_fallthru
        _
      %v670 = vld [vmem:[#allocation2] sm:$0x3]
      %s671 = scalar_lea.vmem [#allocation2], 2
      %v672 = vld [vmem:[%s671] sm:$0x3]
      %v673 = vadd.f32 %v670, %v672
      %v674 = vld [vmem:[%s3] sm:$0xff]
      %v675 = vld [vmem:[%s3 + $0x8] sm:$0xff]
      %v676 = vld [vmem:[%s3 + $0x10] sm:$0xff]
      %v677 = vld [vmem:[%s3 + $0x18] sm:$0xff]
      %v678 = vld [vmem:[%s5] sm:$0x1]
      %v680 = vlaneseq
      %v681 = vshrl.u32 %v680, 7
      %v682 = vsub.s32 0, %v681
      %v683 = vrot.slane %v678, %v682
      %vm685 = vcmask 261120
      %v687 = vsel %vm685, %v673, 0
      %689 = vmatprep.subr.mxu0 0.0
      %690 = vmatpush1.msra.mxu0 %v674
      %691 = vmatprep.subr.mxu0 0.0
      %692 = vmatpush1.msra.mxu0 %v675
      %693 = vmatprep.subr.mxu0 0.0
      %694 = vmatpush1.msra.mxu0 %v676
      %695 = vmatprep.subr.mxu0 0.0
      %696 = vmatpush1.msra.mxu0 %v677
      %697 = vmatprep.subr.mxu0 0.0
      %698 = vmatpush1.msra.mxu0 0.0
      %699 = vmatprep.subr.mxu0 0.0
      %700 = vmatpush1.msra.mxu0 0.0
      %701 = vmatprep.subr.mxu0 0.0
      %702 = vmatpush1.msra.mxu0 0.0
      %703 = vmatprep.subr.mxu0 0.0
      %704 = vmatpush1.msra.mxu0 0.0
      %705 = vmatprep.subr.mxu0 0.0
      %706 = vmatpush1.msra.mxu0 0.0
      %707 = vmatprep.subr.mxu0 0.0
      %708 = vmatpush1.msra.mxu0 0.0
      %709 = vmatprep.subr.mxu0 0.0
      %710 = vmatpush1.msra.mxu0 0.0
      %711 = vmatprep.subr.mxu0 0.0
      %712 = vmatpush1.msra.mxu0 0.0
      %713 = vmatprep.subr.mxu0 0.0
      %714 = vmatpush1.msra.mxu0 0.0
      %715 = vmatprep.subr.mxu0 0.0
      %716 = vmatpush1.msra.mxu0 0.0
      %717 = vmatprep.subr.mxu0 0.0
      %718 = vmatpush1.msra.mxu0 0.0
      %719 = vmatprep.subr.mxu0 0.0
      %720 = vmatpush1.msra.mxu0 0.0
      %721 = vmatprep.subr.mxu0 0.0
      %722 = vmatpush1.msra.mxu0 0.0
      %723 = vmatprep.subr.mxu0 0.0
      %724 = vmatpush1.msra.mxu0 0.0
      %725 = vmatprep.subr.mxu0 0.0
      %726 = vmatpush1.msra.mxu0 0.0
      %727 = vmatprep.subr.mxu0 0.0
      %728 = vmatpush1.msra.mxu0 0.0
      %729 = vmatprep.subr.mxu0 0.0
      %730 = vmatpush1.msra.mxu0 0.0
      %731 = vmatprep.subr.mxu0 0.0
      %732 = vmatpush1.msra.mxu0 0.0
      %733 = vmatprep.subr.mxu0 0.0
      %734 = vmatpush1.msra.mxu0 0.0
      %735 = vmatprep.subr.mxu0 0.0
      %736 = vmatpush1.msra.mxu0 0.0
      %737 = vmatprep.subr.mxu0 0.0
      %738 = vmatpush1.msra.mxu0 0.0
      %739 = vmatprep.subr.mxu0 0.0
      %740 = vmatpush1.msra.mxu0 0.0
      %741 = vmatprep.subr.mxu0 0.0
      %742 = vmatpush1.msra.mxu0 0.0
      %743 = vmatprep.subr.mxu0 0.0
      %744 = vmatpush1.msra.mxu0 0.0
      %745 = vmatprep.subr.mxu0 0.0
      %746 = vmatpush1.msra.mxu0 0.0
      %747 = vmatprep.subr.mxu0 0.0
      %748 = vmatpush1.msra.mxu0 0.0
      %749 = vmatprep.subr.mxu0 0.0
      %750 = vmatpush1.msra.mxu0 0.0
      %751 = vmatprep.subr.mxu0 0.0
      %752 = vmatpush1.msra.mxu0 0.0
      %753 = vmatprep.mubr.f32.mxu0 0.0
      %754 = vmatmul.mubr.f32.gmra.mrb[0].mxu0 %v687
      %v755 = vpop.f32.mrb[0].mxu0
      %v756 = vadd.f32 %v683, %v755
      %v757 = vpop.f32.mrb[0].mxu0
      %758 = vdwg.mxu0
      %v759 = vlaneseq
      %v760 = vshrl.u32 %v759, 7
      %v761 = vadd.s32 %v760, 8
      %v762 = vlaneseq
      %v763 = vand.u32 %v762, 127
      %v764 = vmul.u32 %v763, 8
      %v765 = vsub.s32 %v760, %v764
      %v766 = vsub.s32 %v761, %v764
      %vm767 = vcmp.ge.s32.totalorder %v765, 0
      %vm768 = vcmp.ge.s32.totalorder %v766, 0
      %vm769 = vcmp.lt.s32.totalorder %v765, 8
      %vm770 = vcmp.lt.s32.totalorder %v766, 8
      %vm771 = vmand %vm767, %vm769
      %vm772 = vmand %vm768, %vm770
      %v773 = vsel %vm771, 1.0, 0.0
      %v774 = vsel %vm772, 1.0, 0.0
      %vm775 = vcmask 15360
      %v777 = vsel %vm775, %v773, 0
      %v780 = vsel %vm775, %v774, 0
      %vm782 = vcmask 1041408
      %v784 = vsel %vm782, %v756, 0
      %786 = vmatprep.subr.mxu0 0.0
      %787 = vmatpush1.msra.mxu0 %v784
      %788 = vmatprep.subr.mxu0 0.0
      %789 = vmatpush1.msra.mxu0 0.0
      %790 = vmatprep.subr.mxu0 0.0
      %791 = vmatpush1.msra.mxu0 0.0
      %792 = vmatprep.subr.mxu0 0.0
      %793 = vmatpush1.msra.mxu0 0.0
      %794 = vmatprep.subr.mxu0 0.0
      %795 = vmatpush1.msra.mxu0 0.0
      %796 = vmatprep.subr.mxu0 0.0
      %797 = vmatpush1.msra.mxu0 0.0
      %798 = vmatprep.subr.mxu0 0.0
      %799 = vmatpush1.msra.mxu0 0.0
      %800 = vmatprep.subr.mxu0 0.0
      %801 = vmatpush1.msra.mxu0 0.0
      %802 = vmatprep.subr.mxu0 0.0
      %803 = vmatpush1.msra.mxu0 0.0
      %804 = vmatprep.subr.mxu0 0.0
      %805 = vmatpush1.msra.mxu0 0.0
      %806 = vmatprep.subr.mxu0 0.0
      %807 = vmatpush1.msra.mxu0 0.0
      %808 = vmatprep.subr.mxu0 0.0
      %809 = vmatpush1.msra.mxu0 0.0
      %810 = vmatprep.subr.mxu0 0.0
      %811 = vmatpush1.msra.mxu0 0.0
      %812 = vmatprep.subr.mxu0 0.0
      %813 = vmatpush1.msra.mxu0 0.0
      %814 = vmatprep.subr.mxu0 0.0
      %815 = vmatpush1.msra.mxu0 0.0
      %816 = vmatprep.subr.mxu0 0.0
      %817 = vmatpush1.msra.mxu0 0.0
      %818 = vmatprep.subr.mxu0 0.0
      %819 = vmatpush1.msra.mxu0 0.0
      %820 = vmatprep.subr.mxu0 0.0
      %821 = vmatpush1.msra.mxu0 0.0
      %822 = vmatprep.subr.mxu0 0.0
      %823 = vmatpush1.msra.mxu0 0.0
      %824 = vmatprep.subr.mxu0 0.0
      %825 = vmatpush1.msra.mxu0 0.0
      %826 = vmatprep.subr.mxu0 0.0
      %827 = vmatpush1.msra.mxu0 0.0
      %828 = vmatprep.subr.mxu0 0.0
      %829 = vmatpush1.msra.mxu0 0.0
      %830 = vmatprep.subr.mxu0 0.0
      %831 = vmatpush1.msra.mxu0 0.0
      %832 = vmatprep.subr.mxu0 0.0
      %833 = vmatpush1.msra.mxu0 0.0
      %834 = vmatprep.subr.mxu0 0.0
      %835 = vmatpush1.msra.mxu0 0.0
      %836 = vmatprep.subr.mxu0 0.0
      %837 = vmatpush1.msra.mxu0 0.0
      %838 = vmatprep.subr.mxu0 0.0
      %839 = vmatpush1.msra.mxu0 0.0
      %840 = vmatprep.subr.mxu0 0.0
      %841 = vmatpush1.msra.mxu0 0.0
      %842 = vmatprep.subr.mxu0 0.0
      %843 = vmatpush1.msra.mxu0 0.0
      %844 = vmatprep.subr.mxu0 0.0
      %845 = vmatpush1.msra.mxu0 0.0
      %846 = vmatprep.subr.mxu0 0.0
      %847 = vmatpush1.msra.mxu0 0.0
      %848 = vmatprep.subr.mxu0 0.0
      %849 = vmatpush1.msra.mxu0 0.0
      %850 = vmatprep.mubr.f32.mxu0 0.0
      %851 = vmatmul.mubr.f32.gmra.mrb[0].mxu0 %v777
      %v852 = vpop.f32.mrb[0].mxu0
      %v853 = vadd.f32 0.0, %v852
      %v854 = vpop.f32.mrb[0].mxu0
      %855 = vmatprep.mubr.f32.mxu0 0.0
      %856 = vmatmul.mubr.f32.gmra.mrb[0].mxu0 %v780
      %v857 = vpop.f32.mrb[0].mxu0
      %v858 = vadd.f32 0.0, %v857
      %v859 = vpop.f32.mrb[0].mxu0
      %860 = vdwg.mxu0
      %v861 = vld [vmem:[#allocation3] sm:$0xff]
      %v862 = vld [vmem:[#allocation3 + $0x8] sm:$0xff]
      %v863 = vadd.f32 %v861, %v853
      %v864 = vadd.f32 %v862, %v858
      %v865 = vtanh.pop %v863
      %v866 = vtanh.pop %v864
      %v867 = vld [vmem:[%s6] sm:$0xff]
      %v868 = vld [vmem:[%s6 + $0x8] sm:$0xff]
      %v869 = vld [vmem:[%s6 + $0x10] sm:$0xff]
      %v870 = vld [vmem:[%s6 + $0x18] sm:$0xff]
      %v871 = vld [vmem:[%s6 + $0x20] sm:$0xff]
      %v872 = vld [vmem:[%s6 + $0x28] sm:$0xff]
      %v873 = vld [vmem:[%s6 + $0x30] sm:$0xff]
      %v874 = vld [vmem:[%s6 + $0x38] sm:$0xff]
      %v875 = vld [vmem:[%s6 + $0x40] sm:$0xff]
      %v876 = vld [vmem:[%s6 + $0x48] sm:$0xff]
      %v877 = vld [vmem:[%s6 + $0x50] sm:$0xff]
      %v878 = vld [vmem:[%s6 + $0x58] sm:$0xff]
      %v879 = vld [vmem:[%s6 + $0x60] sm:$0xff]
      %v880 = vld [vmem:[%s6 + $0x68] sm:$0xff]
      %v881 = vld [vmem:[%s6 + $0x70] sm:$0xff]
      %v882 = vld [vmem:[%s6 + $0x78] sm:$0xff]
      %883 = vmatprep.subr.mxu0 0.0
      %884 = vmatpush1.msra.mxu0 %v867
      %885 = vmatprep.subr.mxu0 0.0
      %886 = vmatpush1.msra.mxu0 %v868
      %887 = vmatprep.subr.mxu0 0.0
      %888 = vmatpush1.msra.mxu0 %v869
      %889 = vmatprep.subr.mxu0 0.0
      %890 = vmatpush1.msra.mxu0 %v870
      %891 = vmatprep.subr.mxu0 0.0
      %892 = vmatpush1.msra.mxu0 %v871
      %893 = vmatprep.subr.mxu0 0.0
      %894 = vmatpush1.msra.mxu0 %v872
      %895 = vmatprep.subr.mxu0 0.0
      %896 = vmatpush1.msra.mxu0 %v873
      %897 = vmatprep.subr.mxu0 0.0
      %898 = vmatpush1.msra.mxu0 %v874
      %899 = vmatprep.subr.mxu0 0.0
      %900 = vmatpush1.msra.mxu0 %v875
      %901 = vmatprep.subr.mxu0 0.0
      %902 = vmatpush1.msra.mxu0 %v876
      %903 = vmatprep.subr.mxu0 0.0
      %904 = vmatpush1.msra.mxu0 %v877
      %905 = vmatprep.subr.mxu0 0.0
      %906 = vmatpush1.msra.mxu0 %v878
      %907 = vmatprep.subr.mxu0 0.0
      %908 = vmatpush1.msra.mxu0 %v879
      %909 = vmatprep.subr.mxu0 0.0
      %910 = vmatpush1.msra.mxu0 %v880
      %911 = vmatprep.subr.mxu0 0.0
      %912 = vmatpush1.msra.mxu0 %v881
      %913 = vmatprep.subr.mxu0 0.0
      %914 = vmatpush1.msra.mxu0 %v882
      %915 = vmatprep.subr.mxu0 0.0
      %916 = vmatpush1.msra.mxu0 0.0
      %917 = vmatprep.subr.mxu0 0.0
      %918 = vmatpush1.msra.mxu0 0.0
      %919 = vmatprep.subr.mxu0 0.0
      %920 = vmatpush1.msra.mxu0 0.0
      %921 = vmatprep.subr.mxu0 0.0
      %922 = vmatpush1.msra.mxu0 0.0
      %923 = vmatprep.subr.mxu0 0.0
      %924 = vmatpush1.msra.mxu0 0.0
      %925 = vmatprep.subr.mxu0 0.0
      %926 = vmatpush1.msra.mxu0 0.0
      %927 = vmatprep.subr.mxu0 0.0
      %928 = vmatpush1.msra.mxu0 0.0
      %929 = vmatprep.subr.mxu0 0.0
      %930 = vmatpush1.msra.mxu0 0.0
      %931 = vmatprep.subr.mxu0 0.0
      %932 = vmatpush1.msra.mxu0 0.0
      %933 = vmatprep.subr.mxu0 0.0
      %934 = vmatpush1.msra.mxu0 0.0
      %935 = vmatprep.subr.mxu0 0.0
      %936 = vmatpush1.msra.mxu0 0.0
      %937 = vmatprep.subr.mxu0 0.0
      %938 = vmatpush1.msra.mxu0 0.0
      %939 = vmatprep.subr.mxu0 0.0
      %940 = vmatpush1.msra.mxu0 0.0
      %941 = vmatprep.subr.mxu0 0.0
      %942 = vmatpush1.msra.mxu0 0.0
      %943 = vmatprep.subr.mxu0 0.0
      %944 = vmatpush1.msra.mxu0 0.0
      %945 = vmatprep.subr.mxu0 0.0
      %946 = vmatpush1.msra.mxu0 0.0
      %947 = vmatprep.mubr.f32.mxu0 0.0
      %948 = vmatmul.mubr.f32.gmra.mrb[0].mxu0 %v865
      %v949 = vpop.f32.mrb[0].mxu0
      %v950 = vadd.f32 0.0, %v949
      %v951 = vpop.f32.mrb[0].mxu0
      %952 = vmatprep.mubr.f32.mxu0 0.0
      %953 = vmatmul.mubr.f32.gmra.mrb[0].mxu0 %v866
      %v954 = vpop.f32.mrb[0].mxu0
      %v955 = vadd.f32 0.0, %v954
      %v956 = vpop.f32.mrb[0].mxu0
      %957 = vdwg.mxu0
      %vm958 = vcmask 31744
      %v959 = vsel %vm958, %v950, -inf
      %v960 = vrot.slane %v959, 4
      %v961 = vmax.f32 %v959, %v960
      %v962 = vrot.slane %v961, 2
      %v963 = vmax.f32 %v961, %v962
      %v964 = vrot.slane %v963, 1
      %v965 = vmax.f32 %v963, %v964
      %v966 = vsel %vm958, %v955, -inf
      %v967 = vrot.slane %v966, 4
      %v968 = vmax.f32 %v966, %v967
      %v969 = vrot.slane %v968, 2
      %v970 = vmax.f32 %v968, %v969
      %v971 = vrot.slane %v970, 1
      %v972 = vmax.f32 %v970, %v971
      %v973 = vsub.f32 %v950, %v965
      %v974 = vsub.f32 %v955, %v972
      %v975 = vmul.f32 %v973, 1.442695
      %v976 = vpow.pop %v975
      %v977 = vmul.f32 %v974, 1.442695
      %v978 = vpow.pop %v977
      %v979 = vsel %vm958, %v976, 0.0
      %v980 = vrot.slane %v979, 4
      %v981 = vadd.f32 %v979, %v980
      %v982 = vrot.slane %v981, 2
      %v983 = vadd.f32 %v981, %v982
      %v984 = vrot.slane %v983, 1
      %v985 = vadd.f32 %v983, %v984
      %v986 = vsel %vm958, %v978, 0.0
      %v987 = vrot.slane %v986, 4
      %v988 = vadd.f32 %v986, %v987
      %v989 = vrot.slane %v988, 2
      %v990 = vadd.f32 %v988, %v989
      %v991 = vrot.slane %v990, 1
      %v992 = vadd.f32 %v990, %v991
      %v993 = vrcp.pop %v985
      %v994 = vrcp.pop %v992
      %v995 = vmul.f32 %v976, %v993
      %v996 = vmul.f32 %v978, %v994
      %v997 = vld [vmem:[%s2] sm:$0xff]
      %v998 = vld [vmem:[%s2 + $0x8] sm:$0xff]
      %1000 = vset.pattern.permute.xlu0 0
      %1001 = vperm.xlu0 %1000, %v995
      %v1002 = vpop.permute.xlu0 %1001
      %1005 = vset.pattern.permute.xlu0 0
      %1006 = vperm.xlu0 %1005, %v996
      %v1007 = vpop.permute.xlu0 %1006
      %v1009 = vmul.f32 %v1002, %v997
      %v1010 = vmul.f32 %v1007, %v998
      %v1011 = vsel %vm685, %v1009, 0.0
      %v1012 = vrot.slane %v1011, 4
      %v1013 = vadd.f32 %v1011, %v1012
      %v1014 = vrot.slane %v1013, 2
      %v1015 = vadd.f32 %v1013, %v1014
      %v1016 = vrot.slane %v1015, 1
      %v1017 = vadd.f32 %v1015, %v1016
      %v1018 = vsel %vm685, %v1010, 0.0
      %v1019 = vrot.slane %v1018, 4
      %v1020 = vadd.f32 %v1018, %v1019
      %v1021 = vrot.slane %v1020, 2
      %v1022 = vadd.f32 %v1020, %v1021
      %v1023 = vrot.slane %v1022, 1
      %v1024 = vadd.f32 %v1022, %v1023
      %1025 = vset.pattern.permute.xlu0 1
      %1026 = vperm.xlu0 %1025, %v995
      %v1027 = vpop.permute.xlu0 %1026
      %1029 = vset.pattern.permute.xlu0 1
      %1030 = vperm.xlu0 %1029, %v996
      %v1031 = vpop.permute.xlu0 %1030
      %v1033 = vmul.f32 %v1027, %v997
      %v1034 = vmul.f32 %v1031, %v998
      %v1035 = vsel %vm685, %v1033, 0.0
      %v1036 = vrot.slane %v1035, 4
      %v1037 = vadd.f32 %v1035, %v1036
      %v1038 = vrot.slane %v1037, 2
      %v1039 = vadd.f32 %v1037, %v1038
      %v1040 = vrot.slane %v1039, 1
      %v1041 = vadd.f32 %v1039, %v1040
      %v1042 = vsel %vm685, %v1034, 0.0
      %v1043 = vrot.slane %v1042, 4
      %v1044 = vadd.f32 %v1042, %v1043
      %v1045 = vrot.slane %v1044, 2
      %v1046 = vadd.f32 %v1044, %v1045
      %v1047 = vrot.slane %v1046, 1
      %v1048 = vadd.f32 %v1046, %v1047
      %1049 = vset.pattern.permute.xlu0 2
      %1050 = vperm.xlu0 %1049, %v995
      %v1051 = vpop.permute.xlu0 %1050
      %1053 = vset.pattern.permute.xlu0 2
      %1054 = vperm.xlu0 %1053, %v996
      %v1055 = vpop.permute.xlu0 %1054
      %v1057 = vmul.f32 %v1051, %v997
      %v1058 = vmul.f32 %v1055, %v998
      %v1059 = vsel %vm685, %v1057, 0.0
      %v1060 = vrot.slane %v1059, 4
      %v1061 = vadd.f32 %v1059, %v1060
      %v1062 = vrot.slane %v1061, 2
      %v1063 = vadd.f32 %v1061, %v1062
      %v1064 = vrot.slane %v1063, 1
      %v1065 = vadd.f32 %v1063, %v1064
      %v1066 = vsel %vm685, %v1058, 0.0
      %v1067 = vrot.slane %v1066, 4
      %v1068 = vadd.f32 %v1066, %v1067
      %v1069 = vrot.slane %v1068, 2
      %v1070 = vadd.f32 %v1068, %v1069
      %v1071 = vrot.slane %v1070, 1
      %v1072 = vadd.f32 %v1070, %v1071
      %1073 = vset.pattern.permute.xlu0 3
      %1074 = vperm.xlu0 %1073, %v995
      %v1075 = vpop.permute.xlu0 %1074
      %1077 = vset.pattern.permute.xlu0 3
      %1078 = vperm.xlu0 %1077, %v996
      %v1079 = vpop.permute.xlu0 %1078
      %v1081 = vmul.f32 %v1075, %v997
      %v1082 = vmul.f32 %v1079, %v998
      %v1083 = vsel %vm685, %v1081, 0.0
      %v1084 = vrot.slane %v1083, 4
      %v1085 = vadd.f32 %v1083, %v1084
      %v1086 = vrot.slane %v1085, 2
      %v1087 = vadd.f32 %v1085, %v1086
      %v1088 = vrot.slane %v1087, 1
      %v1089 = vadd.f32 %v1087, %v1088
      %v1090 = vsel %vm685, %v1082, 0.0
      %v1091 = vrot.slane %v1090, 4
      %v1092 = vadd.f32 %v1090, %v1091
      %v1093 = vrot.slane %v1092, 2
      %v1094 = vadd.f32 %v1092, %v1093
      %v1095 = vrot.slane %v1094, 1
      %v1096 = vadd.f32 %v1094, %v1095
      %vm1099 = vcmask 1041409
      %v1100 = vsel %vm1099, %v1024, %v1017
      %v1104 = vsel %vm1099, %v1048, %v1041
      %1105 = vrot.lane.b32.xlu0 %v1104, 32
      %v1106 = vpop.permute.xlu0 %1105
      %v1110 = vsel %vm1099, %v1072, %v1065
      %1111 = vrot.lane.b32.xlu0 %v1110, 64
      %v1112 = vpop.permute.xlu0 %1111
      %v1116 = vsel %vm1099, %v1096, %v1089
      %1117 = vrot.lane.b32.xlu0 %v1116, 96
      %v1118 = vpop.permute.xlu0 %1117
      %v1120 = vsel %vm685, %v1100, %v1106
      %vm1121 = vcmask 523264
      %v1122 = vsel %vm1121, %v1120, %v1112
      %vm1123 = vcmask 785408
      %v1124 = vsel %vm1123, %v1122, %v1118
      %v1125 = vld [vmem:[%s7] sm:$0xff]
      %v1126 = vld [vmem:[%s7 + $0x8] sm:$0xff]
      %v1127 = vld [vmem:[%s7 + $0x10] sm:$0xff]
      %v1128 = vld [vmem:[%s7 + $0x18] sm:$0xff]
      %v1129 = vld [vmem:[%s7 + $0x20] sm:$0xff]
      %v1130 = vld [vmem:[%s7 + $0x28] sm:$0xff]
      %v1131 = vld [vmem:[%s7 + $0x30] sm:$0xff]
      %v1132 = vld [vmem:[%s7 + $0x38] sm:$0xff]
      %v1133 = vld [vmem:[%s7 + $0x40] sm:$0xff]
      %v1134 = vld [vmem:[%s7 + $0x48] sm:$0xff]
      %v1135 = vld [vmem:[%s7 + $0x50] sm:$0xff]
      %v1136 = vld [vmem:[%s7 + $0x58] sm:$0xff]
      %v1137 = vld [vmem:[%s7 + $0x60] sm:$0xff]
      %v1138 = vld [vmem:[%s7 + $0x68] sm:$0xff]
      %v1139 = vld [vmem:[%s7 + $0x70] sm:$0xff]
      %v1140 = vld [vmem:[%s7 + $0x78] sm:$0xff]
      %v1141 = vld [vmem:[%s8] sm:$0x1]
      %v1143 = vlaneseq
      %v1144 = vshrl.u32 %v1143, 7
      %v1145 = vsub.s32 0, %v1144
      %v1146 = vrot.slane %v1141, %v1145
      %1148 = vmatprep.subr.mxu0 0.0
      %1149 = vmatpush1.msra.mxu0 %v1125
      %1150 = vmatprep.subr.mxu0 0.0
      %1151 = vmatpush1.msra.mxu0 %v1126
      %1152 = vmatprep.subr.mxu0 0.0
      %1153 = vmatpush1.msra.mxu0 %v1127
      %1154 = vmatprep.subr.mxu0 0.0
      %1155 = vmatpush1.msra.mxu0 %v1128
      %1156 = vmatprep.subr.mxu0 0.0
      %1157 = vmatpush1.msra.mxu0 %v1129
      %1158 = vmatprep.subr.mxu0 0.0
      %1159 = vmatpush1.msra.mxu0 %v1130
      %1160 = vmatprep.subr.mxu0 0.0
      %1161 = vmatpush1.msra.mxu0 %v1131
      %1162 = vmatprep.subr.mxu0 0.0
      %1163 = vmatpush1.msra.mxu0 %v1132
      %1164 = vmatprep.subr.mxu0 0.0
      %1165 = vmatpush1.msra.mxu0 %v1133
      %1166 = vmatprep.subr.mxu0 0.0
      %1167 = vmatpush1.msra.mxu0 %v1134
      %1168 = vmatprep.subr.mxu0 0.0
      %1169 = vmatpush1.msra.mxu0 %v1135
      %1170 = vmatprep.subr.mxu0 0.0
      %1171 = vmatpush1.msra.mxu0 %v1136
      %1172 = vmatprep.subr.mxu0 0.0
      %1173 = vmatpush1.msra.mxu0 %v1137
      %1174 = vmatprep.subr.mxu0 0.0
      %1175 = vmatpush1.msra.mxu0 %v1138
      %1176 = vmatprep.subr.mxu0 0.0
      %1177 = vmatpush1.msra.mxu0 %v1139
      %1178 = vmatprep.subr.mxu0 0.0
      %1179 = vmatpush1.msra.mxu0 %v1140
      %1180 = vmatprep.subr.mxu0 0.0
      %1181 = vmatpush1.msra.mxu0 0.0
      %1182 = vmatprep.subr.mxu0 0.0
      %1183 = vmatpush1.msra.mxu0 0.0
      %1184 = vmatprep.subr.mxu0 0.0
      %1185 = vmatpush1.msra.mxu0 0.0
      %1186 = vmatprep.subr.mxu0 0.0
      %1187 = vmatpush1.msra.mxu0 0.0
      %1188 = vmatprep.subr.mxu0 0.0
      %1189 = vmatpush1.msra.mxu0 0.0
      %1190 = vmatprep.subr.mxu0 0.0
      %1191 = vmatpush1.msra.mxu0 0.0
      %1192 = vmatprep.subr.mxu0 0.0
      %1193 = vmatpush1.msra.mxu0 0.0
      %1194 = vmatprep.subr.mxu0 0.0
      %1195 = vmatpush1.msra.mxu0 0.0
      %1196 = vmatprep.subr.mxu0 0.0
      %1197 = vmatpush1.msra.mxu0 0.0
      %1198 = vmatprep.subr.mxu0 0.0
      %1199 = vmatpush1.msra.mxu0 0.0
      %1200 = vmatprep.subr.mxu0 0.0
      %1201 = vmatpush1.msra.mxu0 0.0
      %1202 = vmatprep.subr.mxu0 0.0
      %1203 = vmatpush1.msra.mxu0 0.0
      %1204 = vmatprep.subr.mxu0 0.0
      %1205 = vmatpush1.msra.mxu0 0.0
      %1206 = vmatprep.subr.mxu0 0.0
      %1207 = vmatpush1.msra.mxu0 0.0
      %1208 = vmatprep.subr.mxu0 0.0
      %1209 = vmatpush1.msra.mxu0 0.0
      %1210 = vmatprep.subr.mxu0 0.0
      %1211 = vmatpush1.msra.mxu0 0.0
      %1212 = vmatprep.mubr.f32.mxu0 0.0
      %1213 = vmatmul.mubr.f32.gmra.mrb[0].mxu0 %v1124
      %v1214 = vpop.f32.mrb[0].mxu0
      %v1215 = vadd.f32 %v1146, %v1214
      %v1216 = vpop.f32.mrb[0].mxu0
      %1217 = vdwg.mxu0
      %v1218 = vtanh.pop %v1215
      %v1219 = vld [vmem:[%s566] sm:$0x3]
      %v1220 = vld [vmem:[%s9] sm:$0xff]
      %v1221 = vld [vmem:[%s9 + $0x8] sm:$0xff]
      %v1222 = vld [vmem:[%s9 + $0x10] sm:$0xff]
      %v1223 = vld [vmem:[%s9 + $0x18] sm:$0xff]
      %v1225 = vsel %vm685, %v1218, 0
      %1227 = vmatprep.subr.mxu0 0.0
      %1228 = vmatpush1.msra.mxu0 %v1220
      %1229 = vmatprep.subr.mxu0 0.0
      %1230 = vmatpush1.msra.mxu0 %v1221
      %1231 = vmatprep.subr.mxu0 0.0
      %1232 = vmatpush1.msra.mxu0 %v1222
      %1233 = vmatprep.subr.mxu0 0.0
      %1234 = vmatpush1.msra.mxu0 %v1223
      %1235 = vmatprep.subr.mxu0 0.0
      %1236 = vmatpush1.msra.mxu0 0.0
      %1237 = vmatprep.subr.mxu0 0.0
      %1238 = vmatpush1.msra.mxu0 0.0
      %1239 = vmatprep.subr.mxu0 0.0
      %1240 = vmatpush1.msra.mxu0 0.0
      %1241 = vmatprep.subr.mxu0 0.0
      %1242 = vmatpush1.msra.mxu0 0.0
      %1243 = vmatprep.subr.mxu0 0.0
      %1244 = vmatpush1.msra.mxu0 0.0
      %1245 = vmatprep.subr.mxu0 0.0
      %1246 = vmatpush1.msra.mxu0 0.0
      %1247 = vmatprep.subr.mxu0 0.0
      %1248 = vmatpush1.msra.mxu0 0.0
      %1249 = vmatprep.subr.mxu0 0.0
      %1250 = vmatpush1.msra.mxu0 0.0
      %1251 = vmatprep.subr.mxu0 0.0
      %1252 = vmatpush1.msra.mxu0 0.0
      %1253 = vmatprep.subr.mxu0 0.0
      %1254 = vmatpush1.msra.mxu0 0.0
      %1255 = vmatprep.subr.mxu0 0.0
      %1256 = vmatpush1.msra.mxu0 0.0
      %1257 = vmatprep.subr.mxu0 0.0
      %1258 = vmatpush1.msra.mxu0 0.0
      %1259 = vmatprep.subr.mxu0 0.0
      %1260 = vmatpush1.msra.mxu0 0.0
      %1261 = vmatprep.subr.mxu0 0.0
      %1262 = vmatpush1.msra.mxu0 0.0
      %1263 = vmatprep.subr.mxu0 0.0
      %1264 = vmatpush1.msra.mxu0 0.0
      %1265 = vmatprep.subr.mxu0 0.0
      %1266 = vmatpush1.msra.mxu0 0.0
      %1267 = vmatprep.subr.mxu0 0.0
      %1268 = vmatpush1.msra.mxu0 0.0
      %1269 = vmatprep.subr.mxu0 0.0
      %1270 = vmatpush1.msra.mxu0 0.0
      %1271 = vmatprep.subr.mxu0 0.0
      %1272 = vmatpush1.msra.mxu0 0.0
      %1273 = vmatprep.subr.mxu0 0.0
      %1274 = vmatpush1.msra.mxu0 0.0
      %1275 = vmatprep.subr.mxu0 0.0
      %1276 = vmatpush1.msra.mxu0 0.0
      %1277 = vmatprep.subr.mxu0 0.0
      %1278 = vmatpush1.msra.mxu0 0.0
      %1279 = vmatprep.subr.mxu0 0.0
      %1280 = vmatpush1.msra.mxu0 0.0
      %1281 = vmatprep.subr.mxu0 0.0
      %1282 = vmatpush1.msra.mxu0 0.0
      %1283 = vmatprep.subr.mxu0 0.0
      %1284 = vmatpush1.msra.mxu0 0.0
      %1285 = vmatprep.subr.mxu0 0.0
      %1286 = vmatpush1.msra.mxu0 0.0
      %1287 = vmatprep.subr.mxu0 0.0
      %1288 = vmatpush1.msra.mxu0 0.0
      %1289 = vmatprep.subr.mxu0 0.0
      %1290 = vmatpush1.msra.mxu0 0.0
      %1291 = vmatprep.mubr.f32.mxu0 0.0
      %1292 = vmatmul.mubr.f32.gmra.mrb[0].mxu0 %v1225
      %v1293 = vpop.f32.mrb[0].mxu0
      %v1294 = vadd.f32 0.0, %v1293
      %v1295 = vpop.f32.mrb[0].mxu0
      %1296 = vdwg.mxu0
      %v1297 = vadd.f32 %v1219, %v1294
      %v1298 = vld [vmem:[%s10] sm:$0xff]
      %v1299 = vld [vmem:[%s10 + $0x8] sm:$0xff]
      %v1300 = vld [vmem:[%s10 + $0x10] sm:$0xff]
      %v1301 = vld [vmem:[%s10 + $0x18] sm:$0xff]
      %v1302 = vld [vmem:[%s11] sm:$0x1]
      %v1304 = vlaneseq
      %v1305 = vshrl.u32 %v1304, 7
      %v1306 = vsub.s32 0, %v1305
      %v1307 = vrot.slane %v1302, %v1306
      %v1310 = vsel %vm685, %v670, 0
      %1312 = vmatprep.subr.mxu0 0.0
      %1313 = vmatpush1.msra.mxu0 %v1298
      %1314 = vmatprep.subr.mxu0 0.0
      %1315 = vmatpush1.msra.mxu0 %v1299
      %1316 = vmatprep.subr.mxu0 0.0
      %1317 = vmatpush1.msra.mxu0 %v1300
      %1318 = vmatprep.subr.mxu0 0.0
      %1319 = vmatpush1.msra.mxu0 %v1301
      %1320 = vmatprep.subr.mxu0 0.0
      %1321 = vmatpush1.msra.mxu0 0.0
      %1322 = vmatprep.subr.mxu0 0.0
      %1323 = vmatpush1.msra.mxu0 0.0
      %1324 = vmatprep.subr.mxu0 0.0
      %1325 = vmatpush1.msra.mxu0 0.0
      %1326 = vmatprep.subr.mxu0 0.0
      %1327 = vmatpush1.msra.mxu0 0.0
      %1328 = vmatprep.subr.mxu0 0.0
      %1329 = vmatpush1.msra.mxu0 0.0
      %1330 = vmatprep.subr.mxu0 0.0
      %1331 = vmatpush1.msra.mxu0 0.0
      %1332 = vmatprep.subr.mxu0 0.0
      %1333 = vmatpush1.msra.mxu0 0.0
      %1334 = vmatprep.subr.mxu0 0.0
      %1335 = vmatpush1.msra.mxu0 0.0
      %1336 = vmatprep.subr.mxu0 0.0
      %1337 = vmatpush1.msra.mxu0 0.0
      %1338 = vmatprep.subr.mxu0 0.0
      %1339 = vmatpush1.msra.mxu0 0.0
      %1340 = vmatprep.subr.mxu0 0.0
      %1341 = vmatpush1.msra.mxu0 0.0
      %1342 = vmatprep.subr.mxu0 0.0
      %1343 = vmatpush1.msra.mxu0 0.0
      %1344 = vmatprep.subr.mxu0 0.0
      %1345 = vmatpush1.msra.mxu0 0.0
      %1346 = vmatprep.subr.mxu0 0.0
      %1347 = vmatpush1.msra.mxu0 0.0
      %1348 = vmatprep.subr.mxu0 0.0
      %1349 = vmatpush1.msra.mxu0 0.0
      %1350 = vmatprep.subr.mxu0 0.0
      %1351 = vmatpush1.msra.mxu0 0.0
      %1352 = vmatprep.subr.mxu0 0.0
      %1353 = vmatpush1.msra.mxu0 0.0
      %1354 = vmatprep.subr.mxu0 0.0
      %1355 = vmatpush1.msra.mxu0 0.0
      %1356 = vmatprep.subr.mxu0 0.0
      %1357 = vmatpush1.msra.mxu0 0.0
      %1358 = vmatprep.subr.mxu0 0.0
      %1359 = vmatpush1.msra.mxu0 0.0
      %1360 = vmatprep.subr.mxu0 0.0
      %1361 = vmatpush1.msra.mxu0 0.0
      %1362 = vmatprep.subr.mxu0 0.0
      %1363 = vmatpush1.msra.mxu0 0.0
      %1364 = vmatprep.subr.mxu0 0.0
      %1365 = vmatpush1.msra.mxu0 0.0
      %1366 = vmatprep.subr.mxu0 0.0
      %1367 = vmatpush1.msra.mxu0 0.0
      %1368 = vmatprep.subr.mxu0 0.0
      %1369 = vmatpush1.msra.mxu0 0.0
      %1370 = vmatprep.subr.mxu0 0.0
      %1371 = vmatpush1.msra.mxu0 0.0
      %1372 = vmatprep.subr.mxu0 0.0
      %1373 = vmatpush1.msra.mxu0 0.0
      %1374 = vmatprep.subr.mxu0 0.0
      %1375 = vmatpush1.msra.mxu0 0.0
      %1376 = vmatprep.mubr.f32.mxu0 0.0
      %1377 = vmatmul.mubr.f32.gmra.mrb[0].mxu0 %v1310
      %v1378 = vpop.f32.mrb[0].mxu0
      %v1379 = vadd.f32 %v1307, %v1378
      %v1380 = vpop.f32.mrb[0].mxu0
      %1381 = vdwg.mxu0
      %v1382 = vadd.f32 %v1297, %v1379
      %v1383 = vxor.u32 %v1382, 2147483648
      %v1384 = vmul.f32 %v1383, 1.442695
      %v1385 = vpow.pop %v1384
      %v1386 = vadd.f32 %v1385, 1.0
      %v1387 = vrcp.pop %v1386
      %v1388 = vmul.f32 1.0, %v1387
      %1390 = vrot.lane.b32.xlu0 %v1379, 64
      %v1391 = vpop.permute.xlu0 %1390
      %v1393 = vmul.f32 %v1388, %v1391
      %1395 = vrot.lane.b32.xlu0 %v1393, 64
      %v1396 = vpop.permute.xlu0 %1395
      %v1398 = vadd.f32 %v1297, %v1396
      %v1399 = vtanh.pop %v1398
      %v1400 = vsub.f32 1.0, %v1388
      %1402 = vrot.lane.b32.xlu0 %v1399, 96
      %v1403 = vpop.permute.xlu0 %1402
      %v1405 = vmul.f32 %v1400, %v1403
      %1406 = vrot.lane.b32.xlu0 %v670, 32
      %v1407 = vpop.permute.xlu0 %1406
      %v1409 = vmul.f32 %v1388, %v1407
      %v1410 = vadd.f32 %v1405, %v1409
      %1412 = vrot.lane.b32.xlu0 %v1410, 96
      %v1413 = vpop.permute.xlu0 %1412
      %vm1415 = vcmask 254976
      %1416 = vst.msk [vmem:[#allocation2] sm:$0x3] %vm1415, %v1413
      %v1417 = vld [vmem:[%s671] sm:$0x3]
      %v1418 = vld [vmem:[%s12] sm:$0xff]
      %v1419 = vld [vmem:[%s12 + $0x8] sm:$0xff]
      %v1420 = vld [vmem:[%s12 + $0x10] sm:$0xff]
      %v1421 = vld [vmem:[%s12 + $0x18] sm:$0xff]
      %v1422 = vld [vmem:[%s14] sm:$0x1]
      %v1424 = vlaneseq
      %v1425 = vshrl.u32 %v1424, 7
      %v1426 = vsub.s32 0, %v1425
      %v1427 = vrot.slane %v1422, %v1426
      %v1429 = vsel %vm685, %v1413, 0
      %1431 = vmatprep.subr.mxu0 0.0
      %1432 = vmatpush1.msra.mxu0 %v1418
      %1433 = vmatprep.subr.mxu0 0.0
      %1434 = vmatpush1.msra.mxu0 %v1419
      %1435 = vmatprep.subr.mxu0 0.0
      %1436 = vmatpush1.msra.mxu0 %v1420
      %1437 = vmatprep.subr.mxu0 0.0
      %1438 = vmatpush1.msra.mxu0 %v1421
      %1439 = vmatprep.subr.mxu0 0.0
      %1440 = vmatpush1.msra.mxu0 0.0
      %1441 = vmatprep.subr.mxu0 0.0
      %1442 = vmatpush1.msra.mxu0 0.0
      %1443 = vmatprep.subr.mxu0 0.0
      %1444 = vmatpush1.msra.mxu0 0.0
      %1445 = vmatprep.subr.mxu0 0.0
      %1446 = vmatpush1.msra.mxu0 0.0
      %1447 = vmatprep.subr.mxu0 0.0
      %1448 = vmatpush1.msra.mxu0 0.0
      %1449 = vmatprep.subr.mxu0 0.0
      %1450 = vmatpush1.msra.mxu0 0.0
      %1451 = vmatprep.subr.mxu0 0.0
      %1452 = vmatpush1.msra.mxu0 0.0
      %1453 = vmatprep.subr.mxu0 0.0
      %1454 = vmatpush1.msra.mxu0 0.0
      %1455 = vmatprep.subr.mxu0 0.0
      %1456 = vmatpush1.msra.mxu0 0.0
      %1457 = vmatprep.subr.mxu0 0.0
      %1458 = vmatpush1.msra.mxu0 0.0
      %1459 = vmatprep.subr.mxu0 0.0
      %1460 = vmatpush1.msra.mxu0 0.0
      %1461 = vmatprep.subr.mxu0 0.0
      %1462 = vmatpush1.msra.mxu0 0.0
      %1463 = vmatprep.subr.mxu0 0.0
      %1464 = vmatpush1.msra.mxu0 0.0
      %1465 = vmatprep.subr.mxu0 0.0
      %1466 = vmatpush1.msra.mxu0 0.0
      %1467 = vmatprep.subr.mxu0 0.0
      %1468 = vmatpush1.msra.mxu0 0.0
      %1469 = vmatprep.subr.mxu0 0.0
      %1470 = vmatpush1.msra.mxu0 0.0
      %1471 = vmatprep.subr.mxu0 0.0
      %1472 = vmatpush1.msra.mxu0 0.0
      %1473 = vmatprep.subr.mxu0 0.0
      %1474 = vmatpush1.msra.mxu0 0.0
      %1475 = vmatprep.subr.mxu0 0.0
      %1476 = vmatpush1.msra.mxu0 0.0
      %1477 = vmatprep.subr.mxu0 0.0
      %1478 = vmatpush1.msra.mxu0 0.0
      %1479 = vmatprep.subr.mxu0 0.0
      %1480 = vmatpush1.msra.mxu0 0.0
      %1481 = vmatprep.subr.mxu0 0.0
      %1482 = vmatpush1.msra.mxu0 0.0
      %1483 = vmatprep.subr.mxu0 0.0
      %1484 = vmatpush1.msra.mxu0 0.0
      %1485 = vmatprep.subr.mxu0 0.0
      %1486 = vmatpush1.msra.mxu0 0.0
      %1487 = vmatprep.subr.mxu0 0.0
      %1488 = vmatpush1.msra.mxu0 0.0
      %1489 = vmatprep.subr.mxu0 0.0
      %1490 = vmatpush1.msra.mxu0 0.0
      %1491 = vmatprep.subr.mxu0 0.0
      %1492 = vmatpush1.msra.mxu0 0.0
      %1493 = vmatprep.subr.mxu0 0.0
      %1494 = vmatpush1.msra.mxu0 0.0
      %1495 = vmatprep.mubr.f32.mxu0 0.0
      %1496 = vmatmul.mubr.f32.gmra.mrb[0].mxu0 %v1429
      %v1497 = vpop.f32.mrb[0].mxu0
      %v1498 = vadd.f32 %v1427, %v1497
      %v1499 = vpop.f32.mrb[0].mxu0
      %1500 = vdwg.mxu0
      %v1501 = vld [vmem:[%s13] sm:$0xff]
      %v1502 = vld [vmem:[%s13 + $0x8] sm:$0xff]
      %v1503 = vld [vmem:[%s13 + $0x10] sm:$0xff]
      %v1504 = vld [vmem:[%s13 + $0x18] sm:$0xff]
      %v1505 = vld [vmem:[%s15] sm:$0x1]
      %v1507 = vlaneseq
      %v1508 = vshrl.u32 %v1507, 7
      %v1509 = vsub.s32 0, %v1508
      %v1510 = vrot.slane %v1505, %v1509
      %v1513 = vsel %vm685, %v1417, 0
      %1515 = vmatprep.subr.mxu0 0.0
      %1516 = vmatpush1.msra.mxu0 %v1501
      %1517 = vmatprep.subr.mxu0 0.0
      %1518 = vmatpush1.msra.mxu0 %v1502
      %1519 = vmatprep.subr.mxu0 0.0
      %1520 = vmatpush1.msra.mxu0 %v1503
      %1521 = vmatprep.subr.mxu0 0.0
      %1522 = vmatpush1.msra.mxu0 %v1504
      %1523 = vmatprep.subr.mxu0 0.0
      %1524 = vmatpush1.msra.mxu0 0.0
      %1525 = vmatprep.subr.mxu0 0.0
      %1526 = vmatpush1.msra.mxu0 0.0
      %1527 = vmatprep.subr.mxu0 0.0
      %1528 = vmatpush1.msra.mxu0 0.0
      %1529 = vmatprep.subr.mxu0 0.0
      %1530 = vmatpush1.msra.mxu0 0.0
      %1531 = vmatprep.subr.mxu0 0.0
      %1532 = vmatpush1.msra.mxu0 0.0
      %1533 = vmatprep.subr.mxu0 0.0
      %1534 = vmatpush1.msra.mxu0 0.0
      %1535 = vmatprep.subr.mxu0 0.0
      %1536 = vmatpush1.msra.mxu0 0.0
      %1537 = vmatprep.subr.mxu0 0.0
      %1538 = vmatpush1.msra.mxu0 0.0
      %1539 = vmatprep.subr.mxu0 0.0
      %1540 = vmatpush1.msra.mxu0 0.0
      %1541 = vmatprep.subr.mxu0 0.0
      %1542 = vmatpush1.msra.mxu0 0.0
      %1543 = vmatprep.subr.mxu0 0.0
      %1544 = vmatpush1.msra.mxu0 0.0
      %1545 = vmatprep.subr.mxu0 0.0
      %1546 = vmatpush1.msra.mxu0 0.0
      %1547 = vmatprep.subr.mxu0 0.0
      %1548 = vmatpush1.msra.mxu0 0.0
      %1549 = vmatprep.subr.mxu0 0.0
      %1550 = vmatpush1.msra.mxu0 0.0
      %1551 = vmatprep.subr.mxu0 0.0
      %1552 = vmatpush1.msra.mxu0 0.0
      %1553 = vmatprep.subr.mxu0 0.0
      %1554 = vmatpush1.msra.mxu0 0.0
      %1555 = vmatprep.subr.mxu0 0.0
      %1556 = vmatpush1.msra.mxu0 0.0
      %1557 = vmatprep.subr.mxu0 0.0
      %1558 = vmatpush1.msra.mxu0 0.0
      %1559 = vmatprep.subr.mxu0 0.0
      %1560 = vmatpush1.msra.mxu0 0.0
      %1561 = vmatprep.subr.mxu0 0.0
      %1562 = vmatpush1.msra.mxu0 0.0
      %1563 = vmatprep.subr.mxu0 0.0
      %1564 = vmatpush1.msra.mxu0 0.0
      %1565 = vmatprep.subr.mxu0 0.0
      %1566 = vmatpush1.msra.mxu0 0.0
      %1567 = vmatprep.subr.mxu0 0.0
      %1568 = vmatpush1.msra.mxu0 0.0
      %1569 = vmatprep.subr.mxu0 0.0
      %1570 = vmatpush1.msra.mxu0 0.0
      %1571 = vmatprep.subr.mxu0 0.0
      %1572 = vmatpush1.msra.mxu0 0.0
      %1573 = vmatprep.subr.mxu0 0.0
      %1574 = vmatpush1.msra.mxu0 0.0
      %1575 = vmatprep.subr.mxu0 0.0
      %1576 = vmatpush1.msra.mxu0 0.0
      %1577 = vmatprep.subr.mxu0 0.0
      %1578 = vmatpush1.msra.mxu0 0.0
      %1579 = vmatprep.mubr.f32.mxu0 0.0
      %1580 = vmatmul.mubr.f32.gmra.mrb[0].mxu0 %v1513
      %v1581 = vpop.f32.mrb[0].mxu0
      %v1582 = vadd.f32 %v1510, %v1581
      %v1583 = vpop.f32.mrb[0].mxu0
      %1584 = vdwg.mxu0
      %v1585 = vadd.f32 %v1498, %v1582
      %v1586 = vxor.u32 %v1585, 2147483648
      %v1587 = vmul.f32 %v1586, 1.442695
      %v1588 = vpow.pop %v1587
      %v1589 = vadd.f32 %v1588, 1.0
      %v1590 = vrcp.pop %v1589
      %v1591 = vmul.f32 1.0, %v1590
      %1593 = vrot.lane.b32.xlu0 %v1582, 64
      %v1594 = vpop.permute.xlu0 %1593
      %v1596 = vmul.f32 %v1591, %v1594
      %1598 = vrot.lane.b32.xlu0 %v1596, 64
      %v1599 = vpop.permute.xlu0 %1598
      %v1601 = vadd.f32 %v1498, %v1599
      %v1602 = vtanh.pop %v1601
      %v1603 = vsub.f32 1.0, %v1591
      %1605 = vrot.lane.b32.xlu0 %v1602, 96
      %v1606 = vpop.permute.xlu0 %1605
      %v1608 = vmul.f32 %v1603, %v1606
      %1609 = vrot.lane.b32.xlu0 %v1417, 32
      %v1610 = vpop.permute.xlu0 %1609
      %v1612 = vmul.f32 %v1591, %v1610
      %v1613 = vadd.f32 %v1608, %v1612
      %1615 = vrot.lane.b32.xlu0 %v1613, 96
      %v1616 = vpop.permute.xlu0 %1615
      %1618 = vst.msk [vmem:[%s671] sm:$0x3] %vm1415, %v1616
      %v1619 = vld [vmem:[%s16] sm:$0xff]
      %v1620 = vld [vmem:[%s16 + $0x8] sm:$0xff]
      %v1621 = vld [vmem:[%s16 + $0x10] sm:$0xff]
      %v1622 = vld [vmem:[%s16 + $0x18] sm:$0xff]
      %v1623 = vld [vmem:[%s17] sm:$0x1]
      %v1625 = vlaneseq
      %v1626 = vshrl.u32 %v1625, 7
      %v1627 = vsub.s32 0, %v1626
      %v1628 = vrot.slane %v1623, %v1627
      %v1630 = vsel %vm685, %v1616, 0
      %1632 = vmatprep.subr.mxu0 0.0
      %1633 = vmatpush1.msra.mxu0 %v1619
      %1634 = vmatprep.subr.mxu0 0.0
      %1635 = vmatpush1.msra.mxu0 %v1620
      %1636 = vmatprep.subr.mxu0 0.0
      %1637 = vmatpush1.msra.mxu0 %v1621
      %1638 = vmatprep.subr.mxu0 0.0
      %1639 = vmatpush1.msra.mxu0 %v1622
      %1640 = vmatprep.subr.mxu0 0.0
      %1641 = vmatpush1.msra.mxu0 0.0
      %1642 = vmatprep.subr.mxu0 0.0
      %1643 = vmatpush1.msra.mxu0 0.0
      %1644 = vmatprep.subr.mxu0 0.0
      %1645 = vmatpush1.msra.mxu0 0.0
      %1646 = vmatprep.subr.mxu0 0.0
      %1647 = vmatpush1.msra.mxu0 0.0
      %1648 = vmatprep.subr.mxu0 0.0
      %1649 = vmatpush1.msra.mxu0 0.0
      %1650 = vmatprep.subr.mxu0 0.0
      %1651 = vmatpush1.msra.mxu0 0.0
      %1652 = vmatprep.subr.mxu0 0.0
      %1653 = vmatpush1.msra.mxu0 0.0
      %1654 = vmatprep.subr.mxu0 0.0
      %1655 = vmatpush1.msra.mxu0 0.0
      %1656 = vmatprep.subr.mxu0 0.0
      %1657 = vmatpush1.msra.mxu0 0.0
      %1658 = vmatprep.subr.mxu0 0.0
      %1659 = vmatpush1.msra.mxu0 0.0
      %1660 = vmatprep.subr.mxu0 0.0
      %1661 = vmatpush1.msra.mxu0 0.0
      %1662 = vmatprep.subr.mxu0 0.0
      %1663 = vmatpush1.msra.mxu0 0.0
      %1664 = vmatprep.subr.mxu0 0.0
      %1665 = vmatpush1.msra.mxu0 0.0
      %1666 = vmatprep.subr.mxu0 0.0
      %1667 = vmatpush1.msra.mxu0 0.0
      %1668 = vmatprep.subr.mxu0 0.0
      %1669 = vmatpush1.msra.mxu0 0.0
      %1670 = vmatprep.subr.mxu0 0.0
      %1671 = vmatpush1.msra.mxu0 0.0
      %1672 = vmatprep.subr.mxu0 0.0
      %1673 = vmatpush1.msra.mxu0 0.0
      %1674 = vmatprep.subr.mxu0 0.0
      %1675 = vmatpush1.msra.mxu0 0.0
      %1676 = vmatprep.subr.mxu0 0.0
      %1677 = vmatpush1.msra.mxu0 0.0
      %1678 = vmatprep.subr.mxu0 0.0
      %1679 = vmatpush1.msra.mxu0 0.0
      %1680 = vmatprep.subr.mxu0 0.0
      %1681 = vmatpush1.msra.mxu0 0.0
      %1682 = vmatprep.subr.mxu0 0.0
      %1683 = vmatpush1.msra.mxu0 0.0
      %1684 = vmatprep.subr.mxu0 0.0
      %1685 = vmatpush1.msra.mxu0 0.0
      %1686 = vmatprep.subr.mxu0 0.0
      %1687 = vmatpush1.msra.mxu0 0.0
      %1688 = vmatprep.subr.mxu0 0.0
      %1689 = vmatpush1.msra.mxu0 0.0
      %1690 = vmatprep.subr.mxu0 0.0
      %1691 = vmatpush1.msra.mxu0 0.0
      %1692 = vmatprep.subr.mxu0 0.0
      %1693 = vmatpush1.msra.mxu0 0.0
      %1694 = vmatprep.subr.mxu0 0.0
      %1695 = vmatpush1.msra.mxu0 0.0
      %1696 = vmatprep.mubr.f32.mxu0 0.0
      %1697 = vmatmul.mubr.f32.gmra.mrb[0].mxu0 %v1630
      %v1698 = vpop.f32.mrb[0].mxu0
      %v1699 = vadd.f32 %v1628, %v1698
      %v1700 = vpop.f32.mrb[0].mxu0
      %1701 = vdwg.mxu0
      %v1702 = vsel %vm782, %v1699, -inf
      %1703 = vmax.xlane.f32.xlu0 %v1702
      %v1704 = vpop.xlane.xlu0 %1703
      %v1705 = vsub.f32 %v1699, %v1704
      %v1706 = vmul.f32 %v1705, 1.442695
      %v1707 = vpow.pop %v1706
      %v1708 = vsel %vm782, %v1707, 0.0
      %1709 = vadd.xlane.f32.xlu0 %v1708
      %v1710 = vpop.xlane.xlu0 %1709
      %v1711 = vlog2.pop %v1710
      %v1712 = vmul.f32 %v1711, 0.6931472
      %v1713 = vsub.f32 %v1705, %v1712
      %1714 = vst [vmem:[%s570] sm:$0x3] %v1713
      %p1715 = scmp.lt.s32.totalorder %s29, 4
      %s1716 = scalar_select %p1715, %s29, 4
      %s1717 = smul.addr %s1716, 2
      %s1718 = scalar_lea.vmem %s18, %s1717
      // Predicated region
      $region97: #{forward.3} parent=91 // pred_check
        %p1719 = pneg %p430
      $region98: #{forward.3} parent=91 // pred_check_branch
        %1721 = sbr.rel (%p1719) target = $region100
      $region99: #{forward.3} parent=91 // pred_region
        _
      $region100: #{forward.3} parent=91 // pred_fallthru
        _
    $region92: #{forward.3} parent=5 // pred_fallthru
      _
    %p1722 = scmp.le.s32.totalorder 2, %s24
    // Predicated region
    $region101: #{forward.3} parent=5 // pred_check
      %p1723 = pneg %p1722
    $region102: #{forward.3} parent=5 // pred_check_branch
      %1725 = sbr.rel (%p1723) target = $region104
    $region103: #{forward.3} parent=5 // pred_region
      %s1726 = ssub.s32 %s24, 2
      // Predicated region
      $region105: #{forward.3} parent=103 // pred_check
        %p1727 = pneg %p436
      $region106: #{forward.3} parent=103 // pred_check_branch
        %1729 = sbr.rel (%p1727) target = $region108
      $region107: #{forward.3} parent=103 // pred_region
        %p1730 = scmp.lt.s32.totalorder %s30, 4
        %s1731 = scalar_select %p1730, %s30, 4
        %s1732 = smul.addr %s1731, 2
        %s1733 = scalar_lea.vmem %s18, %s1732
      $region108: #{forward.3} parent=103 // pred_fallthru
        _
    $region104: #{forward.3} parent=5 // pred_fallthru
      _
  $region6: #{forward.3} parent=0 // loop_footer
    %s28 = sadd.s32 1, %s24
  $region7: #{forward.3} parent=0 // loop_footer_branch
    %23 = sbr.rel target = $region3
  $region8: #{forward.3} parent=0 // loop_exit
    _

// kernel: forward.2
$region0: #{forward.2}
  #allocation0 [shape = 'u32[]', space=smem, size = 0x4, offset = 0x4, fixed_abs, tag = 'smem constant byte address 0x4 - core index']
  #allocation1 [shape = 'u32[144,128]{1,0:T(1,128)}', space=vmem, size = 0x12000, scoped, tag = 'internal scratch']
  %s0 = inlined_call_operand.vmem [shape: f32[16,32], index: 0, kind: input, shape index: {}]
  %s1 = inlined_call_operand.vmem [shape: f32[2,1,8], index: 1, kind: input, shape index: {}]
  %s2 = inlined_call_operand.vmem [shape: f32[2,32,96], index: 2, kind: input, shape index: {}]
  %s3 = inlined_call_operand.vmem [shape: f32[2,1,96], index: 3, kind: input, shape index: {}]
  %s4 = inlined_call_operand.vmem [shape: f32[2,32,32], index: 4, kind: input, shape index: {}]
  %s5 = inlined_call_operand.vmem [shape: f32[2,1,32], index: 5, kind: input, shape index: {}]
  %s6 = inlined_call_operand.vmem [shape: f32[2,1,32], index: 6, kind: input, shape index: {}]
  %s7 = inlined_call_operand.vmem [shape: f32[2,1,32], index: 7, kind: input, shape index: {}]
  %s8 = inlined_call_operand.vmem [shape: f32[2,1,32], index: 8, kind: input, shape index: {}]
  %s9 = inlined_call_operand.vmem [shape: f32[2,1,32], index: 9, kind: input, shape index: {}]
  %s10 = inlined_call_operand.vmem [shape: f32[2,32,64], index: 10, kind: input, shape index: {}]
  %s11 = inlined_call_operand.vmem [shape: f32[2,1,64], index: 11, kind: input, shape index: {}]
  %s12 = inlined_call_operand.vmem [shape: f32[2,64,32], index: 12, kind: input, shape index: {}]
  %s13 = inlined_call_operand.vmem [shape: f32[2,1,32], index: 13, kind: input, shape index: {}]
  %s14 = inlined_call_operand.vmem [shape: f32[16,32], index: 14, kind: output, shape index: {}]
  %s15 = sld [smem:[#allocation0]]
  $region93: #{forward.2} parent=0
    _
  %s17 = ssub.s32 1, %s15
  %s18 = scalar_select 0, %s17, %s15
  loop: start=0, step=1, limit=4
  $region2: #{forward.2} parent=0 // loop_pre_header
    _
  $region3: #{forward.2} parent=0 // loop_header
    %s20 = sphi 0, %s24
    %p21 = scmp.ge.s32.totalorder %s20, 4
    %s28 = sphi 0, %s28
    %s30 = sphi 0, %s28
    %s31 = sphi 0, %s30
    %s45 = sphi 0, %s31
    %s49 = sphi 0, %s49
    %s51 = sphi 0, %s49
    %s52 = sphi 0, %s51
    %s66 = sphi 0, %s52
    %s72 = sphi 0, %s74
    %s75 = sphi 0, %s72
    %s76 = sphi 0, %s75
    %s92 = sphi 0, %s76
    %s98 = sphi 0, %s100
    %s101 = sphi 0, %s98
    %s102 = sphi 0, %s101
    %s118 = sphi 0, %s102
    %s124 = sphi 0, %s126
    %s127 = sphi 0, %s124
    %s128 = sphi 0, %s127
    %s144 = sphi 0, %s128
    %s150 = sphi 0, %s152
    %s153 = sphi 0, %s150
    %s154 = sphi 0, %s153
    %s170 = sphi 0, %s154
    %s176 = sphi 0, %s178
    %s179 = sphi 0, %s176
    %s180 = sphi 0, %s179
    %s196 = sphi 0, %s180
    %s202 = sphi 0, %s204
    %s205 = sphi 0, %s202
    %s206 = sphi 0, %s205
    %s222 = sphi 0, %s206
    %s228 = sphi 0, %s230
    %s231 = sphi 0, %s228
    %s232 = sphi 0, %s231
    %s248 = sphi 0, %s232
    %s254 = sphi 0, %s256
    %s257 = sphi 0, %s254
    %s258 = sphi 0, %s257
    %s274 = sphi 0, %s258
    %s280 = sphi 0, %s282
    %s283 = sphi 0, %s280
    %s284 = sphi 0, %s283
    %s300 = sphi 0, %s284
    %s306 = sphi 0, %s308
    %s309 = sphi 0, %s306
    %s310 = sphi 0, %s309
    %s326 = sphi 0, %s310
    %s332 = sphi 0, %s334
    %s335 = sphi 0, %s332
    %s336 = sphi 0, %s335
    %s352 = sphi 0, %s336
    %s358 = sphi 0, %s360
    %s361 = sphi 0, %s358
    %s362 = sphi 0, %s361
    %s378 = sphi 0, %s362
    %s382 = sphi 0, %s382
    %s384 = sphi 0, %s382
    %s385 = sphi 0, %s384
    %s399 = sphi 0, %s385
  $region4: #{forward.2} parent=0 // loop_header_branch
    %23 = sbr.rel (%p21) target = $region8
  $region5: #{forward.2} parent=0 // loop_body
    %s25 = ssub.s32 %s20, 1
    %s26 = ssub.s32 %s20, 2
    %s27 = sadd.s32 %s20, 1
    %s29 = sadd.s32 %s28, 1
    %p32 = scmp.eq.s32.totalorder %s20, 1
    %p33 = scmp.ne.s32.totalorder %s28, %s30
    %p34 = scmp.eq.s32.totalorder %s20, 0
    %p35 = por %p33, %p34
    %p36 = scmp.ne.s32.totalorder %s28, %s30
    %p37 = scmp.eq.s32.totalorder %s25, 1
    %p38 = por %p36, %p37
    %p39 = scmp.ne.s32.totalorder %s30, %s31
    %p40 = scmp.eq.s32.totalorder %s25, 0
    %p41 = por %p39, %p40
    %p42 = scmp.ne.s32.totalorder %s30, %s31
    %p43 = scmp.eq.s32.totalorder %s26, 1
    %p44 = por %p42, %p43
    %p46 = scmp.ne.s32.totalorder %s31, %s45
    %p47 = scmp.eq.s32.totalorder %s26, 0
    %p48 = por %p46, %p47
    %s50 = sadd.s32 %s49, 1
    %p53 = scmp.eq.s32.totalorder %s20, 1
    %p54 = scmp.ne.s32.totalorder %s49, %s51
    %p55 = scmp.eq.s32.totalorder %s20, 0
    %p56 = por %p54, %p55
    %p57 = scmp.ne.s32.totalorder %s49, %s51
    %p58 = scmp.eq.s32.totalorder %s25, 1
    %p59 = por %p57, %p58
    %p60 = scmp.ne.s32.totalorder %s51, %s52
    %p61 = scmp.eq.s32.totalorder %s25, 0
    %p62 = por %p60, %p61
    %p63 = scmp.ne.s32.totalorder %s51, %s52
    %p64 = scmp.eq.s32.totalorder %s26, 1
    %p65 = por %p63, %p64
    %p67 = scmp.ne.s32.totalorder %s52, %s66
    %p68 = scmp.eq.s32.totalorder %s26, 0
    %p69 = por %p67, %p68
    %s70 = ssub.s32 %s20, %s27
    %p71 = scmp.eq.s32.totalorder %s70, 0
    %s73 = sadd.s32 %s72, 1
    %s74 = scalar_select %p71, %s72, %s73
    %p77 = pneg %p71
    %p78 = scmp.eq.s32.totalorder %s20, 1
    %p79 = por %p77, %p78
    %p80 = scmp.ne.s32.totalorder %s72, %s75
    %p81 = scmp.eq.s32.totalorder %s20, 0
    %p82 = por %p80, %p81
    %p83 = scmp.ne.s32.totalorder %s72, %s75
    %p84 = scmp.eq.s32.totalorder %s25, 1
    %p85 = por %p83, %p84
    %p86 = scmp.ne.s32.totalorder %s75, %s76
    %p87 = scmp.eq.s32.totalorder %s25, 0
    %p88 = por %p86, %p87
    %p89 = scmp.ne.s32.totalorder %s75, %s76
    %p90 = scmp.eq.s32.totalorder %s26, 1
    %p91 = por %p89, %p90
    %p93 = scmp.ne.s32.totalorder %s76, %s92
    %p94 = scmp.eq.s32.totalorder %s26, 0
    %p95 = por %p93, %p94
    %s96 = ssub.s32 %s20, %s27
    %p97 = scmp.eq.s32.totalorder %s96, 0
    %s99 = sadd.s32 %s98, 1
    %s100 = scalar_select %p97, %s98, %s99
    %p103 = pneg %p97
    %p104 = scmp.eq.s32.totalorder %s20, 1
    %p105 = por %p103, %p104
    %p106 = scmp.ne.s32.totalorder %s98, %s101
    %p107 = scmp.eq.s32.totalorder %s20, 0
    %p108 = por %p106, %p107
    %p109 = scmp.ne.s32.totalorder %s98, %s101
    %p110 = scmp.eq.s32.totalorder %s25, 1
    %p111 = por %p109, %p110
    %p112 = scmp.ne.s32.totalorder %s101, %s102
    %p113 = scmp.eq.s32.totalorder %s25, 0
    %p114 = por %p112, %p113
    %p115 = scmp.ne.s32.totalorder %s101, %s102
    %p116 = scmp.eq.s32.totalorder %s26, 1
    %p117 = por %p115, %p116
    %p119 = scmp.ne.s32.totalorder %s102, %s118
    %p120 = scmp.eq.s32.totalorder %s26, 0
    %p121 = por %p119, %p120
    %s122 = ssub.s32 %s20, %s27
    %p123 = scmp.eq.s32.totalorder %s122, 0
    %s125 = sadd.s32 %s124, 1
    %s126 = scalar_select %p123, %s124, %s125
    %p129 = pneg %p123
    %p130 = scmp.eq.s32.totalorder %s20, 1
    %p131 = por %p129, %p130
    %p132 = scmp.ne.s32.totalorder %s124, %s127
    %p133 = scmp.eq.s32.totalorder %s20, 0
    %p134 = por %p132, %p133
    %p135 = scmp.ne.s32.totalorder %s124, %s127
    %p136 = scmp.eq.s32.totalorder %s25, 1
    %p137 = por %p135, %p136
    %p138 = scmp.ne.s32.totalorder %s127, %s128
    %p139 = scmp.eq.s32.totalorder %s25, 0
    %p140 = por %p138, %p139
    %p141 = scmp.ne.s32.totalorder %s127, %s128
    %p142 = scmp.eq.s32.totalorder %s26, 1
    %p143 = por %p141, %p142
    %p145 = scmp.ne.s32.totalorder %s128, %s144
    %p146 = scmp.eq.s32.totalorder %s26, 0
    %p147 = por %p145, %p146
    %s148 = ssub.s32 %s20, %s27
    %p149 = scmp.eq.s32.totalorder %s148, 0
    %s151 = sadd.s32 %s150, 1
    %s152 = scalar_select %p149, %s150, %s151
    %p155 = pneg %p149
    %p156 = scmp.eq.s32.totalorder %s20, 1
    %p157 = por %p155, %p156
    %p158 = scmp.ne.s32.totalorder %s150, %s153
    %p159 = scmp.eq.s32.totalorder %s20, 0
    %p160 = por %p158, %p159
    %p161 = scmp.ne.s32.totalorder %s150, %s153
    %p162 = scmp.eq.s32.totalorder %s25, 1
    %p163 = por %p161, %p162
    %p164 = scmp.ne.s32.totalorder %s153, %s154
    %p165 = scmp.eq.s32.totalorder %s25, 0
    %p166 = por %p164, %p165
    %p167 = scmp.ne.s32.totalorder %s153, %s154
    %p168 = scmp.eq.s32.totalorder %s26, 1
    %p169 = por %p167, %p168
    %p171 = scmp.ne.s32.totalorder %s154, %s170
    %p172 = scmp.eq.s32.totalorder %s26, 0
    %p173 = por %p171, %p172
    %s174 = ssub.s32 %s20, %s27
    %p175 = scmp.eq.s32.totalorder %s174, 0
    %s177 = sadd.s32 %s176, 1
    %s178 = scalar_select %p175, %s176, %s177
    %p181 = pneg %p175
    %p182 = scmp.eq.s32.totalorder %s20, 1
    %p183 = por %p181, %p182
    %p184 = scmp.ne.s32.totalorder %s176, %s179
    %p185 = scmp.eq.s32.totalorder %s20, 0
    %p186 = por %p184, %p185
    %p187 = scmp.ne.s32.totalorder %s176, %s179
    %p188 = scmp.eq.s32.totalorder %s25, 1
    %p189 = por %p187, %p188
    %p190 = scmp.ne.s32.totalorder %s179, %s180
    %p191 = scmp.eq.s32.totalorder %s25, 0
    %p192 = por %p190, %p191
    %p193 = scmp.ne.s32.totalorder %s179, %s180
    %p194 = scmp.eq.s32.totalorder %s26, 1
    %p195 = por %p193, %p194
    %p197 = scmp.ne.s32.totalorder %s180, %s196
    %p198 = scmp.eq.s32.totalorder %s26, 0
    %p199 = por %p197, %p198
    %s200 = ssub.s32 %s20, %s27
    %p201 = scmp.eq.s32.totalorder %s200, 0
    %s203 = sadd.s32 %s202, 1
    %s204 = scalar_select %p201, %s202, %s203
    %p207 = pneg %p201
    %p208 = scmp.eq.s32.totalorder %s20, 1
    %p209 = por %p207, %p208
    %p210 = scmp.ne.s32.totalorder %s202, %s205
    %p211 = scmp.eq.s32.totalorder %s20, 0
    %p212 = por %p210, %p211
    %p213 = scmp.ne.s32.totalorder %s202, %s205
    %p214 = scmp.eq.s32.totalorder %s25, 1
    %p215 = por %p213, %p214
    %p216 = scmp.ne.s32.totalorder %s205, %s206
    %p217 = scmp.eq.s32.totalorder %s25, 0
    %p218 = por %p216, %p217
    %p219 = scmp.ne.s32.totalorder %s205, %s206
    %p220 = scmp.eq.s32.totalorder %s26, 1
    %p221 = por %p219, %p220
    %p223 = scmp.ne.s32.totalorder %s206, %s222
    %p224 = scmp.eq.s32.totalorder %s26, 0
    %p225 = por %p223, %p224
    %s226 = ssub.s32 %s20, %s27
    %p227 = scmp.eq.s32.totalorder %s226, 0
    %s229 = sadd.s32 %s228, 1
    %s230 = scalar_select %p227, %s228, %s229
    %p233 = pneg %p227
    %p234 = scmp.eq.s32.totalorder %s20, 1
    %p235 = por %p233, %p234
    %p236 = scmp.ne.s32.totalorder %s228, %s231
    %p237 = scmp.eq.s32.totalorder %s20, 0
    %p238 = por %p236, %p237
    %p239 = scmp.ne.s32.totalorder %s228, %s231
    %p240 = scmp.eq.s32.totalorder %s25, 1
    %p241 = por %p239, %p240
    %p242 = scmp.ne.s32.totalorder %s231, %s232
    %p243 = scmp.eq.s32.totalorder %s25, 0
    %p244 = por %p242, %p243
    %p245 = scmp.ne.s32.totalorder %s231, %s232
    %p246 = scmp.eq.s32.totalorder %s26, 1
    %p247 = por %p245, %p246
    %p249 = scmp.ne.s32.totalorder %s232, %s248
    %p250 = scmp.eq.s32.totalorder %s26, 0
    %p251 = por %p249, %p250
    %s252 = ssub.s32 %s20, %s27
    %p253 = scmp.eq.s32.totalorder %s252, 0
    %s255 = sadd.s32 %s254, 1
    %s256 = scalar_select %p253, %s254, %s255
    %p259 = pneg %p253
    %p260 = scmp.eq.s32.totalorder %s20, 1
    %p261 = por %p259, %p260
    %p262 = scmp.ne.s32.totalorder %s254, %s257
    %p263 = scmp.eq.s32.totalorder %s20, 0
    %p264 = por %p262, %p263
    %p265 = scmp.ne.s32.totalorder %s254, %s257
    %p266 = scmp.eq.s32.totalorder %s25, 1
    %p267 = por %p265, %p266
    %p268 = scmp.ne.s32.totalorder %s257, %s258
    %p269 = scmp.eq.s32.totalorder %s25, 0
    %p270 = por %p268, %p269
    %p271 = scmp.ne.s32.totalorder %s257, %s258
    %p272 = scmp.eq.s32.totalorder %s26, 1
    %p273 = por %p271, %p272
    %p275 = scmp.ne.s32.totalorder %s258, %s274
    %p276 = scmp.eq.s32.totalorder %s26, 0
    %p277 = por %p275, %p276
    %s278 = ssub.s32 %s20, %s27
    %p279 = scmp.eq.s32.totalorder %s278, 0
    %s281 = sadd.s32 %s280, 1
    %s282 = scalar_select %p279, %s280, %s281
    %p285 = pneg %p279
    %p286 = scmp.eq.s32.totalorder %s20, 1
    %p287 = por %p285, %p286
    %p288 = scmp.ne.s32.totalorder %s280, %s283
    %p289 = scmp.eq.s32.totalorder %s20, 0
    %p290 = por %p288, %p289
    %p291 = scmp.ne.s32.totalorder %s280, %s283
    %p292 = scmp.eq.s32.totalorder %s25, 1
    %p293 = por %p291, %p292
    %p294 = scmp.ne.s32.totalorder %s283, %s284
    %p295 = scmp.eq.s32.totalorder %s25, 0
    %p296 = por %p294, %p295
    %p297 = scmp.ne.s32.totalorder %s283, %s284
    %p298 = scmp.eq.s32.totalorder %s26, 1
    %p299 = por %p297, %p298
    %p301 = scmp.ne.s32.totalorder %s284, %s300
    %p302 = scmp.eq.s32.totalorder %s26, 0
    %p303 = por %p301, %p302
    %s304 = ssub.s32 %s20, %s27
    %p305 = scmp.eq.s32.totalorder %s304, 0
    %s307 = sadd.s32 %s306, 1
    %s308 = scalar_select %p305, %s306, %s307
    %p311 = pneg %p305
    %p312 = scmp.eq.s32.totalorder %s20, 1
    %p313 = por %p311, %p312
    %p314 = scmp.ne.s32.totalorder %s306, %s309
    %p315 = scmp.eq.s32.totalorder %s20, 0
    %p316 = por %p314, %p315
    %p317 = scmp.ne.s32.totalorder %s306, %s309
    %p318 = scmp.eq.s32.totalorder %s25, 1
    %p319 = por %p317, %p318
    %p320 = scmp.ne.s32.totalorder %s309, %s310
    %p321 = scmp.eq.s32.totalorder %s25, 0
    %p322 = por %p320, %p321
    %p323 = scmp.ne.s32.totalorder %s309, %s310
    %p324 = scmp.eq.s32.totalorder %s26, 1
    %p325 = por %p323, %p324
    %p327 = scmp.ne.s32.totalorder %s310, %s326
    %p328 = scmp.eq.s32.totalorder %s26, 0
    %p329 = por %p327, %p328
    %s330 = ssub.s32 %s20, %s27
    %p331 = scmp.eq.s32.totalorder %s330, 0
    %s333 = sadd.s32 %s332, 1
    %s334 = scalar_select %p331, %s332, %s333
    %p337 = pneg %p331
    %p338 = scmp.eq.s32.totalorder %s20, 1
    %p339 = por %p337, %p338
    %p340 = scmp.ne.s32.totalorder %s332, %s335
    %p341 = scmp.eq.s32.totalorder %s20, 0
    %p342 = por %p340, %p341
    %p343 = scmp.ne.s32.totalorder %s332, %s335
    %p344 = scmp.eq.s32.totalorder %s25, 1
    %p345 = por %p343, %p344
    %p346 = scmp.ne.s32.totalorder %s335, %s336
    %p347 = scmp.eq.s32.totalorder %s25, 0
    %p348 = por %p346, %p347
    %p349 = scmp.ne.s32.totalorder %s335, %s336
    %p350 = scmp.eq.s32.totalorder %s26, 1
    %p351 = por %p349, %p350
    %p353 = scmp.ne.s32.totalorder %s336, %s352
    %p354 = scmp.eq.s32.totalorder %s26, 0
    %p355 = por %p353, %p354
    %s356 = ssub.s32 %s20, %s27
    %p357 = scmp.eq.s32.totalorder %s356, 0
    %s359 = sadd.s32 %s358, 1
    %s360 = scalar_select %p357, %s358, %s359
    %p363 = pneg %p357
    %p364 = scmp.eq.s32.totalorder %s20, 1
    %p365 = por %p363, %p364
    %p366 = scmp.ne.s32.totalorder %s358, %s361
    %p367 = scmp.eq.s32.totalorder %s20, 0
    %p368 = por %p366, %p367
    %p369 = scmp.ne.s32.totalorder %s358, %s361
    %p370 = scmp.eq.s32.totalorder %s25, 1
    %p371 = por %p369, %p370
    %p372 = scmp.ne.s32.totalorder %s361, %s362
    %p373 = scmp.eq.s32.totalorder %s25, 0
    %p374 = por %p372, %p373
    %p375 = scmp.ne.s32.totalorder %s361, %s362
    %p376 = scmp.eq.s32.totalorder %s26, 1
    %p377 = por %p375, %p376
    %p379 = scmp.ne.s32.totalorder %s362, %s378
    %p380 = scmp.eq.s32.totalorder %s26, 0
    %p381 = por %p379, %p380
    %s383 = sadd.s32 %s382, 1
    %p386 = scmp.eq.s32.totalorder %s20, 1
    %p387 = scmp.ne.s32.totalorder %s382, %s384
    %p388 = scmp.eq.s32.totalorder %s20, 0
    %p389 = por %p387, %p388
    %p390 = scmp.ne.s32.totalorder %s382, %s384
    %p391 = scmp.eq.s32.totalorder %s25, 1
    %p392 = por %p390, %p391
    %p393 = scmp.ne.s32.totalorder %s384, %s385
    %p394 = scmp.eq.s32.totalorder %s25, 0
    %p395 = por %p393, %p394
    %p396 = scmp.ne.s32.totalorder %s384, %s385
    %p397 = scmp.eq.s32.totalorder %s26, 1
    %p398 = por %p396, %p397
    %p400 = scmp.ne.s32.totalorder %s385, %s399
    %p401 = scmp.eq.s32.totalorder %s26, 0
    %p402 = por %p400, %p401
    %p403 = scmp.le.s32.totalorder 1, %s20
    %p404 = scmp.lt.s32.totalorder %s20, 3
    %p405 = pnand %p403, %p404
    %p406 = pneg %p405
    // Predicated region
    $region9: #{forward.2} parent=5 // pred_check
      _
    $region10: #{forward.2} parent=5 // pred_check_branch
      %408 = sbr.rel (%p405) target = $region12
    $region11: #{forward.2} parent=5 // pred_region
      %s409 = ssub.s32 %s20, 1
      // Predicated region
      $region13: #{forward.2} parent=11 // pred_check
        %p410 = pneg %p41
      $region14: #{forward.2} parent=11 // pred_check_branch
        %412 = sbr.rel (%p410) target = $region16
      $region15: #{forward.2} parent=11 // pred_region
        _
      $region16: #{forward.2} parent=11 // pred_fallthru
        _
      // Predicated region
      $region17: #{forward.2} parent=11 // pred_check
        %p413 = pneg %p62
      $region18: #{forward.2} parent=11 // pred_check_branch
        %415 = sbr.rel (%p413) target = $region20
      $region19: #{forward.2} parent=11 // pred_region
        _
      $region20: #{forward.2} parent=11 // pred_fallthru
        _
    $region12: #{forward.2} parent=5 // pred_fallthru
      _
    %p416 = scmp.lt.s32.totalorder %s20, 2
    // Predicated region
    $region21: #{forward.2} parent=5 // pred_check
      %p417 = pneg %p416
    $region22: #{forward.2} parent=5 // pred_check_branch
      %419 = sbr.rel (%p417) target = $region24
    $region23: #{forward.2} parent=5 // pred_region
      // Predicated region
      $region25: #{forward.2} parent=23 // pred_check
        %p420 = pneg %p82
      $region26: #{forward.2} parent=23 // pred_check_branch
        %422 = sbr.rel (%p420) target = $region28
      $region27: #{forward.2} parent=23 // pred_region
        %p423 = scmp.lt.s32.totalorder %s20, 1
        %s424 = scalar_select %p423, %s20, 1
        %s425 = smul.addr %s424, 4
        %s426 = smul.addr %s425, 8
        %s427 = scalar_lea.vmem %s2, %s426
      $region28: #{forward.2} parent=23 // pred_fallthru
        _
      // Predicated region
      $region29: #{forward.2} parent=23 // pred_check
        %p428 = pneg %p108
      $region30: #{forward.2} parent=23 // pred_check_branch
        %430 = sbr.rel (%p428) target = $region32
      $region31: #{forward.2} parent=23 // pred_region
        %p431 = scmp.lt.s32.totalorder %s20, 1
        %s432 = scalar_select %p431, %s20, 1
        %s433 = scalar_lea.vmem %s3, %s432
      $region32: #{forward.2} parent=23 // pred_fallthru
        _
      // Predicated region
      $region33: #{forward.2} parent=23 // pred_check
        %p434 = pneg %p134
      $region34: #{forward.2} parent=23 // pred_check_branch
        %436 = sbr.rel (%p434) target = $region36
      $region35: #{forward.2} parent=23 // pred_region
        %p437 = scmp.lt.s32.totalorder %s20, 1
        %s438 = scalar_select %p437, %s20, 1
        %s439 = smul.addr %s438, 4
        %s440 = smul.addr %s439, 8
        %s441 = scalar_lea.vmem %s4, %s440
      $region36: #{forward.2} parent=23 // pred_fallthru
        _
      // Predicated region
      $region37: #{forward.2} parent=23 // pred_check
        %p442 = pneg %p160
      $region38: #{forward.2} parent=23 // pred_check_branch
        %444 = sbr.rel (%p442) target = $region40
      $region39: #{forward.2} parent=23 // pred_region
        %p445 = scmp.lt.s32.totalorder %s20, 1
        %s446 = scalar_select %p445, %s20, 1
        %s447 = scalar_lea.vmem %s5, %s446
      $region40: #{forward.2} parent=23 // pred_fallthru
        _
      // Predicated region
      $region41: #{forward.2} parent=23 // pred_check
        %p448 = pneg %p186
      $region42: #{forward.2} parent=23 // pred_check_branch
        %450 = sbr.rel (%p448) target = $region44
      $region43: #{forward.2} parent=23 // pred_region
        %p451 = scmp.lt.s32.totalorder %s20, 1
        %s452 = scalar_select %p451, %s20, 1
        %s453 = scalar_lea.vmem %s6, %s452
      $region44: #{forward.2} parent=23 // pred_fallthru
        _
      // Predicated region
      $region45: #{forward.2} parent=23 // pred_check
        %p454 = pneg %p212
      $region46: #{forward.2} parent=23 // pred_check_branch
        %456 = sbr.rel (%p454) target = $region48
      $region47: #{forward.2} parent=23 // pred_region
        %p457 = scmp.lt.s32.totalorder %s20, 1
        %s458 = scalar_select %p457, %s20, 1
        %s459 = scalar_lea.vmem %s7, %s458
      $region48: #{forward.2} parent=23 // pred_fallthru
        _
      // Predicated region
      $region49: #{forward.2} parent=23 // pred_check
        %p460 = pneg %p238
      $region50: #{forward.2} parent=23 // pred_check_branch
        %462 = sbr.rel (%p460) target = $region52
      $region51: #{forward.2} parent=23 // pred_region
        %p463 = scmp.lt.s32.totalorder %s20, 1
        %s464 = scalar_select %p463, %s20, 1
        %s465 = scalar_lea.vmem %s8, %s464
      $region52: #{forward.2} parent=23 // pred_fallthru
        _
      // Predicated region
      $region53: #{forward.2} parent=23 // pred_check
        %p466 = pneg %p264
      $region54: #{forward.2} parent=23 // pred_check_branch
        %468 = sbr.rel (%p466) target = $region56
      $region55: #{forward.2} parent=23 // pred_region
        %p469 = scmp.lt.s32.totalorder %s20, 1
        %s470 = scalar_select %p469, %s20, 1
        %s471 = scalar_lea.vmem %s9, %s470
      $region56: #{forward.2} parent=23 // pred_fallthru
        _
      // Predicated region
      $region57: #{forward.2} parent=23 // pred_check
        %p472 = pneg %p290
      $region58: #{forward.2} parent=23 // pred_check_branch
        %474 = sbr.rel (%p472) target = $region60
      $region59: #{forward.2} parent=23 // pred_region
        %p475 = scmp.lt.s32.totalorder %s20, 1
        %s476 = scalar_select %p475, %s20, 1
        %s477 = smul.addr %s476, 4
        %s478 = smul.addr %s477, 8
        %s479 = scalar_lea.vmem %s10, %s478
      $region60: #{forward.2} parent=23 // pred_fallthru
        _
      // Predicated region
      $region61: #{forward.2} parent=23 // pred_check
        %p480 = pneg %p316
      $region62: #{forward.2} parent=23 // pred_check_branch
        %482 = sbr.rel (%p480) target = $region64
      $region63: #{forward.2} parent=23 // pred_region
        %p483 = scmp.lt.s32.totalorder %s20, 1
        %s484 = scalar_select %p483, %s20, 1
        %s485 = scalar_lea.vmem %s11, %s484
      $region64: #{forward.2} parent=23 // pred_fallthru
        _
      // Predicated region
      $region65: #{forward.2} parent=23 // pred_check
        %p486 = pneg %p342
      $region66: #{forward.2} parent=23 // pred_check_branch
        %488 = sbr.rel (%p486) target = $region68
      $region67: #{forward.2} parent=23 // pred_region
        %p489 = scmp.lt.s32.totalorder %s20, 1
        %s490 = scalar_select %p489, %s20, 1
        %s491 = smul.addr %s490, 8
        %s492 = smul.addr %s491, 8
        %s493 = scalar_lea.vmem %s12, %s492
      $region68: #{forward.2} parent=23 // pred_fallthru
        _
      // Predicated region
      $region69: #{forward.2} parent=23 // pred_check
        %p494 = pneg %p368
      $region70: #{forward.2} parent=23 // pred_check_branch
        %496 = sbr.rel (%p494) target = $region72
      $region71: #{forward.2} parent=23 // pred_region
        %p497 = scmp.lt.s32.totalorder %s20, 1
        %s498 = scalar_select %p497, %s20, 1
        %s499 = scalar_lea.vmem %s13, %s498
      $region72: #{forward.2} parent=23 // pred_fallthru
        _
    $region24: #{forward.2} parent=5 // pred_fallthru
      _
    %p500 = scmp.le.s32.totalorder 1, %s20
    %p501 = scmp.lt.s32.totalorder %s20, 3
    %p502 = pnand %p500, %p501
    %p503 = pneg %p502
    // Predicated region
    $region73: #{forward.2} parent=5 // pred_check
      _
    $region74: #{forward.2} parent=5 // pred_check_branch
      %505 = sbr.rel (%p502) target = $region76
    $region75: #{forward.2} parent=5 // pred_region
      %s506 = ssub.s32 %s20, 1
      %p507 = pneg %p41
      %p508 = pneg %p38
      %p509 = pneg %p62
      %p510 = pneg %p59
      %p511 = scmp.lt.s32.totalorder %s25, 1
      %s512 = scalar_select %p511, %s25, 1
      %s513 = smul.addr %s512, 4
      %s514 = smul.addr %s513, 8
      %s515 = scalar_lea.vmem %s2, %s514
      %p516 = pneg %p88
      %p517 = pneg %p85
      %p518 = scmp.lt.s32.totalorder %s25, 1
      %s519 = scalar_select %p518, %s25, 1
      %s520 = scalar_lea.vmem %s3, %s519
      %p521 = pneg %p114
      %p522 = pneg %p111
      %p523 = scmp.lt.s32.totalorder %s25, 1
      %s524 = scalar_select %p523, %s25, 1
      %s525 = smul.addr %s524, 4
      %s526 = smul.addr %s525, 8
      %s527 = scalar_lea.vmem %s4, %s526
      %p528 = pneg %p140
      %p529 = pneg %p137
      %p530 = scmp.lt.s32.totalorder %s25, 1
      %s531 = scalar_select %p530, %s25, 1
      %s532 = scalar_lea.vmem %s5, %s531
      %p533 = pneg %p166
      %p534 = pneg %p163
      %p535 = scmp.lt.s32.totalorder %s25, 1
      %s536 = scalar_select %p535, %s25, 1
      %s537 = scalar_lea.vmem %s6, %s536
      %p538 = pneg %p192
      %p539 = pneg %p189
      %p540 = scmp.lt.s32.totalorder %s25, 1
      %s541 = scalar_select %p540, %s25, 1
      %s542 = scalar_lea.vmem %s7, %s541
      %p543 = pneg %p218
      %p544 = pneg %p215
      %p545 = scmp.lt.s32.totalorder %s25, 1
      %s546 = scalar_select %p545, %s25, 1
      %s547 = scalar_lea.vmem %s8, %s546
      %p548 = pneg %p244
      %p549 = pneg %p241
      %p550 = scmp.lt.s32.totalorder %s25, 1
      %s551 = scalar_select %p550, %s25, 1
      %s552 = scalar_lea.vmem %s9, %s551
      %p553 = pneg %p270
      %p554 = pneg %p267
      %p555 = scmp.lt.s32.totalorder %s25, 1
      %s556 = scalar_select %p555, %s25, 1
      %s557 = smul.addr %s556, 4
      %s558 = smul.addr %s557, 8
      %s559 = scalar_lea.vmem %s10, %s558
      %p560 = pneg %p296
      %p561 = pneg %p293
      %p562 = scmp.lt.s32.totalorder %s25, 1
      %s563 = scalar_select %p562, %s25, 1
      %s564 = scalar_lea.vmem %s11, %s563
      %p565 = pneg %p322
      %p566 = pneg %p319
      %p567 = scmp.lt.s32.totalorder %s25, 1
      %s568 = scalar_select %p567, %s25, 1
      %s569 = smul.addr %s568, 8
      %s570 = smul.addr %s569, 8
      %s571 = scalar_lea.vmem %s12, %s570
      %p572 = pneg %p348
      %p573 = pneg %p345
      %p574 = scmp.lt.s32.totalorder %s25, 1
      %s575 = scalar_select %p574, %s25, 1
      %s576 = scalar_lea.vmem %s13, %s575
      %p577 = pneg %p374
      %p578 = pneg %p371
      %p579 = pneg %p395
      %p580 = pneg %p392
      %p581 = scmp.lt.s32.totalorder %s25, 1
      %s582 = scalar_select %p581, %s25, 1
      %s583 = smul.addr %s582, 4
      %s584 = smul.addr %s583, 8
      %s585 = scalar_lea.vmem %s2, %s584
      %p586 = scmp.lt.s32.totalorder %s25, 1
      %s587 = scalar_select %p586, %s25, 1
      %s588 = scalar_lea.vmem %s3, %s587
      %p589 = scmp.lt.s32.totalorder %s25, 1
      %s590 = scalar_select %p589, %s25, 1
      %s591 = smul.addr %s590, 4
      %s592 = smul.addr %s591, 8
      %s593 = scalar_lea.vmem %s4, %s592
      %p594 = scmp.lt.s32.totalorder %s25, 1
      %s595 = scalar_select %p594, %s25, 1
      %s596 = scalar_lea.vmem %s5, %s595
      %p597 = scmp.lt.s32.totalorder %s25, 1
      %s598 = scalar_select %p597, %s25, 1
      %s599 = scalar_lea.vmem %s6, %s598
      %p600 = scmp.lt.s32.totalorder %s25, 1
      %s601 = scalar_select %p600, %s25, 1
      %s602 = scalar_lea.vmem %s7, %s601
      %p603 = scmp.lt.s32.totalorder %s25, 1
      %s604 = scalar_select %p603, %s25, 1
      %s605 = scalar_lea.vmem %s8, %s604
      %p606 = scmp.lt.s32.totalorder %s25, 1
      %s607 = scalar_select %p606, %s25, 1
      %s608 = scalar_lea.vmem %s9, %s607
      %p609 = scmp.lt.s32.totalorder %s25, 1
      %s610 = scalar_select %p609, %s25, 1
      %s611 = smul.addr %s610, 4
      %s612 = smul.addr %s611, 8
      %s613 = scalar_lea.vmem %s10, %s612
      %p614 = scmp.lt.s32.totalorder %s25, 1
      %s615 = scalar_select %p614, %s25, 1
      %s616 = scalar_lea.vmem %s11, %s615
      %p617 = scmp.lt.s32.totalorder %s25, 1
      %s618 = scalar_select %p617, %s25, 1
      %s619 = smul.addr %s618, 8
      %s620 = smul.addr %s619, 8
      %s621 = scalar_lea.vmem %s12, %s620
      %p622 = scmp.lt.s32.totalorder %s25, 1
      %s623 = scalar_select %p622, %s25, 1
      %s624 = scalar_lea.vmem %s13, %s623
      %p625 = scmp.eq.s32.totalorder %s25, 0
      // Predicated region
      $region77: #{forward.2} parent=75 // pred_check
        %p626 = pneg %p625
      $region78: #{forward.2} parent=75 // pred_check_branch
        %628 = sbr.rel (%p626) target = $region80
      $region79: #{forward.2} parent=75 // pred_region
        %v629 = vld [vmem:[%s0] sm:$0xff]
        %v630 = vld [vmem:[%s0 + $0x8] sm:$0xff]
        %vm631 = vcmask 261120
        %632 = vst.msk [vmem:[%s14] sm:$0xff] %vm631, %v629
        %633 = vst.msk [vmem:[%s14 + $0x8] sm:$0xff] %vm631, %v630
      $region80: #{forward.2} parent=75 // pred_fallthru
        _
      %v634 = vld [vmem:[%s14] sm:$0xff]
      %v635 = vld [vmem:[%s14 + $0x8] sm:$0xff]
      %v636 = vld [vmem:[%s585] sm:$0xff]
      %v637 = vld [vmem:[%s585 + $0x8] sm:$0xff]
      %v638 = vld [vmem:[%s585 + $0x10] sm:$0xff]
      %v639 = vld [vmem:[%s585 + $0x18] sm:$0xff]
      %v640 = vld [vmem:[%s588] sm:$0x1]
      %v642 = vlaneseq
      %v643 = vshrl.u32 %v642, 7
      %v644 = vsub.s32 0, %v643
      %v645 = vrot.slane %v640, %v644
      %vm647 = vcmask 261120
      %v649 = vsel %vm647, %v634, 0
      %v652 = vsel %vm647, %v635, 0
      %654 = vmatprep.subr.mxu0 0.0
      %655 = vmatpush1.msra.mxu0 %v636
      %656 = vmatprep.subr.mxu0 0.0
      %657 = vmatpush1.msra.mxu0 %v637
      %658 = vmatprep.subr.mxu0 0.0
      %659 = vmatpush1.msra.mxu0 %v638
      %660 = vmatprep.subr.mxu0 0.0
      %661 = vmatpush1.msra.mxu0 %v639
      %662 = vmatprep.subr.mxu0 0.0
      %663 = vmatpush1.msra.mxu0 0.0
      %664 = vmatprep.subr.mxu0 0.0
      %665 = vmatpush1.msra.mxu0 0.0
      %666 = vmatprep.subr.mxu0 0.0
      %667 = vmatpush1.msra.mxu0 0.0
      %668 = vmatprep.subr.mxu0 0.0
      %669 = vmatpush1.msra.mxu0 0.0
      %670 = vmatprep.subr.mxu0 0.0
      %671 = vmatpush1.msra.mxu0 0.0
      %672 = vmatprep.subr.mxu0 0.0
      %673 = vmatpush1.msra.mxu0 0.0
      %674 = vmatprep.subr.mxu0 0.0
      %675 = vmatpush1.msra.mxu0 0.0
      %676 = vmatprep.subr.mxu0 0.0
      %677 = vmatpush1.msra.mxu0 0.0
      %678 = vmatprep.subr.mxu0 0.0
      %679 = vmatpush1.msra.mxu0 0.0
      %680 = vmatprep.subr.mxu0 0.0
      %681 = vmatpush1.msra.mxu0 0.0
      %682 = vmatprep.subr.mxu0 0.0
      %683 = vmatpush1.msra.mxu0 0.0
      %684 = vmatprep.subr.mxu0 0.0
      %685 = vmatpush1.msra.mxu0 0.0
      %686 = vmatprep.subr.mxu0 0.0
      %687 = vmatpush1.msra.mxu0 0.0
      %688 = vmatprep.subr.mxu0 0.0
      %689 = vmatpush1.msra.mxu0 0.0
      %690 = vmatprep.subr.mxu0 0.0
      %691 = vmatpush1.msra.mxu0 0.0
      %692 = vmatprep.subr.mxu0 0.0
      %693 = vmatpush1.msra.mxu0 0.0
      %694 = vmatprep.subr.mxu0 0.0
      %695 = vmatpush1.msra.mxu0 0.0
      %696 = vmatprep.subr.mxu0 0.0
      %697 = vmatpush1.msra.mxu0 0.0
      %698 = vmatprep.subr.mxu0 0.0
      %699 = vmatpush1.msra.mxu0 0.0
      %700 = vmatprep.subr.mxu0 0.0
      %701 = vmatpush1.msra.mxu0 0.0
      %702 = vmatprep.subr.mxu0 0.0
      %703 = vmatpush1.msra.mxu0 0.0
      %704 = vmatprep.subr.mxu0 0.0
      %705 = vmatpush1.msra.mxu0 0.0
      %706 = vmatprep.subr.mxu0 0.0
      %707 = vmatpush1.msra.mxu0 0.0
      %708 = vmatprep.subr.mxu0 0.0
      %709 = vmatpush1.msra.mxu0 0.0
      %710 = vmatprep.subr.mxu0 0.0
      %711 = vmatpush1.msra.mxu0 0.0
      %712 = vmatprep.subr.mxu0 0.0
      %713 = vmatpush1.msra.mxu0 0.0
      %714 = vmatprep.subr.mxu0 0.0
      %715 = vmatpush1.msra.mxu0 0.0
      %716 = vmatprep.subr.mxu0 0.0
      %717 = vmatpush1.msra.mxu0 0.0
      %718 = vmatprep.mubr.f32.mxu0 0.0
      %719 = vmatmul.mubr.f32.gmra.mrb[0].mxu0 %v649
      %v720 = vpop.f32.mrb[0].mxu0
      %v721 = vadd.f32 %v645, %v720
      %v722 = vpop.f32.mrb[0].mxu0
      %723 = vmatprep.mubr.f32.mxu0 0.0
      %724 = vmatmul.mubr.f32.gmra.mrb[0].mxu0 %v652
      %v725 = vpop.f32.mrb[0].mxu0
      %v726 = vadd.f32 %v645, %v725
      %v727 = vpop.f32.mrb[0].mxu0
      %728 = vdwg.mxu0
      %v729 = vld [vmem:[%s1] sm:$0x1]
      %v730 = vld [vmem:[%s1 + $0x1] sm:$0x1]
      %v731 = vmul.f32 %v721, 0.35355338
      %v732 = vmul.f32 %v726, 0.35355338
      %v735 = vlaneseq
      %v736 = vshrl.u32 %v735, 7
      %v737 = vsub.s32 0, %v736
      %v738 = vrot.slane %v729, %v737
      %v739 = vlaneseq
      %v740 = vshrl.u32 %v739, 7
      %v741 = vsub.s32 0, %v740
      %v742 = vrot.slane %v730, %v741
      %746 = vrot.lane.b32.xlu0 %v721, 96
      %v747 = vpop.permute.xlu0 %746
      %vm748 = vcmask 64512
      %v750 = vsel %vm748, %v731, 0
      %v752 = vsel %vm748, %v747, 0
      %754 = vmatprep.subr.mxu0 0.0
      %755 = vmatpush1.xpose.msra.mxu0 %v752
      %756 = vmatprep.subr.mxu0 0.0
      %757 = vmatpush1.xpose.msra.mxu0 0.0
      %758 = vmatprep.subr.mxu0 0.0
      %759 = vmatpush1.xpose.msra.mxu0 0.0
      %760 = vmatprep.subr.mxu0 0.0
      %761 = vmatpush1.xpose.msra.mxu0 0.0
      %762 = vmatprep.subr.mxu0 0.0
      %763 = vmatpush1.xpose.msra.mxu0 0.0
      %764 = vmatprep.subr.mxu0 0.0
      %765 = vmatpush1.xpose.msra.mxu0 0.0
      %766 = vmatprep.subr.mxu0 0.0
      %767 = vmatpush1.xpose.msra.mxu0 0.0
      %768 = vmatprep.subr.mxu0 0.0
      %769 = vmatpush1.xpose.msra.mxu0 0.0
      %770 = vmatprep.subr.mxu0 0.0
      %771 = vmatpush1.xpose.msra.mxu0 0.0
      %772 = vmatprep.subr.mxu0 0.0
      %773 = vmatpush1.xpose.msra.mxu0 0.0
      %774 = vmatprep.subr.mxu0 0.0
      %775 = vmatpush1.xpose.msra.mxu0 0.0
      %776 = vmatprep.subr.mxu0 0.0
      %777 = vmatpush1.xpose.msra.mxu0 0.0
      %778 = vmatprep.subr.mxu0 0.0
      %779 = vmatpush1.xpose.msra.mxu0 0.0
      %780 = vmatprep.subr.mxu0 0.0
      %781 = vmatpush1.xpose.msra.mxu0 0.0
      %782 = vmatprep.subr.mxu0 0.0
      %783 = vmatpush1.xpose.msra.mxu0 0.0
      %784 = vmatprep.subr.mxu0 0.0
      %785 = vmatpush1.xpose.msra.mxu0 0.0
      %786 = vmatprep.subr.mxu0 0.0
      %787 = vmatpush1.xpose.msra.mxu0 0.0
      %788 = vmatprep.subr.mxu0 0.0
      %789 = vmatpush1.xpose.msra.mxu0 0.0
      %790 = vmatprep.subr.mxu0 0.0
      %791 = vmatpush1.xpose.msra.mxu0 0.0
      %792 = vmatprep.subr.mxu0 0.0
      %793 = vmatpush1.xpose.msra.mxu0 0.0
      %794 = vmatprep.subr.mxu0 0.0
      %795 = vmatpush1.xpose.msra.mxu0 0.0
      %796 = vmatprep.subr.mxu0 0.0
      %797 = vmatpush1.xpose.msra.mxu0 0.0
      %798 = vmatprep.subr.mxu0 0.0
      %799 = vmatpush1.xpose.msra.mxu0 0.0
      %800 = vmatprep.subr.mxu0 0.0
      %801 = vmatpush1.xpose.msra.mxu0 0.0
      %802 = vmatprep.subr.mxu0 0.0
      %803 = vmatpush1.xpose.msra.mxu0 0.0
      %804 = vmatprep.subr.mxu0 0.0
      %805 = vmatpush1.xpose.msra.mxu0 0.0
      %806 = vmatprep.subr.mxu0 0.0
      %807 = vmatpush1.xpose.msra.mxu0 0.0
      %808 = vmatprep.subr.mxu0 0.0
      %809 = vmatpush1.xpose.msra.mxu0 0.0
      %810 = vmatprep.subr.mxu0 0.0
      %811 = vmatpush1.xpose.msra.mxu0 0.0
      %812 = vmatprep.subr.mxu0 0.0
      %813 = vmatpush1.xpose.msra.mxu0 0.0
      %814 = vmatprep.subr.mxu0 0.0
      %815 = vmatpush1.xpose.msra.mxu0 0.0
      %816 = vmatprep.subr.mxu0 0.0
      %817 = vmatpush1.xpose.msra.mxu0 0.0
      %818 = vmatprep.mubr.f32.mxu0 0.0
      %819 = vmatmul.mubr.f32.gmra.mrb[0].mxu0 %v750
      %v820 = vpop.f32.mrb[0].mxu0
      %v821 = vadd.f32 %v738, %v820
      %v822 = vpop.f32.mrb[0].mxu0
      %823 = vdwg.mxu0
      %825 = vrot.lane.b32.xlu0 %v726, 96
      %v826 = vpop.permute.xlu0 %825
      %v828 = vsel %vm748, %v732, 0
      %v830 = vsel %vm748, %v826, 0
      %832 = vmatprep.subr.mxu0 0.0
      %833 = vmatpush1.xpose.msra.mxu0 %v830
      %834 = vmatprep.subr.mxu0 0.0
      %835 = vmatpush1.xpose.msra.mxu0 0.0
      %836 = vmatprep.subr.mxu0 0.0
      %837 = vmatpush1.xpose.msra.mxu0 0.0
      %838 = vmatprep.subr.mxu0 0.0
      %839 = vmatpush1.xpose.msra.mxu0 0.0
      %840 = vmatprep.subr.mxu0 0.0
      %841 = vmatpush1.xpose.msra.mxu0 0.0
      %842 = vmatprep.subr.mxu0 0.0
      %843 = vmatpush1.xpose.msra.mxu0 0.0
      %844 = vmatprep.subr.mxu0 0.0
      %845 = vmatpush1.xpose.msra.mxu0 0.0
      %846 = vmatprep.subr.mxu0 0.0
      %847 = vmatpush1.xpose.msra.mxu0 0.0
      %848 = vmatprep.subr.mxu0 0.0
      %849 = vmatpush1.xpose.msra.mxu0 0.0
      %850 = vmatprep.subr.mxu0 0.0
      %851 = vmatpush1.xpose.msra.mxu0 0.0
      %852 = vmatprep.subr.mxu0 0.0
      %853 = vmatpush1.xpose.msra.mxu0 0.0
      %854 = vmatprep.subr.mxu0 0.0
      %855 = vmatpush1.xpose.msra.mxu0 0.0
      %856 = vmatprep.subr.mxu0 0.0
      %857 = vmatpush1.xpose.msra.mxu0 0.0
      %858 = vmatprep.subr.mxu0 0.0
      %859 = vmatpush1.xpose.msra.mxu0 0.0
      %860 = vmatprep.subr.mxu0 0.0
      %861 = vmatpush1.xpose.msra.mxu0 0.0
      %862 = vmatprep.subr.mxu0 0.0
      %863 = vmatpush1.xpose.msra.mxu0 0.0
      %864 = vmatprep.subr.mxu0 0.0
      %865 = vmatpush1.xpose.msra.mxu0 0.0
      %866 = vmatprep.subr.mxu0 0.0
      %867 = vmatpush1.xpose.msra.mxu0 0.0
      %868 = vmatprep.subr.mxu0 0.0
      %869 = vmatpush1.xpose.msra.mxu0 0.0
      %870 = vmatprep.subr.mxu0 0.0
      %871 = vmatpush1.xpose.msra.mxu0 0.0
      %872 = vmatprep.subr.mxu0 0.0
      %873 = vmatpush1.xpose.msra.mxu0 0.0
      %874 = vmatprep.subr.mxu0 0.0
      %875 = vmatpush1.xpose.msra.mxu0 0.0
      %876 = vmatprep.subr.mxu0 0.0
      %877 = vmatpush1.xpose.msra.mxu0 0.0
      %878 = vmatprep.subr.mxu0 0.0
      %879 = vmatpush1.xpose.msra.mxu0 0.0
      %880 = vmatprep.subr.mxu0 0.0
      %881 = vmatpush1.xpose.msra.mxu0 0.0
      %882 = vmatprep.subr.mxu0 0.0
      %883 = vmatpush1.xpose.msra.mxu0 0.0
      %884 = vmatprep.subr.mxu0 0.0
      %885 = vmatpush1.xpose.msra.mxu0 0.0
      %886 = vmatprep.subr.mxu0 0.0
      %887 = vmatpush1.xpose.msra.mxu0 0.0
      %888 = vmatprep.subr.mxu0 0.0
      %889 = vmatpush1.xpose.msra.mxu0 0.0
      %890 = vmatprep.subr.mxu0 0.0
      %891 = vmatpush1.xpose.msra.mxu0 0.0
      %892 = vmatprep.subr.mxu0 0.0
      %893 = vmatpush1.xpose.msra.mxu0 0.0
      %894 = vmatprep.subr.mxu0 0.0
      %895 = vmatpush1.xpose.msra.mxu0 0.0
      %896 = vmatprep.mubr.f32.mxu0 0.0
      %897 = vmatmul.mubr.f32.gmra.mrb[0].mxu0 %v828
      %v898 = vpop.f32.mrb[0].mxu0
      %v899 = vadd.f32 %v742, %v898
      %v900 = vpop.f32.mrb[0].mxu0
      %901 = vdwg.mxu0
      %v902 = vsel %vm748, %v821, -inf
      %903 = vmax.xlane.f32.xlu0 %v902
      %v904 = vpop.xlane.xlu0 %903
      %v905 = vsel %vm748, %v899, -inf
      %906 = vmax.xlane.f32.xlu0 %v905
      %v907 = vpop.xlane.xlu0 %906
      %v908 = vsub.f32 %v821, %v904
      %v909 = vsub.f32 %v899, %v907
      %v910 = vmul.f32 %v908, 1.442695
      %v911 = vpow.pop %v910
      %v912 = vmul.f32 %v909, 1.442695
      %v913 = vpow.pop %v912
      %v914 = vsel %vm748, %v911, 0.0
      %915 = vadd.xlane.f32.xlu0 %v914
      %v916 = vpop.xlane.xlu0 %915
      %v917 = vsel %vm748, %v913, 0.0
      %918 = vadd.xlane.f32.xlu0 %v917
      %v919 = vpop.xlane.xlu0 %918
      %v920 = vrcp.pop %v916
      %v921 = vrcp.pop %v919
      %v922 = vmul.f32 %v911, %v920
      %v923 = vmul.f32 %v913, %v921
      %924 = vrot.lane.b32.xlu0 %v721, 64
      %v925 = vpop.permute.xlu0 %924
      %v928 = vsel %vm748, %v922, 0
      %930 = vmatprep.subr.mxu0 0.0
      %931 = vmatpush1.msra.mxu0 %v925
      %932 = vmatprep.subr.mxu0 0.0
      %933 = vmatpush1.msra.mxu0 0.0
      %934 = vmatprep.subr.mxu0 0.0
      %935 = vmatpush1.msra.mxu0 0.0
      %936 = vmatprep.subr.mxu0 0.0
      %937 = vmatpush1.msra.mxu0 0.0
      %938 = vmatprep.subr.mxu0 0.0
      %939 = vmatpush1.msra.mxu0 0.0
      %940 = vmatprep.subr.mxu0 0.0
      %941 = vmatpush1.msra.mxu0 0.0
      %942 = vmatprep.subr.mxu0 0.0
      %943 = vmatpush1.msra.mxu0 0.0
      %944 = vmatprep.subr.mxu0 0.0
      %945 = vmatpush1.msra.mxu0 0.0
      %946 = vmatprep.subr.mxu0 0.0
      %947 = vmatpush1.msra.mxu0 0.0
      %948 = vmatprep.subr.mxu0 0.0
      %949 = vmatpush1.msra.mxu0 0.0
      %950 = vmatprep.subr.mxu0 0.0
      %951 = vmatpush1.msra.mxu0 0.0
      %952 = vmatprep.subr.mxu0 0.0
      %953 = vmatpush1.msra.mxu0 0.0
      %954 = vmatprep.subr.mxu0 0.0
      %955 = vmatpush1.msra.mxu0 0.0
      %956 = vmatprep.subr.mxu0 0.0
      %957 = vmatpush1.msra.mxu0 0.0
      %958 = vmatprep.subr.mxu0 0.0
      %959 = vmatpush1.msra.mxu0 0.0
      %960 = vmatprep.subr.mxu0 0.0
      %961 = vmatpush1.msra.mxu0 0.0
      %962 = vmatprep.subr.mxu0 0.0
      %963 = vmatpush1.msra.mxu0 0.0
      %964 = vmatprep.subr.mxu0 0.0
      %965 = vmatpush1.msra.mxu0 0.0
      %966 = vmatprep.subr.mxu0 0.0
      %967 = vmatpush1.msra.mxu0 0.0
      %968 = vmatprep.subr.mxu0 0.0
      %969 = vmatpush1.msra.mxu0 0.0
      %970 = vmatprep.subr.mxu0 0.0
      %971 = vmatpush1.msra.mxu0 0.0
      %972 = vmatprep.subr.mxu0 0.0
      %973 = vmatpush1.msra.mxu0 0.0
      %974 = vmatprep.subr.mxu0 0.0
      %975 = vmatpush1.msra.mxu0 0.0
      %976 = vmatprep.subr.mxu0 0.0
      %977 = vmatpush1.msra.mxu0 0.0
      %978 = vmatprep.subr.mxu0 0.0
      %979 = vmatpush1.msra.mxu0 0.0
      %980 = vmatprep.subr.mxu0 0.0
      %981 = vmatpush1.msra.mxu0 0.0
      %982 = vmatprep.subr.mxu0 0.0
      %983 = vmatpush1.msra.mxu0 0.0
      %984 = vmatprep.subr.mxu0 0.0
      %985 = vmatpush1.msra.mxu0 0.0
      %986 = vmatprep.subr.mxu0 0.0
      %987 = vmatpush1.msra.mxu0 0.0
      %988 = vmatprep.subr.mxu0 0.0
      %989 = vmatpush1.msra.mxu0 0.0
      %990 = vmatprep.subr.mxu0 0.0
      %991 = vmatpush1.msra.mxu0 0.0
      %992 = vmatprep.subr.mxu0 0.0
      %993 = vmatpush1.msra.mxu0 0.0
      %994 = vmatprep.mubr.f32.mxu0 0.0
      %995 = vmatmul.mubr.f32.gmra.mrb[0].mxu0 %v928
      %v996 = vpop.f32.mrb[0].mxu0
      %v997 = vadd.f32 0.0, %v996
      %v998 = vpop.f32.mrb[0].mxu0
      %999 = vdwg.mxu0
      %1000 = vrot.lane.b32.xlu0 %v726, 64
      %v1001 = vpop.permute.xlu0 %1000
      %v1004 = vsel %vm748, %v923, 0
      %1006 = vmatprep.subr.mxu0 0.0
      %1007 = vmatpush1.msra.mxu0 %v1001
      %1008 = vmatprep.subr.mxu0 0.0
      %1009 = vmatpush1.msra.mxu0 0.0
      %1010 = vmatprep.subr.mxu0 0.0
      %1011 = vmatpush1.msra.mxu0 0.0
      %1012 = vmatprep.subr.mxu0 0.0
      %1013 = vmatpush1.msra.mxu0 0.0
      %1014 = vmatprep.subr.mxu0 0.0
      %1015 = vmatpush1.msra.mxu0 0.0
      %1016 = vmatprep.subr.mxu0 0.0
      %1017 = vmatpush1.msra.mxu0 0.0
      %1018 = vmatprep.subr.mxu0 0.0
      %1019 = vmatpush1.msra.mxu0 0.0
      %1020 = vmatprep.subr.mxu0 0.0
      %1021 = vmatpush1.msra.mxu0 0.0
      %1022 = vmatprep.subr.mxu0 0.0
      %1023 = vmatpush1.msra.mxu0 0.0
      %1024 = vmatprep.subr.mxu0 0.0
      %1025 = vmatpush1.msra.mxu0 0.0
      %1026 = vmatprep.subr.mxu0 0.0
      %1027 = vmatpush1.msra.mxu0 0.0
      %1028 = vmatprep.subr.mxu0 0.0
      %1029 = vmatpush1.msra.mxu0 0.0
      %1030 = vmatprep.subr.mxu0 0.0
      %1031 = vmatpush1.msra.mxu0 0.0
      %1032 = vmatprep.subr.mxu0 0.0
      %1033 = vmatpush1.msra.mxu0 0.0
      %1034 = vmatprep.subr.mxu0 0.0
      %1035 = vmatpush1.msra.mxu0 0.0
      %1036 = vmatprep.subr.mxu0 0.0
      %1037 = vmatpush1.msra.mxu0 0.0
      %1038 = vmatprep.subr.mxu0 0.0
      %1039 = vmatpush1.msra.mxu0 0.0
      %1040 = vmatprep.subr.mxu0 0.0
      %1041 = vmatpush1.msra.mxu0 0.0
      %1042 = vmatprep.subr.mxu0 0.0
      %1043 = vmatpush1.msra.mxu0 0.0
      %1044 = vmatprep.subr.mxu0 0.0
      %1045 = vmatpush1.msra.mxu0 0.0
      %1046 = vmatprep.subr.mxu0 0.0
      %1047 = vmatpush1.msra.mxu0 0.0
      %1048 = vmatprep.subr.mxu0 0.0
      %1049 = vmatpush1.msra.mxu0 0.0
      %1050 = vmatprep.subr.mxu0 0.0
      %1051 = vmatpush1.msra.mxu0 0.0
      %1052 = vmatprep.subr.mxu0 0.0
      %1053 = vmatpush1.msra.mxu0 0.0
      %1054 = vmatprep.subr.mxu0 0.0
      %1055 = vmatpush1.msra.mxu0 0.0
      %1056 = vmatprep.subr.mxu0 0.0
      %1057 = vmatpush1.msra.mxu0 0.0
      %1058 = vmatprep.subr.mxu0 0.0
      %1059 = vmatpush1.msra.mxu0 0.0
      %1060 = vmatprep.subr.mxu0 0.0
      %1061 = vmatpush1.msra.mxu0 0.0
      %1062 = vmatprep.subr.mxu0 0.0
      %1063 = vmatpush1.msra.mxu0 0.0
      %1064 = vmatprep.subr.mxu0 0.0
      %1065 = vmatpush1.msra.mxu0 0.0
      %1066 = vmatprep.subr.mxu0 0.0
      %1067 = vmatpush1.msra.mxu0 0.0
      %1068 = vmatprep.subr.mxu0 0.0
      %1069 = vmatpush1.msra.mxu0 0.0
      %1070 = vmatprep.mubr.f32.mxu0 0.0
      %1071 = vmatmul.mubr.f32.gmra.mrb[0].mxu0 %v1004
      %v1072 = vpop.f32.mrb[0].mxu0
      %v1073 = vadd.f32 0.0, %v1072
      %v1074 = vpop.f32.mrb[0].mxu0
      %1075 = vdwg.mxu0
      %1076 = vrot.lane.b32.xlu0 %v731, 120
      %v1077 = vpop.permute.xlu0 %1076
      %1078 = vrot.lane.b32.xlu0 %v721, 88
      %v1079 = vpop.permute.xlu0 %1078
      %v1080 = vsel %vm748, %v1077, 0
      %v1082 = vsel %vm748, %v1079, 0
      %1084 = vmatprep.subr.mxu0 0.0
      %1085 = vmatpush1.xpose.msra.mxu0 %v1082
      %1086 = vmatprep.subr.mxu0 0.0
      %1087 = vmatpush1.xpose.msra.mxu0 0.0
      %1088 = vmatprep.subr.mxu0 0.0
      %1089 = vmatpush1.xpose.msra.mxu0 0.0
      %1090 = vmatprep.subr.mxu0 0.0
      %1091 = vmatpush1.xpose.msra.mxu0 0.0
      %1092 = vmatprep.subr.mxu0 0.0
      %1093 = vmatpush1.xpose.msra.mxu0 0.0
      %1094 = vmatprep.subr.mxu0 0.0
      %1095 = vmatpush1.xpose.msra.mxu0 0.0
      %1096 = vmatprep.subr.mxu0 0.0
      %1097 = vmatpush1.xpose.msra.mxu0 0.0
      %1098 = vmatprep.subr.mxu0 0.0
      %1099 = vmatpush1.xpose.msra.mxu0 0.0
      %1100 = vmatprep.subr.mxu0 0.0
      %1101 = vmatpush1.xpose.msra.mxu0 0.0
      %1102 = vmatprep.subr.mxu0 0.0
      %1103 = vmatpush1.xpose.msra.mxu0 0.0
      %1104 = vmatprep.subr.mxu0 0.0
      %1105 = vmatpush1.xpose.msra.mxu0 0.0
      %1106 = vmatprep.subr.mxu0 0.0
      %1107 = vmatpush1.xpose.msra.mxu0 0.0
      %1108 = vmatprep.subr.mxu0 0.0
      %1109 = vmatpush1.xpose.msra.mxu0 0.0
      %1110 = vmatprep.subr.mxu0 0.0
      %1111 = vmatpush1.xpose.msra.mxu0 0.0
      %1112 = vmatprep.subr.mxu0 0.0
      %1113 = vmatpush1.xpose.msra.mxu0 0.0
      %1114 = vmatprep.subr.mxu0 0.0
      %1115 = vmatpush1.xpose.msra.mxu0 0.0
      %1116 = vmatprep.subr.mxu0 0.0
      %1117 = vmatpush1.xpose.msra.mxu0 0.0
      %1118 = vmatprep.subr.mxu0 0.0
      %1119 = vmatpush1.xpose.msra.mxu0 0.0
      %1120 = vmatprep.subr.mxu0 0.0
      %1121 = vmatpush1.xpose.msra.mxu0 0.0
      %1122 = vmatprep.subr.mxu0 0.0
      %1123 = vmatpush1.xpose.msra.mxu0 0.0
      %1124 = vmatprep.subr.mxu0 0.0
      %1125 = vmatpush1.xpose.msra.mxu0 0.0
      %1126 = vmatprep.subr.mxu0 0.0
      %1127 = vmatpush1.xpose.msra.mxu0 0.0
      %1128 = vmatprep.subr.mxu0 0.0
      %1129 = vmatpush1.xpose.msra.mxu0 0.0
      %1130 = vmatprep.subr.mxu0 0.0
      %1131 = vmatpush1.xpose.msra.mxu0 0.0
      %1132 = vmatprep.subr.mxu0 0.0
      %1133 = vmatpush1.xpose.msra.mxu0 0.0
      %1134 = vmatprep.subr.mxu0 0.0
      %1135 = vmatpush1.xpose.msra.mxu0 0.0
      %1136 = vmatprep.subr.mxu0 0.0
      %1137 = vmatpush1.xpose.msra.mxu0 0.0
      %1138 = vmatprep.subr.mxu0 0.0
      %1139 = vmatpush1.xpose.msra.mxu0 0.0
      %1140 = vmatprep.subr.mxu0 0.0
      %1141 = vmatpush1.xpose.msra.mxu0 0.0
      %1142 = vmatprep.subr.mxu0 0.0
      %1143 = vmatpush1.xpose.msra.mxu0 0.0
      %1144 = vmatprep.subr.mxu0 0.0
      %1145 = vmatpush1.xpose.msra.mxu0 0.0
      %1146 = vmatprep.subr.mxu0 0.0
      %1147 = vmatpush1.xpose.msra.mxu0 0.0
      %1148 = vmatprep.mubr.f32.mxu0 0.0
      %1149 = vmatmul.mubr.f32.gmra.mrb[0].mxu0 %v1080
      %v1150 = vpop.f32.mrb[0].mxu0
      %v1151 = vadd.f32 %v738, %v1150
      %v1152 = vpop.f32.mrb[0].mxu0
      %1153 = vdwg.mxu0
      %1154 = vrot.lane.b32.xlu0 %v732, 120
      %v1155 = vpop.permute.xlu0 %1154
      %1156 = vrot.lane.b32.xlu0 %v726, 88
      %v1157 = vpop.permute.xlu0 %1156
      %v1158 = vsel %vm748, %v1155, 0
      %v1160 = vsel %vm748, %v1157, 0
      %1162 = vmatprep.subr.mxu0 0.0
      %1163 = vmatpush1.xpose.msra.mxu0 %v1160
      %1164 = vmatprep.subr.mxu0 0.0
      %1165 = vmatpush1.xpose.msra.mxu0 0.0
      %1166 = vmatprep.subr.mxu0 0.0
      %1167 = vmatpush1.xpose.msra.mxu0 0.0
      %1168 = vmatprep.subr.mxu0 0.0
      %1169 = vmatpush1.xpose.msra.mxu0 0.0
      %1170 = vmatprep.subr.mxu0 0.0
      %1171 = vmatpush1.xpose.msra.mxu0 0.0
      %1172 = vmatprep.subr.mxu0 0.0
      %1173 = vmatpush1.xpose.msra.mxu0 0.0
      %1174 = vmatprep.subr.mxu0 0.0
      %1175 = vmatpush1.xpose.msra.mxu0 0.0
      %1176 = vmatprep.subr.mxu0 0.0
      %1177 = vmatpush1.xpose.msra.mxu0 0.0
      %1178 = vmatprep.subr.mxu0 0.0
      %1179 = vmatpush1.xpose.msra.mxu0 0.0
      %1180 = vmatprep.subr.mxu0 0.0
      %1181 = vmatpush1.xpose.msra.mxu0 0.0
      %1182 = vmatprep.subr.mxu0 0.0
      %1183 = vmatpush1.xpose.msra.mxu0 0.0
      %1184 = vmatprep.subr.mxu0 0.0
      %1185 = vmatpush1.xpose.msra.mxu0 0.0
      %1186 = vmatprep.subr.mxu0 0.0
      %1187 = vmatpush1.xpose.msra.mxu0 0.0
      %1188 = vmatprep.subr.mxu0 0.0
      %1189 = vmatpush1.xpose.msra.mxu0 0.0
      %1190 = vmatprep.subr.mxu0 0.0
      %1191 = vmatpush1.xpose.msra.mxu0 0.0
      %1192 = vmatprep.subr.mxu0 0.0
      %1193 = vmatpush1.xpose.msra.mxu0 0.0
      %1194 = vmatprep.subr.mxu0 0.0
      %1195 = vmatpush1.xpose.msra.mxu0 0.0
      %1196 = vmatprep.subr.mxu0 0.0
      %1197 = vmatpush1.xpose.msra.mxu0 0.0
      %1198 = vmatprep.subr.mxu0 0.0
      %1199 = vmatpush1.xpose.msra.mxu0 0.0
      %1200 = vmatprep.subr.mxu0 0.0
      %1201 = vmatpush1.xpose.msra.mxu0 0.0
      %1202 = vmatprep.subr.mxu0 0.0
      %1203 = vmatpush1.xpose.msra.mxu0 0.0
      %1204 = vmatprep.subr.mxu0 0.0
      %1205 = vmatpush1.xpose.msra.mxu0 0.0
      %1206 = vmatprep.subr.mxu0 0.0
      %1207 = vmatpush1.xpose.msra.mxu0 0.0
      %1208 = vmatprep.subr.mxu0 0.0
      %1209 = vmatpush1.xpose.msra.mxu0 0.0
      %1210 = vmatprep.subr.mxu0 0.0
      %1211 = vmatpush1.xpose.msra.mxu0 0.0
      %1212 = vmatprep.subr.mxu0 0.0
      %1213 = vmatpush1.xpose.msra.mxu0 0.0
      %1214 = vmatprep.subr.mxu0 0.0
      %1215 = vmatpush1.xpose.msra.mxu0 0.0
      %1216 = vmatprep.subr.mxu0 0.0
      %1217 = vmatpush1.xpose.msra.mxu0 0.0
      %1218 = vmatprep.subr.mxu0 0.0
      %1219 = vmatpush1.xpose.msra.mxu0 0.0
      %1220 = vmatprep.subr.mxu0 0.0
      %1221 = vmatpush1.xpose.msra.mxu0 0.0
      %1222 = vmatprep.subr.mxu0 0.0
      %1223 = vmatpush1.xpose.msra.mxu0 0.0
      %1224 = vmatprep.subr.mxu0 0.0
      %1225 = vmatpush1.xpose.msra.mxu0 0.0
      %1226 = vmatprep.mubr.f32.mxu0 0.0
      %1227 = vmatmul.mubr.f32.gmra.mrb[0].mxu0 %v1158
      %v1228 = vpop.f32.mrb[0].mxu0
      %v1229 = vadd.f32 %v742, %v1228
      %v1230 = vpop.f32.mrb[0].mxu0
      %1231 = vdwg.mxu0
      %v1232 = vsel %vm748, %v1151, -inf
      %1233 = vmax.xlane.f32.xlu0 %v1232
      %v1234 = vpop.xlane.xlu0 %1233
      %v1235 = vsel %vm748, %v1229, -inf
      %1236 = vmax.xlane.f32.xlu0 %v1235
      %v1237 = vpop.xlane.xlu0 %1236
      %v1238 = vsub.f32 %v1151, %v1234
      %v1239 = vsub.f32 %v1229, %v1237
      %v1240 = vmul.f32 %v1238, 1.442695
      %v1241 = vpow.pop %v1240
      %v1242 = vmul.f32 %v1239, 1.442695
      %v1243 = vpow.pop %v1242
      %v1244 = vsel %vm748, %v1241, 0.0
      %1245 = vadd.xlane.f32.xlu0 %v1244
      %v1246 = vpop.xlane.xlu0 %1245
      %v1247 = vsel %vm748, %v1243, 0.0
      %1248 = vadd.xlane.f32.xlu0 %v1247
      %v1249 = vpop.xlane.xlu0 %1248
      %v1250 = vrcp.pop %v1246
      %v1251 = vrcp.pop %v1249
      %v1252 = vmul.f32 %v1241, %v1250
      %v1253 = vmul.f32 %v1243, %v1251
      %1254 = vrot.lane.b32.xlu0 %v721, 56
      %v1255 = vpop.permute.xlu0 %1254
      %v1258 = vsel %vm748, %v1252, 0
      %1260 = vmatprep.subr.mxu0 0.0
      %1261 = vmatpush1.msra.mxu0 %v1255
      %1262 = vmatprep.subr.mxu0 0.0
      %1263 = vmatpush1.msra.mxu0 0.0
      %1264 = vmatprep.subr.mxu0 0.0
      %1265 = vmatpush1.msra.mxu0 0.0
      %1266 = vmatprep.subr.mxu0 0.0
      %1267 = vmatpush1.msra.mxu0 0.0
      %1268 = vmatprep.subr.mxu0 0.0
      %1269 = vmatpush1.msra.mxu0 0.0
      %1270 = vmatprep.subr.mxu0 0.0
      %1271 = vmatpush1.msra.mxu0 0.0
      %1272 = vmatprep.subr.mxu0 0.0
      %1273 = vmatpush1.msra.mxu0 0.0
      %1274 = vmatprep.subr.mxu0 0.0
      %1275 = vmatpush1.msra.mxu0 0.0
      %1276 = vmatprep.subr.mxu0 0.0
      %1277 = vmatpush1.msra.mxu0 0.0
      %1278 = vmatprep.subr.mxu0 0.0
      %1279 = vmatpush1.msra.mxu0 0.0
      %1280 = vmatprep.subr.mxu0 0.0
      %1281 = vmatpush1.msra.mxu0 0.0
      %1282 = vmatprep.subr.mxu0 0.0
      %1283 = vmatpush1.msra.mxu0 0.0
      %1284 = vmatprep.subr.mxu0 0.0
      %1285 = vmatpush1.msra.mxu0 0.0
      %1286 = vmatprep.subr.mxu0 0.0
      %1287 = vmatpush1.msra.mxu0 0.0
      %1288 = vmatprep.subr.mxu0 0.0
      %1289 = vmatpush1.msra.mxu0 0.0
      %1290 = vmatprep.subr.mxu0 0.0
      %1291 = vmatpush1.msra.mxu0 0.0
      %1292 = vmatprep.subr.mxu0 0.0
      %1293 = vmatpush1.msra.mxu0 0.0
      %1294 = vmatprep.subr.mxu0 0.0
      %1295 = vmatpush1.msra.mxu0 0.0
      %1296 = vmatprep.subr.mxu0 0.0
      %1297 = vmatpush1.msra.mxu0 0.0
      %1298 = vmatprep.subr.mxu0 0.0
      %1299 = vmatpush1.msra.mxu0 0.0
      %1300 = vmatprep.subr.mxu0 0.0
      %1301 = vmatpush1.msra.mxu0 0.0
      %1302 = vmatprep.subr.mxu0 0.0
      %1303 = vmatpush1.msra.mxu0 0.0
      %1304 = vmatprep.subr.mxu0 0.0
      %1305 = vmatpush1.msra.mxu0 0.0
      %1306 = vmatprep.subr.mxu0 0.0
      %1307 = vmatpush1.msra.mxu0 0.0
      %1308 = vmatprep.subr.mxu0 0.0
      %1309 = vmatpush1.msra.mxu0 0.0
      %1310 = vmatprep.subr.mxu0 0.0
      %1311 = vmatpush1.msra.mxu0 0.0
      %1312 = vmatprep.subr.mxu0 0.0
      %1313 = vmatpush1.msra.mxu0 0.0
      %1314 = vmatprep.subr.mxu0 0.0
      %1315 = vmatpush1.msra.mxu0 0.0
      %1316 = vmatprep.subr.mxu0 0.0
      %1317 = vmatpush1.msra.mxu0 0.0
      %1318 = vmatprep.subr.mxu0 0.0
      %1319 = vmatpush1.msra.mxu0 0.0
      %1320 = vmatprep.subr.mxu0 0.0
      %1321 = vmatpush1.msra.mxu0 0.0
      %1322 = vmatprep.subr.mxu0 0.0
      %1323 = vmatpush1.msra.mxu0 0.0
      %1324 = vmatprep.mubr.f32.mxu0 0.0
      %1325 = vmatmul.mubr.f32.gmra.mrb[0].mxu0 %v1258
      %v1326 = vpop.f32.mrb[0].mxu0
      %v1327 = vadd.f32 0.0, %v1326
      %v1328 = vpop.f32.mrb[0].mxu0
      %1329 = vdwg.mxu0
      %1330 = vrot.lane.b32.xlu0 %v726, 56
      %v1331 = vpop.permute.xlu0 %1330
      %v1334 = vsel %vm748, %v1253, 0
      %1336 = vmatprep.subr.mxu0 0.0
      %1337 = vmatpush1.msra.mxu0 %v1331
      %1338 = vmatprep.subr.mxu0 0.0
      %1339 = vmatpush1.msra.mxu0 0.0
      %1340 = vmatprep.subr.mxu0 0.0
      %1341 = vmatpush1.msra.mxu0 0.0
      %1342 = vmatprep.subr.mxu0 0.0
      %1343 = vmatpush1.msra.mxu0 0.0
      %1344 = vmatprep.subr.mxu0 0.0
      %1345 = vmatpush1.msra.mxu0 0.0
      %1346 = vmatprep.subr.mxu0 0.0
      %1347 = vmatpush1.msra.mxu0 0.0
      %1348 = vmatprep.subr.mxu0 0.0
      %1349 = vmatpush1.msra.mxu0 0.0
      %1350 = vmatprep.subr.mxu0 0.0
      %1351 = vmatpush1.msra.mxu0 0.0
      %1352 = vmatprep.subr.mxu0 0.0
      %1353 = vmatpush1.msra.mxu0 0.0
      %1354 = vmatprep.subr.mxu0 0.0
      %1355 = vmatpush1.msra.mxu0 0.0
      %1356 = vmatprep.subr.mxu0 0.0
      %1357 = vmatpush1.msra.mxu0 0.0
      %1358 = vmatprep.subr.mxu0 0.0
      %1359 = vmatpush1.msra.mxu0 0.0
      %1360 = vmatprep.subr.mxu0 0.0
      %1361 = vmatpush1.msra.mxu0 0.0
      %1362 = vmatprep.subr.mxu0 0.0
      %1363 = vmatpush1.msra.mxu0 0.0
      %1364 = vmatprep.subr.mxu0 0.0
      %1365 = vmatpush1.msra.mxu0 0.0
      %1366 = vmatprep.subr.mxu0 0.0
      %1367 = vmatpush1.msra.mxu0 0.0
      %1368 = vmatprep.subr.mxu0 0.0
      %1369 = vmatpush1.msra.mxu0 0.0
      %1370 = vmatprep.subr.mxu0 0.0
      %1371 = vmatpush1.msra.mxu0 0.0
      %1372 = vmatprep.subr.mxu0 0.0
      %1373 = vmatpush1.msra.mxu0 0.0
      %1374 = vmatprep.subr.mxu0 0.0
      %1375 = vmatpush1.msra.mxu0 0.0
      %1376 = vmatprep.subr.mxu0 0.0
      %1377 = vmatpush1.msra.mxu0 0.0
      %1378 = vmatprep.subr.mxu0 0.0
      %1379 = vmatpush1.msra.mxu0 0.0
      %1380 = vmatprep.subr.mxu0 0.0
      %1381 = vmatpush1.msra.mxu0 0.0
      %1382 = vmatprep.subr.mxu0 0.0
      %1383 = vmatpush1.msra.mxu0 0.0
      %1384 = vmatprep.subr.mxu0 0.0
      %1385 = vmatpush1.msra.mxu0 0.0
      %1386 = vmatprep.subr.mxu0 0.0
      %1387 = vmatpush1.msra.mxu0 0.0
      %1388 = vmatprep.subr.mxu0 0.0
      %1389 = vmatpush1.msra.mxu0 0.0
      %1390 = vmatprep.subr.mxu0 0.0
      %1391 = vmatpush1.msra.mxu0 0.0
      %1392 = vmatprep.subr.mxu0 0.0
      %1393 = vmatpush1.msra.mxu0 0.0
      %1394 = vmatprep.subr.mxu0 0.0
      %1395 = vmatpush1.msra.mxu0 0.0
      %1396 = vmatprep.subr.mxu0 0.0
      %1397 = vmatpush1.msra.mxu0 0.0
      %1398 = vmatprep.subr.mxu0 0.0
      %1399 = vmatpush1.msra.mxu0 0.0
      %1400 = vmatprep.mubr.f32.mxu0 0.0
      %1401 = vmatmul.mubr.f32.gmra.mrb[0].mxu0 %v1334
      %v1402 = vpop.f32.mrb[0].mxu0
      %v1403 = vadd.f32 0.0, %v1402
      %v1404 = vpop.f32.mrb[0].mxu0
      %1405 = vdwg.mxu0
      %1406 = vrot.lane.b32.xlu0 %v731, 112
      %v1407 = vpop.permute.xlu0 %1406
      %1408 = vrot.lane.b32.xlu0 %v721, 80
      %v1409 = vpop.permute.xlu0 %1408
      %v1410 = vsel %vm748, %v1407, 0
      %v1412 = vsel %vm748, %v1409, 0
      %1414 = vmatprep.subr.mxu0 0.0
      %1415 = vmatpush1.xpose.msra.mxu0 %v1412
      %1416 = vmatprep.subr.mxu0 0.0
      %1417 = vmatpush1.xpose.msra.mxu0 0.0
      %1418 = vmatprep.subr.mxu0 0.0
      %1419 = vmatpush1.xpose.msra.mxu0 0.0
      %1420 = vmatprep.subr.mxu0 0.0
      %1421 = vmatpush1.xpose.msra.mxu0 0.0
      %1422 = vmatprep.subr.mxu0 0.0
      %1423 = vmatpush1.xpose.msra.mxu0 0.0
      %1424 = vmatprep.subr.mxu0 0.0
      %1425 = vmatpush1.xpose.msra.mxu0 0.0
      %1426 = vmatprep.subr.mxu0 0.0
      %1427 = vmatpush1.xpose.msra.mxu0 0.0
      %1428 = vmatprep.subr.mxu0 0.0
      %1429 = vmatpush1.xpose.msra.mxu0 0.0
      %1430 = vmatprep.subr.mxu0 0.0
      %1431 = vmatpush1.xpose.msra.mxu0 0.0
      %1432 = vmatprep.subr.mxu0 0.0
      %1433 = vmatpush1.xpose.msra.mxu0 0.0
      %1434 = vmatprep.subr.mxu0 0.0
      %1435 = vmatpush1.xpose.msra.mxu0 0.0
      %1436 = vmatprep.subr.mxu0 0.0
      %1437 = vmatpush1.xpose.msra.mxu0 0.0
      %1438 = vmatprep.subr.mxu0 0.0
      %1439 = vmatpush1.xpose.msra.mxu0 0.0
      %1440 = vmatprep.subr.mxu0 0.0
      %1441 = vmatpush1.xpose.msra.mxu0 0.0
      %1442 = vmatprep.subr.mxu0 0.0
      %1443 = vmatpush1.xpose.msra.mxu0 0.0
      %1444 = vmatprep.subr.mxu0 0.0
      %1445 = vmatpush1.xpose.msra.mxu0 0.0
      %1446 = vmatprep.subr.mxu0 0.0
      %1447 = vmatpush1.xpose.msra.mxu0 0.0
      %1448 = vmatprep.subr.mxu0 0.0
      %1449 = vmatpush1.xpose.msra.mxu0 0.0
      %1450 = vmatprep.subr.mxu0 0.0
      %1451 = vmatpush1.xpose.msra.mxu0 0.0
      %1452 = vmatprep.subr.mxu0 0.0
      %1453 = vmatpush1.xpose.msra.mxu0 0.0
      %1454 = vmatprep.subr.mxu0 0.0
      %1455 = vmatpush1.xpose.msra.mxu0 0.0
      %1456 = vmatprep.subr.mxu0 0.0
      %1457 = vmatpush1.xpose.msra.mxu0 0.0
      %1458 = vmatprep.subr.mxu0 0.0
      %1459 = vmatpush1.xpose.msra.mxu0 0.0
      %1460 = vmatprep.subr.mxu0 0.0
      %1461 = vmatpush1.xpose.msra.mxu0 0.0
      %1462 = vmatprep.subr.mxu0 0.0
      %1463 = vmatpush1.xpose.msra.mxu0 0.0
      %1464 = vmatprep.subr.mxu0 0.0
      %1465 = vmatpush1.xpose.msra.mxu0 0.0
      %1466 = vmatprep.subr.mxu0 0.0
      %1467 = vmatpush1.xpose.msra.mxu0 0.0
      %1468 = vmatprep.subr.mxu0 0.0
      %1469 = vmatpush1.xpose.msra.mxu0 0.0
      %1470 = vmatprep.subr.mxu0 0.0
      %1471 = vmatpush1.xpose.msra.mxu0 0.0
      %1472 = vmatprep.subr.mxu0 0.0
      %1473 = vmatpush1.xpose.msra.mxu0 0.0
      %1474 = vmatprep.subr.mxu0 0.0
      %1475 = vmatpush1.xpose.msra.mxu0 0.0
      %1476 = vmatprep.subr.mxu0 0.0
      %1477 = vmatpush1.xpose.msra.mxu0 0.0
      %1478 = vmatprep.mubr.f32.mxu0 0.0
      %1479 = vmatmul.mubr.f32.gmra.mrb[0].mxu0 %v1410
      %v1480 = vpop.f32.mrb[0].mxu0
      %v1481 = vadd.f32 %v738, %v1480
      %v1482 = vpop.f32.mrb[0].mxu0
      %1483 = vdwg.mxu0
      %1484 = vrot.lane.b32.xlu0 %v732, 112
      %v1485 = vpop.permute.xlu0 %1484
      %1486 = vrot.lane.b32.xlu0 %v726, 80
      %v1487 = vpop.permute.xlu0 %1486
      %v1488 = vsel %vm748, %v1485, 0
      %v1490 = vsel %vm748, %v1487, 0
      %1492 = vmatprep.subr.mxu0 0.0
      %1493 = vmatpush1.xpose.msra.mxu0 %v1490
      %1494 = vmatprep.subr.mxu0 0.0
      %1495 = vmatpush1.xpose.msra.mxu0 0.0
      %1496 = vmatprep.subr.mxu0 0.0
      %1497 = vmatpush1.xpose.msra.mxu0 0.0
      %1498 = vmatprep.subr.mxu0 0.0
      %1499 = vmatpush1.xpose.msra.mxu0 0.0
      %1500 = vmatprep.subr.mxu0 0.0
      %1501 = vmatpush1.xpose.msra.mxu0 0.0
      %1502 = vmatprep.subr.mxu0 0.0
      %1503 = vmatpush1.xpose.msra.mxu0 0.0
      %1504 = vmatprep.subr.mxu0 0.0
      %1505 = vmatpush1.xpose.msra.mxu0 0.0
      %1506 = vmatprep.subr.mxu0 0.0
      %1507 = vmatpush1.xpose.msra.mxu0 0.0
      %1508 = vmatprep.subr.mxu0 0.0
      %1509 = vmatpush1.xpose.msra.mxu0 0.0
      %1510 = vmatprep.subr.mxu0 0.0
      %1511 = vmatpush1.xpose.msra.mxu0 0.0
      %1512 = vmatprep.subr.mxu0 0.0
      %1513 = vmatpush1.xpose.msra.mxu0 0.0
      %1514 = vmatprep.subr.mxu0 0.0
      %1515 = vmatpush1.xpose.msra.mxu0 0.0
      %1516 = vmatprep.subr.mxu0 0.0
      %1517 = vmatpush1.xpose.msra.mxu0 0.0
      %1518 = vmatprep.subr.mxu0 0.0
      %1519 = vmatpush1.xpose.msra.mxu0 0.0
      %1520 = vmatprep.subr.mxu0 0.0
      %1521 = vmatpush1.xpose.msra.mxu0 0.0
      %1522 = vmatprep.subr.mxu0 0.0
      %1523 = vmatpush1.xpose.msra.mxu0 0.0
      %1524 = vmatprep.subr.mxu0 0.0
      %1525 = vmatpush1.xpose.msra.mxu0 0.0
      %1526 = vmatprep.subr.mxu0 0.0
      %1527 = vmatpush1.xpose.msra.mxu0 0.0
      %1528 = vmatprep.subr.mxu0 0.0
      %1529 = vmatpush1.xpose.msra.mxu0 0.0
      %1530 = vmatprep.subr.mxu0 0.0
      %1531 = vmatpush1.xpose.msra.mxu0 0.0
      %1532 = vmatprep.subr.mxu0 0.0
      %1533 = vmatpush1.xpose.msra.mxu0 0.0
      %1534 = vmatprep.subr.mxu0 0.0
      %1535 = vmatpush1.xpose.msra.mxu0 0.0
      %1536 = vmatprep.subr.mxu0 0.0
      %1537 = vmatpush1.xpose.msra.mxu0 0.0
      %1538 = vmatprep.subr.mxu0 0.0
      %1539 = vmatpush1.xpose.msra.mxu0 0.0
      %1540 = vmatprep.subr.mxu0 0.0
      %1541 = vmatpush1.xpose.msra.mxu0 0.0
      %1542 = vmatprep.subr.mxu0 0.0
      %1543 = vmatpush1.xpose.msra.mxu0 0.0
      %1544 = vmatprep.subr.mxu0 0.0
      %1545 = vmatpush1.xpose.msra.mxu0 0.0
      %1546 = vmatprep.subr.mxu0 0.0
      %1547 = vmatpush1.xpose.msra.mxu0 0.0
      %1548 = vmatprep.subr.mxu0 0.0
      %1549 = vmatpush1.xpose.msra.mxu0 0.0
      %1550 = vmatprep.subr.mxu0 0.0
      %1551 = vmatpush1.xpose.msra.mxu0 0.0
      %1552 = vmatprep.subr.mxu0 0.0
      %1553 = vmatpush1.xpose.msra.mxu0 0.0
      %1554 = vmatprep.subr.mxu0 0.0
      %1555 = vmatpush1.xpose.msra.mxu0 0.0
      %1556 = vmatprep.mubr.f32.mxu0 0.0
      %1557 = vmatmul.mubr.f32.gmra.mrb[0].mxu0 %v1488
      %v1558 = vpop.f32.mrb[0].mxu0
      %v1559 = vadd.f32 %v742, %v1558
      %v1560 = vpop.f32.mrb[0].mxu0
      %1561 = vdwg.mxu0
      %v1562 = vsel %vm748, %v1481, -inf
      %1563 = vmax.xlane.f32.xlu0 %v1562
      %v1564 = vpop.xlane.xlu0 %1563
      %v1565 = vsel %vm748, %v1559, -inf
      %1566 = vmax.xlane.f32.xlu0 %v1565
      %v1567 = vpop.xlane.xlu0 %1566
      %v1568 = vsub.f32 %v1481, %v1564
      %v1569 = vsub.f32 %v1559, %v1567
      %v1570 = vmul.f32 %v1568, 1.442695
      %v1571 = vpow.pop %v1570
      %v1572 = vmul.f32 %v1569, 1.442695
      %v1573 = vpow.pop %v1572
      %v1574 = vsel %vm748, %v1571, 0.0
      %1575 = vadd.xlane.f32.xlu0 %v1574
      %v1576 = vpop.xlane.xlu0 %1575
      %v1577 = vsel %vm748, %v1573, 0.0
      %1578 = vadd.xlane.f32.xlu0 %v1577
      %v1579 = vpop.xlane.xlu0 %1578
      %v1580 = vrcp.pop %v1576
      %v1581 = vrcp.pop %v1579
      %v1582 = vmul.f32 %v1571, %v1580
      %v1583 = vmul.f32 %v1573, %v1581
      %1584 = vrot.lane.b32.xlu0 %v721, 48
      %v1585 = vpop.permute.xlu0 %1584
      %v1588 = vsel %vm748, %v1582, 0
      %1590 = vmatprep.subr.mxu0 0.0
      %1591 = vmatpush1.msra.mxu0 %v1585
      %1592 = vmatprep.subr.mxu0 0.0
      %1593 = vmatpush1.msra.mxu0 0.0
      %1594 = vmatprep.subr.mxu0 0.0
      %1595 = vmatpush1.msra.mxu0 0.0
      %1596 = vmatprep.subr.mxu0 0.0
      %1597 = vmatpush1.msra.mxu0 0.0
      %1598 = vmatprep.subr.mxu0 0.0
      %1599 = vmatpush1.msra.mxu0 0.0
      %1600 = vmatprep.subr.mxu0 0.0
      %1601 = vmatpush1.msra.mxu0 0.0
      %1602 = vmatprep.subr.mxu0 0.0
      %1603 = vmatpush1.msra.mxu0 0.0
      %1604 = vmatprep.subr.mxu0 0.0
      %1605 = vmatpush1.msra.mxu0 0.0
      %1606 = vmatprep.subr.mxu0 0.0
      %1607 = vmatpush1.msra.mxu0 0.0
      %1608 = vmatprep.subr.mxu0 0.0
      %1609 = vmatpush1.msra.mxu0 0.0
      %1610 = vmatprep.subr.mxu0 0.0
      %1611 = vmatpush1.msra.mxu0 0.0
      %1612 = vmatprep.subr.mxu0 0.0
      %1613 = vmatpush1.msra.mxu0 0.0
      %1614 = vmatprep.subr.mxu0 0.0
      %1615 = vmatpush1.msra.mxu0 0.0
      %1616 = vmatprep.subr.mxu0 0.0
      %1617 = vmatpush1.msra.mxu0 0.0
      %1618 = vmatprep.subr.mxu0 0.0
      %1619 = vmatpush1.msra.mxu0 0.0
      %1620 = vmatprep.subr.mxu0 0.0
      %1621 = vmatpush1.msra.mxu0 0.0
      %1622 = vmatprep.subr.mxu0 0.0
      %1623 = vmatpush1.msra.mxu0 0.0
      %1624 = vmatprep.subr.mxu0 0.0
      %1625 = vmatpush1.msra.mxu0 0.0
      %1626 = vmatprep.subr.mxu0 0.0
      %1627 = vmatpush1.msra.mxu0 0.0
      %1628 = vmatprep.subr.mxu0 0.0
      %1629 = vmatpush1.msra.mxu0 0.0
      %1630 = vmatprep.subr.mxu0 0.0
      %1631 = vmatpush1.msra.mxu0 0.0
      %1632 = vmatprep.subr.mxu0 0.0
      %1633 = vmatpush1.msra.mxu0 0.0
      %1634 = vmatprep.subr.mxu0 0.0
      %1635 = vmatpush1.msra.mxu0 0.0
      %1636 = vmatprep.subr.mxu0 0.0
      %1637 = vmatpush1.msra.mxu0 0.0
      %1638 = vmatprep.subr.mxu0 0.0
      %1639 = vmatpush1.msra.mxu0 0.0
      %1640 = vmatprep.subr.mxu0 0.0
      %1641 = vmatpush1.msra.mxu0 0.0
      %1642 = vmatprep.subr.mxu0 0.0
      %1643 = vmatpush1.msra.mxu0 0.0
      %1644 = vmatprep.subr.mxu0 0.0
      %1645 = vmatpush1.msra.mxu0 0.0
      %1646 = vmatprep.subr.mxu0 0.0
      %1647 = vmatpush1.msra.mxu0 0.0
      %1648 = vmatprep.subr.mxu0 0.0
      %1649 = vmatpush1.msra.mxu0 0.0
      %1650 = vmatprep.subr.mxu0 0.0
      %1651 = vmatpush1.msra.mxu0 0.0
      %1652 = vmatprep.subr.mxu0 0.0
      %1653 = vmatpush1.msra.mxu0 0.0
      %1654 = vmatprep.mubr.f32.mxu0 0.0
      %1655 = vmatmul.mubr.f32.gmra.mrb[0].mxu0 %v1588
      %v1656 = vpop.f32.mrb[0].mxu0
      %v1657 = vadd.f32 0.0, %v1656
      %v1658 = vpop.f32.mrb[0].mxu0
      %1659 = vdwg.mxu0
      %1660 = vrot.lane.b32.xlu0 %v726, 48
      %v1661 = vpop.permute.xlu0 %1660
      %v1664 = vsel %vm748, %v1583, 0
      %1666 = vmatprep.subr.mxu0 0.0
      %1667 = vmatpush1.msra.mxu0 %v1661
      %1668 = vmatprep.subr.mxu0 0.0
      %1669 = vmatpush1.msra.mxu0 0.0
      %1670 = vmatprep.subr.mxu0 0.0
      %1671 = vmatpush1.msra.mxu0 0.0
      %1672 = vmatprep.subr.mxu0 0.0
      %1673 = vmatpush1.msra.mxu0 0.0
      %1674 = vmatprep.subr.mxu0 0.0
      %1675 = vmatpush1.msra.mxu0 0.0
      %1676 = vmatprep.subr.mxu0 0.0
      %1677 = vmatpush1.msra.mxu0 0.0
      %1678 = vmatprep.subr.mxu0 0.0
      %1679 = vmatpush1.msra.mxu0 0.0
      %1680 = vmatprep.subr.mxu0 0.0
      %1681 = vmatpush1.msra.mxu0 0.0
      %1682 = vmatprep.subr.mxu0 0.0
      %1683 = vmatpush1.msra.mxu0 0.0
      %1684 = vmatprep.subr.mxu0 0.0
      %1685 = vmatpush1.msra.mxu0 0.0
      %1686 = vmatprep.subr.mxu0 0.0
      %1687 = vmatpush1.msra.mxu0 0.0
      %1688 = vmatprep.subr.mxu0 0.0
      %1689 = vmatpush1.msra.mxu0 0.0
      %1690 = vmatprep.subr.mxu0 0.0
      %1691 = vmatpush1.msra.mxu0 0.0
      %1692 = vmatprep.subr.mxu0 0.0
      %1693 = vmatpush1.msra.mxu0 0.0
      %1694 = vmatprep.subr.mxu0 0.0
      %1695 = vmatpush1.msra.mxu0 0.0
      %1696 = vmatprep.subr.mxu0 0.0
      %1697 = vmatpush1.msra.mxu0 0.0
      %1698 = vmatprep.subr.mxu0 0.0
      %1699 = vmatpush1.msra.mxu0 0.0
      %1700 = vmatprep.subr.mxu0 0.0
      %1701 = vmatpush1.msra.mxu0 0.0
      %1702 = vmatprep.subr.mxu0 0.0
      %1703 = vmatpush1.msra.mxu0 0.0
      %1704 = vmatprep.subr.mxu0 0.0
      %1705 = vmatpush1.msra.mxu0 0.0
      %1706 = vmatprep.subr.mxu0 0.0
      %1707 = vmatpush1.msra.mxu0 0.0
      %1708 = vmatprep.subr.mxu0 0.0
      %1709 = vmatpush1.msra.mxu0 0.0
      %1710 = vmatprep.subr.mxu0 0.0
      %1711 = vmatpush1.msra.mxu0 0.0
      %1712 = vmatprep.subr.mxu0 0.0
      %1713 = vmatpush1.msra.mxu0 0.0
      %1714 = vmatprep.subr.mxu0 0.0
      %1715 = vmatpush1.msra.mxu0 0.0
      %1716 = vmatprep.subr.mxu0 0.0
      %1717 = vmatpush1.msra.mxu0 0.0
      %1718 = vmatprep.subr.mxu0 0.0
      %1719 = vmatpush1.msra.mxu0 0.0
      %1720 = vmatprep.subr.mxu0 0.0
      %1721 = vmatpush1.msra.mxu0 0.0
      %1722 = vmatprep.subr.mxu0 0.0
      %1723 = vmatpush1.msra.mxu0 0.0
      %1724 = vmatprep.subr.mxu0 0.0
      %1725 = vmatpush1.msra.mxu0 0.0
      %1726 = vmatprep.subr.mxu0 0.0
      %1727 = vmatpush1.msra.mxu0 0.0
      %1728 = vmatprep.subr.mxu0 0.0
      %1729 = vmatpush1.msra.mxu0 0.0
      %1730 = vmatprep.mubr.f32.mxu0 0.0
      %1731 = vmatmul.mubr.f32.gmra.mrb[0].mxu0 %v1664
      %v1732 = vpop.f32.mrb[0].mxu0
      %v1733 = vadd.f32 0.0, %v1732
      %v1734 = vpop.f32.mrb[0].mxu0
      %1735 = vdwg.mxu0
      %1736 = vrot.lane.b32.xlu0 %v731, 104
      %v1737 = vpop.permute.xlu0 %1736
      %1738 = vrot.lane.b32.xlu0 %v721, 72
      %v1739 = vpop.permute.xlu0 %1738
      %v1740 = vsel %vm748, %v1737, 0
      %v1742 = vsel %vm748, %v1739, 0
      %1744 = vmatprep.subr.mxu0 0.0
      %1745 = vmatpush1.xpose.msra.mxu0 %v1742
      %1746 = vmatprep.subr.mxu0 0.0
      %1747 = vmatpush1.xpose.msra.mxu0 0.0
      %1748 = vmatprep.subr.mxu0 0.0
      %1749 = vmatpush1.xpose.msra.mxu0 0.0
      %1750 = vmatprep.subr.mxu0 0.0
      %1751 = vmatpush1.xpose.msra.mxu0 0.0
      %1752 = vmatprep.subr.mxu0 0.0
      %1753 = vmatpush1.xpose.msra.mxu0 0.0
      %1754 = vmatprep.subr.mxu0 0.0
      %1755 = vmatpush1.xpose.msra.mxu0 0.0
      %1756 = vmatprep.subr.mxu0 0.0
      %1757 = vmatpush1.xpose.msra.mxu0 0.0
      %1758 = vmatprep.subr.mxu0 0.0
      %1759 = vmatpush1.xpose.msra.mxu0 0.0
      %1760 = vmatprep.subr.mxu0 0.0
      %1761 = vmatpush1.xpose.msra.mxu0 0.0
      %1762 = vmatprep.subr.mxu0 0.0
      %1763 = vmatpush1.xpose.msra.mxu0 0.0
      %1764 = vmatprep.subr.mxu0 0.0
      %1765 = vmatpush1.xpose.msra.mxu0 0.0
      %1766 = vmatprep.subr.mxu0 0.0
      %1767 = vmatpush1.xpose.msra.mxu0 0.0
      %1768 = vmatprep.subr.mxu0 0.0
      %1769 = vmatpush1.xpose.msra.mxu0 0.0
      %1770 = vmatprep.subr.mxu0 0.0
      %1771 = vmatpush1.xpose.msra.mxu0 0.0
      %1772 = vmatprep.subr.mxu0 0.0
      %1773 = vmatpush1.xpose.msra.mxu0 0.0
      %1774 = vmatprep.subr.mxu0 0.0
      %1775 = vmatpush1.xpose.msra.mxu0 0.0
      %1776 = vmatprep.subr.mxu0 0.0
      %1777 = vmatpush1.xpose.msra.mxu0 0.0
      %1778 = vmatprep.subr.mxu0 0.0
      %1779 = vmatpush1.xpose.msra.mxu0 0.0
      %1780 = vmatprep.subr.mxu0 0.0
      %1781 = vmatpush1.xpose.msra.mxu0 0.0
      %1782 = vmatprep.subr.mxu0 0.0
      %1783 = vmatpush1.xpose.msra.mxu0 0.0
      %1784 = vmatprep.subr.mxu0 0.0
      %1785 = vmatpush1.xpose.msra.mxu0 0.0
      %1786 = vmatprep.subr.mxu0 0.0
      %1787 = vmatpush1.xpose.msra.mxu0 0.0
      %1788 = vmatprep.subr.mxu0 0.0
      %1789 = vmatpush1.xpose.msra.mxu0 0.0
      %1790 = vmatprep.subr.mxu0 0.0
      %1791 = vmatpush1.xpose.msra.mxu0 0.0
      %1792 = vmatprep.subr.mxu0 0.0
      %1793 = vmatpush1.xpose.msra.mxu0 0.0
      %1794 = vmatprep.subr.mxu0 0.0
      %1795 = vmatpush1.xpose.msra.mxu0 0.0
      %1796 = vmatprep.subr.mxu0 0.0
      %1797 = vmatpush1.xpose.msra.mxu0 0.0
      %1798 = vmatprep.subr.mxu0 0.0
      %1799 = vmatpush1.xpose.msra.mxu0 0.0
      %1800 = vmatprep.subr.mxu0 0.0
      %1801 = vmatpush1.xpose.msra.mxu0 0.0
      %1802 = vmatprep.subr.mxu0 0.0
      %1803 = vmatpush1.xpose.msra.mxu0 0.0
      %1804 = vmatprep.subr.mxu0 0.0
      %1805 = vmatpush1.xpose.msra.mxu0 0.0
      %1806 = vmatprep.subr.mxu0 0.0
      %1807 = vmatpush1.xpose.msra.mxu0 0.0
      %1808 = vmatprep.mubr.f32.mxu0 0.0
      %1809 = vmatmul.mubr.f32.gmra.mrb[0].mxu0 %v1740
      %v1810 = vpop.f32.mrb[0].mxu0
      %v1811 = vadd.f32 %v738, %v1810
      %v1812 = vpop.f32.mrb[0].mxu0
      %1813 = vdwg.mxu0
      %1814 = vrot.lane.b32.xlu0 %v732, 104
      %v1815 = vpop.permute.xlu0 %1814
      %1816 = vrot.lane.b32.xlu0 %v726, 72
      %v1817 = vpop.permute.xlu0 %1816
      %v1818 = vsel %vm748, %v1815, 0
      %v1820 = vsel %vm748, %v1817, 0
      %1822 = vmatprep.subr.mxu0 0.0
      %1823 = vmatpush1.xpose.msra.mxu0 %v1820
      %1824 = vmatprep.subr.mxu0 0.0
      %1825 = vmatpush1.xpose.msra.mxu0 0.0
      %1826 = vmatprep.subr.mxu0 0.0
      %1827 = vmatpush1.xpose.msra.mxu0 0.0
      %1828 = vmatprep.subr.mxu0 0.0
      %1829 = vmatpush1.xpose.msra.mxu0 0.0
      %1830 = vmatprep.subr.mxu0 0.0
      %1831 = vmatpush1.xpose.msra.mxu0 0.0
      %1832 = vmatprep.subr.mxu0 0.0
      %1833 = vmatpush1.xpose.msra.mxu0 0.0
      %1834 = vmatprep.subr.mxu0 0.0
      %1835 = vmatpush1.xpose.msra.mxu0 0.0
      %1836 = vmatprep.subr.mxu0 0.0
      %1837 = vmatpush1.xpose.msra.mxu0 0.0
      %1838 = vmatprep.subr.mxu0 0.0
      %1839 = vmatpush1.xpose.msra.mxu0 0.0
      %1840 = vmatprep.subr.mxu0 0.0
      %1841 = vmatpush1.xpose.msra.mxu0 0.0
      %1842 = vmatprep.subr.mxu0 0.0
      %1843 = vmatpush1.xpose.msra.mxu0 0.0
      %1844 = vmatprep.subr.mxu0 0.0
      %1845 = vmatpush1.xpose.msra.mxu0 0.0
      %1846 = vmatprep.subr.mxu0 0.0
      %1847 = vmatpush1.xpose.msra.mxu0 0.0
      %1848 = vmatprep.subr.mxu0 0.0
      %1849 = vmatpush1.xpose.msra.mxu0 0.0
      %1850 = vmatprep.subr.mxu0 0.0
      %1851 = vmatpush1.xpose.msra.mxu0 0.0
      %1852 = vmatprep.subr.mxu0 0.0
      %1853 = vmatpush1.xpose.msra.mxu0 0.0
      %1854 = vmatprep.subr.mxu0 0.0
      %1855 = vmatpush1.xpose.msra.mxu0 0.0
      %1856 = vmatprep.subr.mxu0 0.0
      %1857 = vmatpush1.xpose.msra.mxu0 0.0
      %1858 = vmatprep.subr.mxu0 0.0
      %1859 = vmatpush1.xpose.msra.mxu0 0.0
      %1860 = vmatprep.subr.mxu0 0.0
      %1861 = vmatpush1.xpose.msra.mxu0 0.0
      %1862 = vmatprep.subr.mxu0 0.0
      %1863 = vmatpush1.xpose.msra.mxu0 0.0
      %1864 = vmatprep.subr.mxu0 0.0
      %1865 = vmatpush1.xpose.msra.mxu0 0.0
      %1866 = vmatprep.subr.mxu0 0.0
      %1867 = vmatpush1.xpose.msra.mxu0 0.0
      %1868 = vmatprep.subr.mxu0 0.0
      %1869 = vmatpush1.xpose.msra.mxu0 0.0
      %1870 = vmatprep.subr.mxu0 0.0
      %1871 = vmatpush1.xpose.msra.mxu0 0.0
      %1872 = vmatprep.subr.mxu0 0.0
      %1873 = vmatpush1.xpose.msra.mxu0 0.0
      %1874 = vmatprep.subr.mxu0 0.0
      %1875 = vmatpush1.xpose.msra.mxu0 0.0
      %1876 = vmatprep.subr.mxu0 0.0
      %1877 = vmatpush1.xpose.msra.mxu0 0.0
      %1878 = vmatprep.subr.mxu0 0.0
      %1879 = vmatpush1.xpose.msra.mxu0 0.0
      %1880 = vmatprep.subr.mxu0 0.0
      %1881 = vmatpush1.xpose.msra.mxu0 0.0
      %1882 = vmatprep.subr.mxu0 0.0
      %1883 = vmatpush1.xpose.msra.mxu0 0.0
      %1884 = vmatprep.subr.mxu0 0.0
      %1885 = vmatpush1.xpose.msra.mxu0 0.0
      %1886 = vmatprep.mubr.f32.mxu0 0.0
      %1887 = vmatmul.mubr.f32.gmra.mrb[0].mxu0 %v1818
      %v1888 = vpop.f32.mrb[0].mxu0
      %v1889 = vadd.f32 %v742, %v1888
      %v1890 = vpop.f32.mrb[0].mxu0
      %1891 = vdwg.mxu0
      %v1892 = vsel %vm748, %v1811, -inf
      %1893 = vmax.xlane.f32.xlu0 %v1892
      %v1894 = vpop.xlane.xlu0 %1893
      %v1895 = vsel %vm748, %v1889, -inf
      %1896 = vmax.xlane.f32.xlu0 %v1895
      %v1897 = vpop.xlane.xlu0 %1896
      %v1898 = vsub.f32 %v1811, %v1894
      %v1899 = vsub.f32 %v1889, %v1897
      %v1900 = vmul.f32 %v1898, 1.442695
      %v1901 = vpow.pop %v1900
      %v1902 = vmul.f32 %v1899, 1.442695
      %v1903 = vpow.pop %v1902
      %v1904 = vsel %vm748, %v1901, 0.0
      %1905 = vadd.xlane.f32.xlu0 %v1904
      %v1906 = vpop.xlane.xlu0 %1905
      %v1907 = vsel %vm748, %v1903, 0.0
      %1908 = vadd.xlane.f32.xlu0 %v1907
      %v1909 = vpop.xlane.xlu0 %1908
      %v1910 = vrcp.pop %v1906
      %v1911 = vrcp.pop %v1909
      %v1912 = vmul.f32 %v1901, %v1910
      %v1913 = vmul.f32 %v1903, %v1911
      %1914 = vrot.lane.b32.xlu0 %v721, 40
      %v1915 = vpop.permute.xlu0 %1914
      %v1918 = vsel %vm748, %v1912, 0
      %1920 = vmatprep.subr.mxu0 0.0
      %1921 = vmatpush1.msra.mxu0 %v1915
      %1922 = vmatprep.subr.mxu0 0.0
      %1923 = vmatpush1.msra.mxu0 0.0
      %1924 = vmatprep.subr.mxu0 0.0
      %1925 = vmatpush1.msra.mxu0 0.0
      %1926 = vmatprep.subr.mxu0 0.0
      %1927 = vmatpush1.msra.mxu0 0.0
      %1928 = vmatprep.subr.mxu0 0.0
      %1929 = vmatpush1.msra.mxu0 0.0
      %1930 = vmatprep.subr.mxu0 0.0
      %1931 = vmatpush1.msra.mxu0 0.0
      %1932 = vmatprep.subr.mxu0 0.0
      %1933 = vmatpush1.msra.mxu0 0.0
      %1934 = vmatprep.subr.mxu0 0.0
      %1935 = vmatpush1.msra.mxu0 0.0
      %1936 = vmatprep.subr.mxu0 0.0
      %1937 = vmatpush1.msra.mxu0 0.0
      %1938 = vmatprep.subr.mxu0 0.0
      %1939 = vmatpush1.msra.mxu0 0.0
      %1940 = vmatprep.subr.mxu0 0.0
      %1941 = vmatpush1.msra.mxu0 0.0
      %1942 = vmatprep.subr.mxu0 0.0
      %1943 = vmatpush1.msra.mxu0 0.0
      %1944 = vmatprep.subr.mxu0 0.0
      %1945 = vmatpush1.msra.mxu0 0.0
      %1946 = vmatprep.subr.mxu0 0.0
      %1947 = vmatpush1.msra.mxu0 0.0
      %1948 = vmatprep.subr.mxu0 0.0
      %1949 = vmatpush1.msra.mxu0 0.0
      %1950 = vmatprep.subr.mxu0 0.0
      %1951 = vmatpush1.msra.mxu0 0.0
      %1952 = vmatprep.subr.mxu0 0.0
      %1953 = vmatpush1.msra.mxu0 0.0
      %1954 = vmatprep.subr.mxu0 0.0
      %1955 = vmatpush1.msra.mxu0 0.0
      %1956 = vmatprep.subr.mxu0 0.0
      %1957 = vmatpush1.msra.mxu0 0.0
      %1958 = vmatprep.subr.mxu0 0.0
      %1959 = vmatpush1.msra.mxu0 0.0
      %1960 = vmatprep.subr.mxu0 0.0
      %1961 = vmatpush1.msra.mxu0 0.0
      %1962 = vmatprep.subr.mxu0 0.0
      %1963 = vmatpush1.msra.mxu0 0.0
      %1964 = vmatprep.subr.mxu0 0.0
      %1965 = vmatpush1.msra.mxu0 0.0
      %1966 = vmatprep.subr.mxu0 0.0
      %1967 = vmatpush1.msra.mxu0 0.0
      %1968 = vmatprep.subr.mxu0 0.0
      %1969 = vmatpush1.msra.mxu0 0.0
      %1970 = vmatprep.subr.mxu0 0.0
      %1971 = vmatpush1.msra.mxu0 0.0
      %1972 = vmatprep.subr.mxu0 0.0
      %1973 = vmatpush1.msra.mxu0 0.0
      %1974 = vmatprep.subr.mxu0 0.0
      %1975 = vmatpush1.msra.mxu0 0.0
      %1976 = vmatprep.subr.mxu0 0.0
      %1977 = vmatpush1.msra.mxu0 0.0
      %1978 = vmatprep.subr.mxu0 0.0
      %1979 = vmatpush1.msra.mxu0 0.0
      %1980 = vmatprep.subr.mxu0 0.0
      %1981 = vmatpush1.msra.mxu0 0.0
      %1982 = vmatprep.subr.mxu0 0.0
      %1983 = vmatpush1.msra.mxu0 0.0
      %1984 = vmatprep.mubr.f32.mxu0 0.0
      %1985 = vmatmul.mubr.f32.gmra.mrb[0].mxu0 %v1918
      %v1986 = vpop.f32.mrb[0].mxu0
      %v1987 = vadd.f32 0.0, %v1986
      %v1988 = vpop.f32.mrb[0].mxu0
      %1989 = vdwg.mxu0
      %1990 = vrot.lane.b32.xlu0 %v726, 40
      %v1991 = vpop.permute.xlu0 %1990
      %v1994 = vsel %vm748, %v1913, 0
      %1996 = vmatprep.subr.mxu0 0.0
      %1997 = vmatpush1.msra.mxu0 %v1991
      %1998 = vmatprep.subr.mxu0 0.0
      %1999 = vmatpush1.msra.mxu0 0.0
      %2000 = vmatprep.subr.mxu0 0.0
      %2001 = vmatpush1.msra.mxu0 0.0
      %2002 = vmatprep.subr.mxu0 0.0
      %2003 = vmatpush1.msra.mxu0 0.0
      %2004 = vmatprep.subr.mxu0 0.0
      %2005 = vmatpush1.msra.mxu0 0.0
      %2006 = vmatprep.subr.mxu0 0.0
      %2007 = vmatpush1.msra.mxu0 0.0
      %2008 = vmatprep.subr.mxu0 0.0
      %2009 = vmatpush1.msra.mxu0 0.0
      %2010 = vmatprep.subr.mxu0 0.0
      %2011 = vmatpush1.msra.mxu0 0.0
      %2012 = vmatprep.subr.mxu0 0.0
      %2013 = vmatpush1.msra.mxu0 0.0
      %2014 = vmatprep.subr.mxu0 0.0
      %2015 = vmatpush1.msra.mxu0 0.0
      %2016 = vmatprep.subr.mxu0 0.0
      %2017 = vmatpush1.msra.mxu0 0.0
      %2018 = vmatprep.subr.mxu0 0.0
      %2019 = vmatpush1.msra.mxu0 0.0
      %2020 = vmatprep.subr.mxu0 0.0
      %2021 = vmatpush1.msra.mxu0 0.0
      %2022 = vmatprep.subr.mxu0 0.0
      %2023 = vmatpush1.msra.mxu0 0.0
      %2024 = vmatprep.subr.mxu0 0.0
      %2025 = vmatpush1.msra.mxu0 0.0
      %2026 = vmatprep.subr.mxu0 0.0
      %2027 = vmatpush1.msra.mxu0 0.0
      %2028 = vmatprep.subr.mxu0 0.0
      %2029 = vmatpush1.msra.mxu0 0.0
      %2030 = vmatprep.subr.mxu0 0.0
      %2031 = vmatpush1.msra.mxu0 0.0
      %2032 = vmatprep.subr.mxu0 0.0
      %2033 = vmatpush1.msra.mxu0 0.0
      %2034 = vmatprep.subr.mxu0 0.0
      %2035 = vmatpush1.msra.mxu0 0.0
      %2036 = vmatprep.subr.mxu0 0.0
      %2037 = vmatpush1.msra.mxu0 0.0
      %2038 = vmatprep.subr.mxu0 0.0
      %2039 = vmatpush1.msra.mxu0 0.0
      %2040 = vmatprep.subr.mxu0 0.0
      %2041 = vmatpush1.msra.mxu0 0.0
      %2042 = vmatprep.subr.mxu0 0.0
      %2043 = vmatpush1.msra.mxu0 0.0
      %2044 = vmatprep.subr.mxu0 0.0
      %2045 = vmatpush1.msra.mxu0 0.0
      %2046 = vmatprep.subr.mxu0 0.0
      %2047 = vmatpush1.msra.mxu0 0.0
      %2048 = vmatprep.subr.mxu0 0.0
      %2049 = vmatpush1.msra.mxu0 0.0
      %2050 = vmatprep.subr.mxu0 0.0
      %2051 = vmatpush1.msra.mxu0 0.0
      %2052 = vmatprep.subr.mxu0 0.0
      %2053 = vmatpush1.msra.mxu0 0.0
      %2054 = vmatprep.subr.mxu0 0.0
      %2055 = vmatpush1.msra.mxu0 0.0
      %2056 = vmatprep.subr.mxu0 0.0
      %2057 = vmatpush1.msra.mxu0 0.0
      %2058 = vmatprep.subr.mxu0 0.0
      %2059 = vmatpush1.msra.mxu0 0.0
      %2060 = vmatprep.mubr.f32.mxu0 0.0
      %2061 = vmatmul.mubr.f32.gmra.mrb[0].mxu0 %v1994
      %v2062 = vpop.f32.mrb[0].mxu0
      %v2063 = vadd.f32 0.0, %v2062
      %v2064 = vpop.f32.mrb[0].mxu0
      %2065 = vdwg.mxu0
      %2068 = vrot.lane.b32.xlu0 %v1327, 8
      %v2069 = vpop.permute.xlu0 %2068
      %2070 = vrot.lane.b32.xlu0 %v1403, 8
      %v2071 = vpop.permute.xlu0 %2070
      %2076 = vrot.lane.b32.xlu0 %v1657, 16
      %v2077 = vpop.permute.xlu0 %2076
      %2078 = vrot.lane.b32.xlu0 %v1733, 16
      %v2079 = vpop.permute.xlu0 %2078
      %2084 = vrot.lane.b32.xlu0 %v1987, 24
      %v2085 = vpop.permute.xlu0 %2084
      %2086 = vrot.lane.b32.xlu0 %v2063, 24
      %v2087 = vpop.permute.xlu0 %2086
      %v2090 = vsel %vm748, %v997, %v2069
      %v2091 = vsel %vm748, %v1073, %v2071
      %vm2092 = vcmask 130048
      %v2093 = vsel %vm2092, %v2090, %v2077
      %v2094 = vsel %vm2092, %v2091, %v2079
      %vm2095 = vcmask 195584
      %v2096 = vsel %vm2095, %v2093, %v2085
      %v2097 = vsel %vm2095, %v2094, %v2087
      %v2098 = vld [vmem:[%s593] sm:$0xff]
      %v2099 = vld [vmem:[%s593 + $0x8] sm:$0xff]
      %v2100 = vld [vmem:[%s593 + $0x10] sm:$0xff]
      %v2101 = vld [vmem:[%s593 + $0x18] sm:$0xff]
      %v2102 = vld [vmem:[%s596] sm:$0x1]
      %v2104 = vlaneseq
      %v2105 = vshrl.u32 %v2104, 7
      %v2106 = vsub.s32 0, %v2105
      %v2107 = vrot.slane %v2102, %v2106
      %v2110 = vsel %vm647, %v2096, 0
      %v2113 = vsel %vm647, %v2097, 0
      %2115 = vmatprep.subr.mxu0 0.0
      %2116 = vmatpush1.msra.mxu0 %v2098
      %2117 = vmatprep.subr.mxu0 0.0
      %2118 = vmatpush1.msra.mxu0 %v2099
      %2119 = vmatprep.subr.mxu0 0.0
      %2120 = vmatpush1.msra.mxu0 %v2100
      %2121 = vmatprep.subr.mxu0 0.0
      %2122 = vmatpush1.msra.mxu0 %v2101
      %2123 = vmatprep.subr.mxu0 0.0
      %2124 = vmatpush1.msra.mxu0 0.0
      %2125 = vmatprep.subr.mxu0 0.0
      %2126 = vmatpush1.msra.mxu0 0.0
      %2127 = vmatprep.subr.mxu0 0.0
      %2128 = vmatpush1.msra.mxu0 0.0
      %2129 = vmatprep.subr.mxu0 0.0
      %2130 = vmatpush1.msra.mxu0 0.0
      %2131 = vmatprep.subr.mxu0 0.0
      %2132 = vmatpush1.msra.mxu0 0.0
      %2133 = vmatprep.subr.mxu0 0.0
      %2134 = vmatpush1.msra.mxu0 0.0
      %2135 = vmatprep.subr.mxu0 0.0
      %2136 = vmatpush1.msra.mxu0 0.0
      %2137 = vmatprep.subr.mxu0 0.0
      %2138 = vmatpush1.msra.mxu0 0.0
      %2139 = vmatprep.subr.mxu0 0.0
      %2140 = vmatpush1.msra.mxu0 0.0
      %2141 = vmatprep.subr.mxu0 0.0
      %2142 = vmatpush1.msra.mxu0 0.0
      %2143 = vmatprep.subr.mxu0 0.0
      %2144 = vmatpush1.msra.mxu0 0.0
      %2145 = vmatprep.subr.mxu0 0.0
      %2146 = vmatpush1.msra.mxu0 0.0
      %2147 = vmatprep.subr.mxu0 0.0
      %2148 = vmatpush1.msra.mxu0 0.0
      %2149 = vmatprep.subr.mxu0 0.0
      %2150 = vmatpush1.msra.mxu0 0.0
      %2151 = vmatprep.subr.mxu0 0.0
      %2152 = vmatpush1.msra.mxu0 0.0
      %2153 = vmatprep.subr.mxu0 0.0
      %2154 = vmatpush1.msra.mxu0 0.0
      %2155 = vmatprep.subr.mxu0 0.0
      %2156 = vmatpush1.msra.mxu0 0.0
      %2157 = vmatprep.subr.mxu0 0.0
      %2158 = vmatpush1.msra.mxu0 0.0
      %2159 = vmatprep.subr.mxu0 0.0
      %2160 = vmatpush1.msra.mxu0 0.0
      %2161 = vmatprep.subr.mxu0 0.0
      %2162 = vmatpush1.msra.mxu0 0.0
      %2163 = vmatprep.subr.mxu0 0.0
      %2164 = vmatpush1.msra.mxu0 0.0
      %2165 = vmatprep.subr.mxu0 0.0
      %2166 = vmatpush1.msra.mxu0 0.0
      %2167 = vmatprep.subr.mxu0 0.0
      %2168 = vmatpush1.msra.mxu0 0.0
      %2169 = vmatprep.subr.mxu0 0.0
      %2170 = vmatpush1.msra.mxu0 0.0
      %2171 = vmatprep.subr.mxu0 0.0
      %2172 = vmatpush1.msra.mxu0 0.0
      %2173 = vmatprep.subr.mxu0 0.0
      %2174 = vmatpush1.msra.mxu0 0.0
      %2175 = vmatprep.subr.mxu0 0.0
      %2176 = vmatpush1.msra.mxu0 0.0
      %2177 = vmatprep.subr.mxu0 0.0
      %2178 = vmatpush1.msra.mxu0 0.0
      %2179 = vmatprep.mubr.f32.mxu0 0.0
      %2180 = vmatmul.mubr.f32.gmra.mrb[0].mxu0 %v2110
      %v2181 = vpop.f32.mrb[0].mxu0
      %v2182 = vadd.f32 %v2107, %v2181
      %v2183 = vpop.f32.mrb[0].mxu0
      %2184 = vmatprep.mubr.f32.mxu0 0.0
      %2185 = vmatmul.mubr.f32.gmra.mrb[0].mxu0 %v2113
      %v2186 = vpop.f32.mrb[0].mxu0
      %v2187 = vadd.f32 %v2107, %v2186
      %v2188 = vpop.f32.mrb[0].mxu0
      %2189 = vdwg.mxu0
      %v2190 = vadd.f32 %v634, %v2182
      %v2191 = vadd.f32 %v635, %v2187
      %v2192 = vld [vmem:[%s599] sm:$0x1]
      %v2193 = vld [vmem:[%s602] sm:$0x1]
      %v2194 = vsel %vm647, %v2190, 0.0
      %2195 = vadd.xlane.f32.xlu0 %v2194
      %v2196 = vpop.xlane.xlu0 %2195
      %v2197 = vsel %vm647, %v2191, 0.0
      %2198 = vadd.xlane.f32.xlu0 %v2197
      %v2199 = vpop.xlane.xlu0 %2198
      %v2200 = vrcp.pop 32.0
      %v2201 = vmul.f32 %v2196, %v2200
      %v2202 = vmul.f32 %v2199, %v2200
      %v2203 = vsub.f32 %v2190, %v2201
      %v2204 = vsub.f32 %v2191, %v2202
      %v2205 = vmul.f32 %v2203, %v2203
      %v2206 = vmul.f32 %v2204, %v2204
      %v2207 = vsel %vm647, %v2205, 0.0
      %2208 = vadd.xlane.f32.xlu0 %v2207
      %v2209 = vpop.xlane.xlu0 %2208
      %v2210 = vsel %vm647, %v2206, 0.0
      %2211 = vadd.xlane.f32.xlu0 %v2210
      %v2212 = vpop.xlane.xlu0 %2211
      %v2213 = vmul.f32 %v2209, %v2200
      %v2214 = vmul.f32 %v2212, %v2200
      %v2215 = vadd.f32 %v2213, 1e-05
      %v2216 = vadd.f32 %v2214, 1e-05
      %v2217 = vrsqrt.pop %v2215
      %v2218 = vrsqrt.pop %v2216
      %v2219 = vmul.f32 %v2203, %v2217
      %v2220 = vmul.f32 %v2204, %v2218
      %v2222 = vlaneseq
      %v2223 = vshrl.u32 %v2222, 7
      %v2224 = vsub.s32 0, %v2223
      %v2225 = vrot.slane %v2192, %v2224
      %v2227 = vmul.f32 %v2219, %v2225
      %v2228 = vmul.f32 %v2220, %v2225
      %v2230 = vlaneseq
      %v2231 = vshrl.u32 %v2230, 7
      %v2232 = vsub.s32 0, %v2231
      %v2233 = vrot.slane %v2193, %v2232
      %v2235 = vadd.f32 %v2227, %v2233
      %v2236 = vadd.f32 %v2228, %v2233
      %v2237 = vld [vmem:[%s613] sm:$0xff]
      %v2238 = vld [vmem:[%s613 + $0x8] sm:$0xff]
      %v2239 = vld [vmem:[%s613 + $0x10] sm:$0xff]
      %v2240 = vld [vmem:[%s613 + $0x18] sm:$0xff]
      %v2241 = vld [vmem:[%s616] sm:$0x1]
      %v2243 = vlaneseq
      %v2244 = vshrl.u32 %v2243, 7
      %v2245 = vsub.s32 0, %v2244
      %v2246 = vrot.slane %v2241, %v2245
      %v2249 = vsel %vm647, %v2235, 0
      %v2252 = vsel %vm647, %v2236, 0
      %2254 = vmatprep.subr.mxu0 0.0
      %2255 = vmatpush1.msra.mxu0 %v2237
      %2256 = vmatprep.subr.mxu0 0.0
      %2257 = vmatpush1.msra.mxu0 %v2238
      %2258 = vmatprep.subr.mxu0 0.0
      %2259 = vmatpush1.msra.mxu0 %v2239
      %2260 = vmatprep.subr.mxu0 0.0
      %2261 = vmatpush1.msra.mxu0 %v2240
      %2262 = vmatprep.subr.mxu0 0.0
      %2263 = vmatpush1.msra.mxu0 0.0
      %2264 = vmatprep.subr.mxu0 0.0
      %2265 = vmatpush1.msra.mxu0 0.0
      %2266 = vmatprep.subr.mxu0 0.0
      %2267 = vmatpush1.msra.mxu0 0.0
      %2268 = vmatprep.subr.mxu0 0.0
      %2269 = vmatpush1.msra.mxu0 0.0
      %2270 = vmatprep.subr.mxu0 0.0
      %2271 = vmatpush1.msra.mxu0 0.0
      %2272 = vmatprep.subr.mxu0 0.0
      %2273 = vmatpush1.msra.mxu0 0.0
      %2274 = vmatprep.subr.mxu0 0.0
      %2275 = vmatpush1.msra.mxu0 0.0
      %2276 = vmatprep.subr.mxu0 0.0
      %2277 = vmatpush1.msra.mxu0 0.0
      %2278 = vmatprep.subr.mxu0 0.0
      %2279 = vmatpush1.msra.mxu0 0.0
      %2280 = vmatprep.subr.mxu0 0.0
      %2281 = vmatpush1.msra.mxu0 0.0
      %2282 = vmatprep.subr.mxu0 0.0
      %2283 = vmatpush1.msra.mxu0 0.0
      %2284 = vmatprep.subr.mxu0 0.0
      %2285 = vmatpush1.msra.mxu0 0.0
      %2286 = vmatprep.subr.mxu0 0.0
      %2287 = vmatpush1.msra.mxu0 0.0
      %2288 = vmatprep.subr.mxu0 0.0
      %2289 = vmatpush1.msra.mxu0 0.0
      %2290 = vmatprep.subr.mxu0 0.0
      %2291 = vmatpush1.msra.mxu0 0.0
      %2292 = vmatprep.subr.mxu0 0.0
      %2293 = vmatpush1.msra.mxu0 0.0
      %2294 = vmatprep.subr.mxu0 0.0
      %2295 = vmatpush1.msra.mxu0 0.0
      %2296 = vmatprep.subr.mxu0 0.0
      %2297 = vmatpush1.msra.mxu0 0.0
      %2298 = vmatprep.subr.mxu0 0.0
      %2299 = vmatpush1.msra.mxu0 0.0
      %2300 = vmatprep.subr.mxu0 0.0
      %2301 = vmatpush1.msra.mxu0 0.0
      %2302 = vmatprep.subr.mxu0 0.0
      %2303 = vmatpush1.msra.mxu0 0.0
      %2304 = vmatprep.subr.mxu0 0.0
      %2305 = vmatpush1.msra.mxu0 0.0
      %2306 = vmatprep.subr.mxu0 0.0
      %2307 = vmatpush1.msra.mxu0 0.0
      %2308 = vmatprep.subr.mxu0 0.0
      %2309 = vmatpush1.msra.mxu0 0.0
      %2310 = vmatprep.subr.mxu0 0.0
      %2311 = vmatpush1.msra.mxu0 0.0
      %2312 = vmatprep.subr.mxu0 0.0
      %2313 = vmatpush1.msra.mxu0 0.0
      %2314 = vmatprep.subr.mxu0 0.0
      %2315 = vmatpush1.msra.mxu0 0.0
      %2316 = vmatprep.subr.mxu0 0.0
      %2317 = vmatpush1.msra.mxu0 0.0
      %2318 = vmatprep.mubr.f32.mxu0 0.0
      %2319 = vmatmul.mubr.f32.gmra.mrb[0].mxu0 %v2249
      %v2320 = vpop.f32.mrb[0].mxu0
      %v2321 = vadd.f32 %v2246, %v2320
      %v2322 = vpop.f32.mrb[0].mxu0
      %2323 = vmatprep.mubr.f32.mxu0 0.0
      %2324 = vmatmul.mubr.f32.gmra.mrb[0].mxu0 %v2252
      %v2325 = vpop.f32.mrb[0].mxu0
      %v2326 = vadd.f32 %v2246, %v2325
      %v2327 = vpop.f32.mrb[0].mxu0
      %2328 = vdwg.mxu0
      %v2329 = vmul.f32 %v2321, 0.5
      %v2330 = vmul.f32 %v2326, 0.5
      %v2331 = vmul.f32 %v2321, 0.70710677
      %v2332 = vmul.f32 %v2326, 0.70710677
      %v2333 = vand.u32 2147483647, %v2331
      %v2334 = vand.u32 2147483647, %v2332
      %v2335 = vmul.f32 %v2333, 0.3275911
      %v2336 = vmul.f32 %v2334, 0.3275911
      %v2337 = vadd.f32 %v2335, 1.0
      %v2338 = vadd.f32 %v2336, 1.0
      %v2339 = vrcp.pop %v2337
      %v2340 = vmul.f32 1.0, %v2339
      %v2341 = vrcp.pop %v2338
      %v2342 = vmul.f32 1.0, %v2341
      %v2343 = vmul.f32 %v2340, 1.0614054
      %v2344 = vmul.f32 %v2342, 1.0614054
      %v2345 = vadd.f32 %v2343, -1.4531521
      %v2346 = vadd.f32 %v2344, -1.4531521
      %v2347 = vmul.f32 %v2345, %v2340
      %v2348 = vmul.f32 %v2346, %v2342
      %v2349 = vadd.f32 %v2347, 1.4214138
      %v2350 = vadd.f32 %v2348, 1.4214138
      %v2351 = vmul.f32 %v2349, %v2340
      %v2352 = vmul.f32 %v2350, %v2342
      %v2353 = vadd.f32 %v2351, -0.28449672
      %v2354 = vadd.f32 %v2352, -0.28449672
      %v2355 = vmul.f32 %v2353, %v2340
      %v2356 = vmul.f32 %v2354, %v2342
      %v2357 = vadd.f32 %v2355, 0.2548296
      %v2358 = vadd.f32 %v2356, 0.2548296
      %v2359 = vmul.f32 %v2357, %v2340
      %v2360 = vmul.f32 %v2358, %v2342
      %v2361 = vmul.f32 %v2333, %v2333
      %v2362 = vmul.f32 %v2334, %v2334
      %v2363 = vsub.f32 0.0, %v2361
      %v2364 = vsub.f32 0.0, %v2362
      %v2365 = vmul.f32 %v2363, 1.442695
      %v2366 = vpow.pop %v2365
      %v2367 = vmul.f32 %v2364, 1.442695
      %v2368 = vpow.pop %v2367
      %v2369 = vmul.f32 %v2359, %v2366
      %v2370 = vmul.f32 %v2360, %v2368
      %v2371 = vsub.f32 1.0, %v2369
      %v2372 = vsub.f32 1.0, %v2370
      %vm2373 = vcmp.ge.f32.partialorder %v2331, 0.0
      %vm2374 = vcmp.ge.f32.partialorder %v2332, 0.0
      %v2375 = vsub.f32 0.0, %v2371
      %v2376 = vsub.f32 0.0, %v2372
      %v2377 = vsel %vm2373, %v2371, %v2375
      %v2378 = vsel %vm2374, %v2372, %v2376
      %v2379 = vadd.f32 %v2377, 1.0
      %v2380 = vadd.f32 %v2378, 1.0
      %v2381 = vmul.f32 %v2329, %v2379
      %v2382 = vmul.f32 %v2330, %v2380
      %v2383 = vld [vmem:[%s621] sm:$0xff]
      %v2384 = vld [vmem:[%s621 + $0x8] sm:$0xff]
      %v2385 = vld [vmem:[%s621 + $0x10] sm:$0xff]
      %v2386 = vld [vmem:[%s621 + $0x18] sm:$0xff]
      %v2387 = vld [vmem:[%s621 + $0x20] sm:$0xff]
      %v2388 = vld [vmem:[%s621 + $0x28] sm:$0xff]
      %v2389 = vld [vmem:[%s621 + $0x30] sm:$0xff]
      %v2390 = vld [vmem:[%s621 + $0x38] sm:$0xff]
      %v2391 = vld [vmem:[%s624] sm:$0x1]
      %v2393 = vlaneseq
      %v2394 = vshrl.u32 %v2393, 7
      %v2395 = vsub.s32 0, %v2394
      %v2396 = vrot.slane %v2391, %v2395
      %vm2398 = vcmask 523264
      %v2400 = vsel %vm2398, %v2381, 0
      %v2403 = vsel %vm2398, %v2382, 0
      %2405 = vmatprep.subr.mxu0 0.0
      %2406 = vmatpush1.msra.mxu0 %v2383
      %2407 = vmatprep.subr.mxu0 0.0
      %2408 = vmatpush1.msra.mxu0 %v2384
      %2409 = vmatprep.subr.mxu0 0.0
      %2410 = vmatpush1.msra.mxu0 %v2385
      %2411 = vmatprep.subr.mxu0 0.0
      %2412 = vmatpush1.msra.mxu0 %v2386
      %2413 = vmatprep.subr.mxu0 0.0
      %2414 = vmatpush1.msra.mxu0 %v2387
      %2415 = vmatprep.subr.mxu0 0.0
      %2416 = vmatpush1.msra.mxu0 %v2388
      %2417 = vmatprep.subr.mxu0 0.0
      %2418 = vmatpush1.msra.mxu0 %v2389
      %2419 = vmatprep.subr.mxu0 0.0
      %2420 = vmatpush1.msra.mxu0 %v2390
      %2421 = vmatprep.subr.mxu0 0.0
      %2422 = vmatpush1.msra.mxu0 0.0
      %2423 = vmatprep.subr.mxu0 0.0
      %2424 = vmatpush1.msra.mxu0 0.0
      %2425 = vmatprep.subr.mxu0 0.0
      %2426 = vmatpush1.msra.mxu0 0.0
      %2427 = vmatprep.subr.mxu0 0.0
      %2428 = vmatpush1.msra.mxu0 0.0
      %2429 = vmatprep.subr.mxu0 0.0
      %2430 = vmatpush1.msra.mxu0 0.0
      %2431 = vmatprep.subr.mxu0 0.0
      %2432 = vmatpush1.msra.mxu0 0.0
      %2433 = vmatprep.subr.mxu0 0.0
      %2434 = vmatpush1.msra.mxu0 0.0
      %2435 = vmatprep.subr.mxu0 0.0
      %2436 = vmatpush1.msra.mxu0 0.0
      %2437 = vmatprep.subr.mxu0 0.0
      %2438 = vmatpush1.msra.mxu0 0.0
      %2439 = vmatprep.subr.mxu0 0.0
      %2440 = vmatpush1.msra.mxu0 0.0
      %2441 = vmatprep.subr.mxu0 0.0
      %2442 = vmatpush1.msra.mxu0 0.0
      %2443 = vmatprep.subr.mxu0 0.0
      %2444 = vmatpush1.msra.mxu0 0.0
      %2445 = vmatprep.subr.mxu0 0.0
      %2446 = vmatpush1.msra.mxu0 0.0
      %2447 = vmatprep.subr.mxu0 0.0
      %2448 = vmatpush1.msra.mxu0 0.0
      %2449 = vmatprep.subr.mxu0 0.0
      %2450 = vmatpush1.msra.mxu0 0.0
      %2451 = vmatprep.subr.mxu0 0.0
      %2452 = vmatpush1.msra.mxu0 0.0
      %2453 = vmatprep.subr.mxu0 0.0
      %2454 = vmatpush1.msra.mxu0 0.0
      %2455 = vmatprep.subr.mxu0 0.0
      %2456 = vmatpush1.msra.mxu0 0.0
      %2457 = vmatprep.subr.mxu0 0.0
      %2458 = vmatpush1.msra.mxu0 0.0
      %2459 = vmatprep.subr.mxu0 0.0
      %2460 = vmatpush1.msra.mxu0 0.0
      %2461 = vmatprep.subr.mxu0 0.0
      %2462 = vmatpush1.msra.mxu0 0.0
      %2463 = vmatprep.subr.mxu0 0.0
      %2464 = vmatpush1.msra.mxu0 0.0
      %2465 = vmatprep.subr.mxu0 0.0
      %2466 = vmatpush1.msra.mxu0 0.0
      %2467 = vmatprep.subr.mxu0 0.0
      %2468 = vmatpush1.msra.mxu0 0.0
      %2469 = vmatprep.mubr.f32.mxu0 0.0
      %2470 = vmatmul.mubr.f32.gmra.mrb[0].mxu0 %v2400
      %v2471 = vpop.f32.mrb[0].mxu0
      %v2472 = vadd.f32 %v2396, %v2471
      %v2473 = vpop.f32.mrb[0].mxu0
      %2474 = vmatprep.mubr.f32.mxu0 0.0
      %2475 = vmatmul.mubr.f32.gmra.mrb[0].mxu0 %v2403
      %v2476 = vpop.f32.mrb[0].mxu0
      %v2477 = vadd.f32 %v2396, %v2476
      %v2478 = vpop.f32.mrb[0].mxu0
      %2479 = vdwg.mxu0
      %v2480 = vadd.f32 %v2235, %v2472
      %v2481 = vadd.f32 %v2236, %v2477
      %v2482 = vld [vmem:[%s605] sm:$0x1]
      %v2483 = vld [vmem:[%s608] sm:$0x1]
      %v2484 = vsel %vm647, %v2480, 0.0
      %2485 = vadd.xlane.f32.xlu0 %v2484
      %v2486 = vpop.xlane.xlu0 %2485
      %v2487 = vsel %vm647, %v2481, 0.0
      %2488 = vadd.xlane.f32.xlu0 %v2487
      %v2489 = vpop.xlane.xlu0 %2488
      %v2490 = vmul.f32 %v2486, %v2200
      %v2491 = vmul.f32 %v2489, %v2200
      %v2492 = vsub.f32 %v2480, %v2490
      %v2493 = vsub.f32 %v2481, %v2491
      %v2494 = vmul.f32 %v2492, %v2492
      %v2495 = vmul.f32 %v2493, %v2493
      %v2496 = vsel %vm647, %v2494, 0.0
      %2497 = vadd.xlane.f32.xlu0 %v2496
      %v2498 = vpop.xlane.xlu0 %2497
      %v2499 = vsel %vm647, %v2495, 0.0
      %2500 = vadd.xlane.f32.xlu0 %v2499
      %v2501 = vpop.xlane.xlu0 %2500
      %v2502 = vmul.f32 %v2498, %v2200
      %v2503 = vmul.f32 %v2501, %v2200
      %v2504 = vadd.f32 %v2502, 1e-05
      %v2505 = vadd.f32 %v2503, 1e-05
      %v2506 = vrsqrt.pop %v2504
      %v2507 = vrsqrt.pop %v2505
      %v2508 = vmul.f32 %v2492, %v2506
      %v2509 = vmul.f32 %v2493, %v2507
      %v2511 = vlaneseq
      %v2512 = vshrl.u32 %v2511, 7
      %v2513 = vsub.s32 0, %v2512
      %v2514 = vrot.slane %v2482, %v2513
      %v2516 = vmul.f32 %v2508, %v2514
      %v2517 = vmul.f32 %v2509, %v2514
      %v2519 = vlaneseq
      %v2520 = vshrl.u32 %v2519, 7
      %v2521 = vsub.s32 0, %v2520
      %v2522 = vrot.slane %v2483, %v2521
      %v2524 = vadd.f32 %v2516, %v2522
      %v2525 = vadd.f32 %v2517, %v2522
      %2526 = vst.msk [vmem:[%s14] sm:$0xff] %vm647, %v2524
      %2527 = vst.msk [vmem:[%s14 + $0x8] sm:$0xff] %vm647, %v2525
      // Predicated region
      $region81: #{forward.2} parent=75 // pred_check
        %p2528 = pneg %p392
      $region82: #{forward.2} parent=75 // pred_check_branch
        %2530 = sbr.rel (%p2528) target = $region84
      $region83: #{forward.2} parent=75 // pred_region
        _
      $region84: #{forward.2} parent=75 // pred_fallthru
        _
      // Predicated region
      $region85: #{forward.2} parent=75 // pred_check
        %p2531 = pneg %p392
      $region86: #{forward.2} parent=75 // pred_check_branch
        %2533 = sbr.rel (%p2531) target = $region88
      $region87: #{forward.2} parent=75 // pred_region
        _
      $region88: #{forward.2} parent=75 // pred_fallthru
        _
    $region76: #{forward.2} parent=5 // pred_fallthru
      _
    %p2534 = scmp.le.s32.totalorder 2, %s20
    // Predicated region
    $region89: #{forward.2} parent=5 // pred_check
      %p2535 = pneg %p2534
    $region90: #{forward.2} parent=5 // pred_check_branch
      %2537 = sbr.rel (%p2535) target = $region92
    $region91: #{forward.2} parent=5 // pred_region
      %s2538 = ssub.s32 %s20, 2
    $region92: #{forward.2} parent=5 // pred_fallthru
      _
  $region6: #{forward.2} parent=0 // loop_footer
    %s24 = sadd.s32 1, %s20
  $region7: #{forward.2} parent=0 // loop_footer_branch
    %19 = sbr.rel target = $region3
  $region8: #{forward.2} parent=0 // loop_exit
    _

</llo_original>
